<compile_context>
chip_gen: v7x
topology: tpu7x:2x2x1
jax: 0.10.0
libtpu: 0.0.40
codegen_flags: <defaults>
</compile_context>

<pallas_src>
import jax
import jax.numpy as jnp
from jax.experimental import pallas as pl
from jax.experimental.pallas import tpu as pltpu

# ----------------------------- model dimensions ------------------------------
H = W = 32          # cifar-style img_size = (32, 32) as in TTAMethod.__init__
HW = H * W
CIN = 3
COUT = 32
NUM_CLASSES = 10
EPS = 1e-5          # BatchNorm eps
K_RAW = 9 * CIN     # 27 im2col columns (3x3 taps x CIN)
K_PAD = 32          # padded contraction dim for the conv matmul
NC_PAD = 128        # lane-dense logits slab width


# ------------------------------ Pallas kernel --------------------------------
def _model_kernel(p_ref, w_ref, scale_ref, shift_ref, fcw_ref, fcb_ref, o_ref):
    """Whole batch in one grid step.

    p_ref    : (n*H*W, K_PAD)   bf16 im2col patches
    w_ref    : (K_PAD, COUT)    bf16 conv weight (zero-padded rows 27..31)
    scale_ref, shift_ref : (1, COUT) f32 folded BN(+conv-bias) affine
    fcw_ref  : (COUT, NC_PAD)   f32 classifier weight (zero-padded cols)
    fcb_ref  : (1, NC_PAD)      f32 classifier bias (zero-padded cols)
    o_ref    : (n, NC_PAD)      f32 logits slab
    """
    n = o_ref.shape[0]
    m = p_ref.shape[0]                      # n * H * W

    # 3x3 conv as a single im2col matmul (bf16 in, f32 accumulate on the MXU).
    acc = jnp.dot(p_ref[...], w_ref[...], preferred_element_type=jnp.float32)

    # Folded BatchNorm(eval) + conv bias + ReLU on the VPU.
    y = jnp.maximum(acc * scale_ref[...] + shift_ref[...], 0.0)        # (m, COUT)

    # Global average pool per image via a block-diagonal pooling matrix on the
    # MXU (avoids 3-D reshapes and cross-sublane reductions).
    col = jax.lax.broadcasted_iota(jnp.int32, (n, m), 1)
    row = jax.lax.broadcasted_iota(jnp.int32, (n, m), 0)
    sel = (col >= row * HW) & (col < (row + 1) * HW)
    pool = jnp.where(sel, jnp.float32(1.0 / HW), jnp.float32(0.0))     # (n, m)
    pooled = jnp.dot(pool, y, preferred_element_type=jnp.float32)      # (n, COUT)

    # Classifier head -> lane-dense logits slab.
    logits = jnp.dot(pooled, fcw_ref[...],
                     preferred_element_type=jnp.float32) + fcb_ref[...]
    o_ref[...] = logits


def model_forward_pallas(x_nchw, params):
    """Wrapped-model forward (the `self.model(imgs_test)` hot path)."""
    x = jnp.transpose(x_nchw, (0, 2, 3, 1)).astype(jnp.float32)        # NCHW -> NHWC
    n = x.shape[0]

    # im2col (wrapper-side, fused by XLA): lane-dense (n*H*W, K_PAD) bf16 patches.
    xp = jnp.pad(x, ((0, 0), (1, 1), (1, 1), (0, 0)))                  # "same" pad
    taps = [xp[:, dy:dy + H, dx:dx + W, :] for dy in range(3) for dx in range(3)]
    patches = jnp.concatenate(taps, axis=-1).reshape(n * HW, K_RAW)    # (dy,dx,c)
    patches = jnp.pad(patches, ((0, 0), (0, K_PAD - K_RAW))).astype(jnp.bfloat16)

    # Fold constants once per call, outside the kernel (fused by XLA):
    #   scale = gamma / sqrt(var + eps);  shift = beta + (conv_b - mean) * scale
    w_mat = jnp.pad(params['conv_w'].reshape(K_RAW, COUT),
                    ((0, K_PAD - K_RAW), (0, 0))).astype(jnp.bfloat16)
    scale = params['bn_gamma'] * jax.lax.rsqrt(params['bn_var'] + EPS)
    shift = params['bn_beta'] + (params['conv_b'] - params['bn_mean']) * scale
    fc_w = jnp.pad(params['fc_w'], ((0, 0), (0, NC_PAD - NUM_CLASSES)))
    fc_b = jnp.pad(params['fc_b'], ((0, 0), (0, NC_PAD - NUM_CLASSES)))

    out = pl.pallas_call(
        _model_kernel,
        out_shape=jax.ShapeDtypeStruct((n, NC_PAD), jnp.float32),
        grid=(1,),                                   # whole batch in one step
        in_specs=[
            pl.BlockSpec((n * HW, K_PAD), lambda i: (0, 0)),
            pl.BlockSpec((K_PAD, COUT), lambda i: (0, 0)),
            pl.BlockSpec((1, COUT), lambda i: (0, 0)),
            pl.BlockSpec((1, COUT), lambda i: (0, 0)),
            pl.BlockSpec((COUT, NC_PAD), lambda i: (0, 0)),
            pl.BlockSpec((1, NC_PAD), lambda i: (0, 0)),
        ],
        out_specs=pl.BlockSpec((n, NC_PAD), lambda i: (0, 0)),
        compiler_params=pltpu.CompilerParams(
            dimension_semantics=("arbitrary",)),
    )(patches, w_mat, scale, shift, fc_w, fc_b)
    return out[:, :NUM_CLASSES]


_model_forward_jit = jax.jit(model_forward_pallas)


# --------------------------- pure-JAX reference -------------------------------
def model_forward_ref(x_nchw, params):
    x = jnp.transpose(x_nchw, (0, 2, 3, 1)).astype(jnp.float32)
    y = jax.lax.conv_general_dilated(
        x, params['conv_w'], window_strides=(1, 1), padding='SAME',
        dimension_numbers=('NHWC', 'HWIO', 'NHWC'))
    y = y + params['conv_b'][0]
    scale = params['bn_gamma'][0] / jnp.sqrt(params['bn_var'][0] + EPS)
    shift = params['bn_beta'][0] - params['bn_mean'][0] * scale
    y = jnp.maximum(y * scale + shift, 0.0)
    pooled = jnp.mean(y, axis=(1, 2))
    return pooled @ params['fc_w'] + params['fc_b'][0]


# --------------------------- TTAMethod (JAX port) ------------------------------
class TTAMethodPallas:
    """JAX/Pallas port of classification/methods/base.py::TTAMethod."""

    def __init__(self, params, num_classes, episodic=False, steps=1,
                 window_length=4, reset_after_num_updates=0):
        assert steps > 0, 'requires >= 1 step(s) to forward and update'
        self.params = dict(params)
        self.num_classes = num_classes
        self.episodic = episodic
        self.steps = steps
        self.window_length = window_length
        self.reset_after_num_updates = reset_after_num_updates
        self.performed_updates = 0
        self.img_size = (H, W)
        self.input_buffer = None
        self.pointer = 0
        self.has_bn = True  # model contains BatchNorm2d
        # copy_model_and_optimizer equivalent (source-state snapshot)
        self.model_states = {k: v for k, v in self.params.items()}
        # collect_params / get_number_trainable_params equivalent
        self.num_trainable_params = sum(int(v.size) for v in self.params.values())
        self.num_total_params = self.num_trainable_params
        # TODO(synk): setup_optimizer / GradScaler are host-side torch.optim state
        # with no Pallas equivalent; adaptation updates belong to subclasses.

    # ----- model forwards -----
    def model(self, imgs):
        return _model_forward_jit(imgs, self.params)

    def forward_sliding_window(self, x):
        imgs_test = x[0]
        return self.model(imgs_test)

    def forward_and_adapt(self, x):
        # TODO(synk): abstract (NotImplementedError) in the base class; subclasses
        # define the adaptation loss/update. Here: no-grad model forward.
        return self.model(x[0])

    # ----- state handling -----
    def reset(self):
        if self.model_states is None:
            raise Exception('cannot reset without saved model/optimizer state')
        self.params = {k: v for k, v in self.model_states.items()}

    # ----- TTAMethod.forward -----
    def forward(self, x):
        if self.episodic:
            self.reset()
        x = x if isinstance(x, list) else [x]
        if x[0].shape[0] == 1:
            # single-sample sliding-window path
            if self.input_buffer is None:
                self.input_buffer = [xi for xi in x]
            elif self.input_buffer[0].shape[0] < self.window_length:
                self.input_buffer = [jnp.concatenate([self.input_buffer[i], xi], axis=0)
                                     for i, xi in enumerate(x)]
            else:
                self.input_buffer = [buf.at[self.pointer:self.pointer + 1].set(xi)
                                     for buf, xi in zip(self.input_buffer, x)]
            if self.pointer == self.window_length - 1:
                for _ in range(self.steps):
                    outputs = self.forward_and_adapt(self.input_buffer)
                    self.performed_updates += 1
                    if (self.reset_after_num_updates > 0 and
                            self.performed_updates % self.reset_after_num_updates == 0):
                        self.reset()
                outputs = outputs[self.pointer:self.pointer + 1]
            elif self.has_bn:
                outputs = self.forward_sliding_window(self.input_buffer)
                outputs = outputs[self.pointer:self.pointer + 1]
            else:
                outputs = self.forward_sliding_window(x)
            self.pointer = (self.pointer + 1) % self.window_length
        else:
            for _ in range(self.steps):
                outputs = self.forward_and_adapt(x)
                self.performed_updates += 1
                if (self.reset_after_num_updates > 0 and
                        self.performed_updates % self.reset_after_num_updates == 0):
                    self.reset()
        return outputs


# ----------------------------------- main -------------------------------------
def init_params(key):
    k1, k2, k3, k4, k5 = jax.random.split(key, 5)
    return {
        'conv_w': jax.random.normal(k1, (3, 3, CIN, COUT), jnp.float32) * 0.1,
        'conv_b': jax.random.normal(k2, (1, COUT), jnp.float32) * 0.01,
        'bn_gamma': jnp.ones((1, COUT), jnp.float32),
        'bn_beta': jnp.zeros((1, COUT), jnp.float32),
        'bn_mean': jax.random.normal(k3, (1, COUT), jnp.float32) * 0.05,
        'bn_var': jnp.ones((1, COUT), jnp.float32)
                  + jnp.abs(jax.random.normal(k4, (1, COUT), jnp.float32)) * 0.1,
        'fc_w': jax.random.normal(k5, (COUT, NUM_CLASSES), jnp.float32) * 0.1,
        'fc_b': jnp.zeros((1, NUM_CLASSES), jnp.float32),
    }


if __name__ == "__main__":
    key = jax.random.PRNGKey(0)
    kp, kx, kx1 = jax.random.split(key, 3)
    params = init_params(kp)

    tta = TTAMethodPallas(params, num_classes=NUM_CLASSES,
                          episodic=False, steps=1, window_length=4,
                          reset_after_num_updates=0)

    # batch path (PyTorch-style NCHW input)
    x = jax.random.normal(kx, (2, CIN, H, W), jnp.float32)
    out = jax.block_until_ready(tta.forward(x))

    # single-sample sliding-window path
    x1 = jax.random.normal(kx1, (1, CIN, H, W), jnp.float32)
    out1 = jax.block_until_ready(tta.forward(x1))

    # correctness check against pure-JAX reference (bf16 conv inputs, f32 accum)
    ref = jax.block_until_ready(model_forward_ref(x, params))
    ref1 = jax.block_until_ready(model_forward_ref(x1, params))
    assert out.shape == (2, NUM_CLASSES) and out1.shape == (1, NUM_CLASSES)
    assert jnp.allclose(out, ref, rtol=1e-2, atol=1e-2), \
        f"max abs err {jnp.max(jnp.abs(out - ref))}"
    assert jnp.allclose(out1, ref1, rtol=1e-2, atol=1e-2), \
        f"max abs err {jnp.max(jnp.abs(out1 - ref1))}"

    print("KERNEL_OK")
</pallas_src>

<mosaic_0001>
module attributes {stable_mosaic.version = 11 : i64} {
  func.func @_model_kernel(%arg0: i32, %arg1: memref<2048x32xbf16, #tpu.memory_space<vmem>>, %arg2: memref<32x32xbf16, #tpu.memory_space<vmem>>, %arg3: memref<1x32xf32, #tpu.memory_space<vmem>>, %arg4: memref<1x32xf32, #tpu.memory_space<vmem>>, %arg5: memref<32x128xf32, #tpu.memory_space<vmem>>, %arg6: memref<1x128xf32, #tpu.memory_space<vmem>>, %arg7: memref<2x128xf32, #tpu.memory_space<vmem>>) attributes {dimension_semantics = [#tpu.dimension_semantics<arbitrary>], iteration_bounds = array<i64: 1>, scalar_prefetch = 0 : i64, scratch_operands = 0 : i64, tpu.core_type = #tpu.core_type<tc>, window_params = [{pipeline_mode = #tpu.pipeline_mode<synchronous>, transform_indices = @transform_0, window_bounds = array<i64: 2048, 32>}, {pipeline_mode = #tpu.pipeline_mode<synchronous>, transform_indices = @transform_1, window_bounds = array<i64: 32, 32>}, {pipeline_mode = #tpu.pipeline_mode<synchronous>, transform_indices = @transform_2, window_bounds = array<i64: 1, 32>}, {pipeline_mode = #tpu.pipeline_mode<synchronous>, transform_indices = @transform_3, window_bounds = array<i64: 1, 32>}, {pipeline_mode = #tpu.pipeline_mode<synchronous>, transform_indices = @transform_4, window_bounds = array<i64: 32, 128>}, {pipeline_mode = #tpu.pipeline_mode<synchronous>, transform_indices = @transform_5, window_bounds = array<i64: 1, 128>}, {pipeline_mode = #tpu.pipeline_mode<synchronous>, transform_indices = @transform_6, window_bounds = array<i64: 2, 128>}]} {
    %c0 = arith.constant 0 : index
    %c0_0 = arith.constant 0 : index
    %0 = vector.load %arg1[%c0, %c0_0] : memref<2048x32xbf16, #tpu.memory_space<vmem>>, vector<2048x32xbf16>
    %c0_1 = arith.constant 0 : index
    %c0_2 = arith.constant 0 : index
    %1 = vector.load %arg2[%c0_1, %c0_2] : memref<32x32xbf16, #tpu.memory_space<vmem>>, vector<32x32xbf16>
    %cst = arith.constant dense<0.000000e+00> : vector<2048x32xf32>
    %2 = tpu.matmul %0, %1, %cst {dimension_numbers = #tpu.dot_dimension_numbers<[1], [0], [0], [1], [0, 0, 1, 1], [], []>} : vector<2048x32xbf16>, vector<32x32xbf16>, vector<2048x32xf32> -> vector<2048x32xf32>
    %c0_3 = arith.constant 0 : index
    %c0_4 = arith.constant 0 : index
    %3 = vector.load %arg3[%c0_3, %c0_4] : memref<1x32xf32, #tpu.memory_space<vmem>>, vector<1x32xf32>
    %4 = vector.broadcast %3 : vector<1x32xf32> to vector<2048x32xf32>
    %5 = arith.mulf %2, %4 : vector<2048x32xf32>
    %c0_5 = arith.constant 0 : index
    %c0_6 = arith.constant 0 : index
    %6 = vector.load %arg4[%c0_5, %c0_6] : memref<1x32xf32, #tpu.memory_space<vmem>>, vector<1x32xf32>
    %7 = vector.broadcast %6 : vector<1x32xf32> to vector<2048x32xf32>
    %8 = arith.addf %5, %7 : vector<2048x32xf32>
    %cst_7 = arith.constant 0.000000e+00 : f32
    %9 = vector.broadcast %cst_7 : f32 to vector<2048x32xf32>
    %10 = arith.maximumf %8, %9 : vector<2048x32xf32>
    %11 = tpu.iota {dimensions = array<i32: 1>} : vector<2x2048xi32>
    %12 = tpu.iota {dimensions = array<i32: 0>} : vector<2x2048xi32>
    %c1024_i32 = arith.constant 1024 : i32
    %13 = vector.broadcast %c1024_i32 : i32 to vector<2x2048xi32>
    %14 = arith.muli %12, %13 : vector<2x2048xi32>
    %15 = arith.cmpi sge, %11, %14 : vector<2x2048xi32>
    %c1_i32 = arith.constant 1 : i32
    %16 = vector.broadcast %c1_i32 : i32 to vector<2x2048xi32>
    %17 = arith.addi %12, %16 : vector<2x2048xi32>
    %c1024_i32_8 = arith.constant 1024 : i32
    %18 = vector.broadcast %c1024_i32_8 : i32 to vector<2x2048xi32>
    %19 = arith.muli %17, %18 : vector<2x2048xi32>
    %20 = arith.cmpi slt, %11, %19 : vector<2x2048xi32>
    %21 = arith.andi %15, %20 : vector<2x2048xi1>
    %cst_9 = arith.constant 9.765625E-4 : f32
    %cst_10 = arith.constant 0.000000e+00 : f32
    %22 = vector.broadcast %cst_9 : f32 to vector<2x2048xf32>
    %23 = vector.broadcast %cst_10 : f32 to vector<2x2048xf32>
    %24 = arith.select %21, %22, %23 : vector<2x2048xi1>, vector<2x2048xf32>
    %cst_11 = arith.constant dense<0.000000e+00> : vector<2x32xf32>
    %25 = tpu.matmul %24, %10, %cst_11 {dimension_numbers = #tpu.dot_dimension_numbers<[1], [0], [0], [1], [0, 0, 1, 1], [], []>} : vector<2x2048xf32>, vector<2048x32xf32>, vector<2x32xf32> -> vector<2x32xf32>
    %c0_12 = arith.constant 0 : index
    %c0_13 = arith.constant 0 : index
    %26 = vector.load %arg5[%c0_12, %c0_13] : memref<32x128xf32, #tpu.memory_space<vmem>>, vector<32x128xf32>
    %cst_14 = arith.constant dense<0.000000e+00> : vector<2x128xf32>
    %27 = tpu.matmul %25, %26, %cst_14 {dimension_numbers = #tpu.dot_dimension_numbers<[1], [0], [0], [1], [0, 0, 1, 1], [], []>} : vector<2x32xf32>, vector<32x128xf32>, vector<2x128xf32> -> vector<2x128xf32>
    %c0_15 = arith.constant 0 : index
    %c0_16 = arith.constant 0 : index
    %28 = vector.load %arg6[%c0_15, %c0_16] : memref<1x128xf32, #tpu.memory_space<vmem>>, vector<1x128xf32>
    %29 = vector.broadcast %28 : vector<1x128xf32> to vector<2x128xf32>
    %30 = arith.addf %27, %29 : vector<2x128xf32>
    %c0_17 = arith.constant 0 : index
    %c0_18 = arith.constant 0 : index
    %31 = vector.load %arg7[%c0_17, %c0_18] : memref<2x128xf32, #tpu.memory_space<vmem>>, vector<2x128xf32>
    tpu.vector_store %arg7[%c0_17, %c0_18], %30 {strides = array<i32>} : memref<2x128xf32, #tpu.memory_space<vmem>>, vector<2x128xf32>,
    return
  }
  func.func @transform_0(%arg0: i32) -> (i32, i32) {
    %c0_i32 = arith.constant 0 : i32
    %c0_i32_0 = arith.constant 0 : i32
    %c0_i32_1 = arith.constant 0 : i32
    return %c0_i32, %c0_i32_0 : i32, i32
  }
  func.func @transform_1(%arg0: i32) -> (i32, i32) {
    %c0_i32 = arith.constant 0 : i32
    %c0_i32_0 = arith.constant 0 : i32
    %c0_i32_1 = arith.constant 0 : i32
    return %c0_i32, %c0_i32_0 : i32, i32
  }
  func.func @transform_2(%arg0: i32) -> (i32, i32) {
    %c0_i32 = arith.constant 0 : i32
    %c0_i32_0 = arith.constant 0 : i32
    %c0_i32_1 = arith.constant 0 : i32
    return %c0_i32, %c0_i32_0 : i32, i32
  }
  func.func @transform_3(%arg0: i32) -> (i32, i32) {
    %c0_i32 = arith.constant 0 : i32
    %c0_i32_0 = arith.constant 0 : i32
    %c0_i32_1 = arith.constant 0 : i32
    return %c0_i32, %c0_i32_0 : i32, i32
  }
  func.func @transform_4(%arg0: i32) -> (i32, i32) {
    %c0_i32 = arith.constant 0 : i32
    %c0_i32_0 = arith.constant 0 : i32
    %c0_i32_1 = arith.constant 0 : i32
    return %c0_i32, %c0_i32_0 : i32, i32
  }
  func.func @transform_5(%arg0: i32) -> (i32, i32) {
    %c0_i32 = arith.constant 0 : i32
    %c0_i32_0 = arith.constant 0 : i32
    %c0_i32_1 = arith.constant 0 : i32
    return %c0_i32, %c0_i32_0 : i32, i32
  }
  func.func @transform_6(%arg0: i32) -> (i32, i32) {
    %c0_i32 = arith.constant 0 : i32
    %c0_i32_0 = arith.constant 0 : i32
    %c0_i32_1 = arith.constant 0 : i32
    return %c0_i32, %c0_i32_0 : i32, i32
  }
}

</mosaic_0001>

<llo_original>
// kernel: model_forward_pallas.1
$region0: #{model_forward_pallas.1}
  #allocation0 [shape = 'u32[]', space=smem, size = 0x4, offset = 0x4, fixed_abs, tag = 'smem constant byte address 0x4 - core index']
  #allocation1 [shape = 'u32[144,128]{1,0:T(1,128)}', space=vmem, size = 0x12000, scoped, tag = 'internal scratch']
  %s0 = inlined_call_operand.vmem [shape: bf16[2048,32], index: 0, kind: input, shape index: {}]
  %s1 = inlined_call_operand.vmem [shape: bf16[32,32], index: 1, kind: input, shape index: {}]
  %s2 = inlined_call_operand.vmem [shape: f32[1,32], index: 2, kind: input, shape index: {}]
  %s3 = inlined_call_operand.vmem [shape: f32[1,32], index: 3, kind: input, shape index: {}]
  %s4 = inlined_call_operand.vmem [shape: f32[32,128], index: 4, kind: input, shape index: {}]
  %s5 = inlined_call_operand.vmem [shape: f32[1,128], index: 5, kind: input, shape index: {}]
  %s6 = inlined_call_operand.hbm [shape: f32[2,128], index: 6, kind: output, shape index: {}]
  %s7 = sld [smem:[#allocation0]]
  $region34: #{model_forward_pallas.1} parent=0
    _
  %s9 = ssub.s32 1, %s7
  %s10 = scalar_select 0, %s9, %s7
  $region1: #{model_forward_pallas.1} parent=0
    #allocation2 [shape = 'u8[1024]{0}', space=vmem, size = 0x400, scoped, tag = 'output window, operand 0, single buffered']
    #allocation3 [shape = 's32[1]{0}', space=sflag, size = 0x4, scoped, tag = 'scoped memory for model_forward_pallas.1']
    %11 = vsyncpa [#allocation3], 0
    // Predicated region
    $region2: #{model_forward_pallas.1} parent=1 // pred_check
      _
    $region3: #{model_forward_pallas.1} parent=1 // pred_check_branch
      %13 = sbr.rel (0) target = $region5
    $region4: #{model_forward_pallas.1} parent=1 // pred_region
      _
    $region5: #{model_forward_pallas.1} parent=1 // pred_fallthru
      _
    // Predicated region
    $region6: #{model_forward_pallas.1} parent=1 // pred_check
      _
    $region7: #{model_forward_pallas.1} parent=1 // pred_check_branch
      %15 = sbr.rel (0) target = $region9
    $region8: #{model_forward_pallas.1} parent=1 // pred_region
      _
    $region9: #{model_forward_pallas.1} parent=1 // pred_fallthru
      _
    // Predicated region
    $region10: #{model_forward_pallas.1} parent=1 // pred_check
      _
    $region11: #{model_forward_pallas.1} parent=1 // pred_check_branch
      %17 = sbr.rel (0) target = $region13
    $region12: #{model_forward_pallas.1} parent=1 // pred_region
      _
    $region13: #{model_forward_pallas.1} parent=1 // pred_fallthru
      _
    // Predicated region
    $region14: #{model_forward_pallas.1} parent=1 // pred_check
      _
    $region15: #{model_forward_pallas.1} parent=1 // pred_check_branch
      %19 = sbr.rel (0) target = $region17
    $region16: #{model_forward_pallas.1} parent=1 // pred_region
      _
    $region17: #{model_forward_pallas.1} parent=1 // pred_fallthru
      _
    // Predicated region
    $region18: #{model_forward_pallas.1} parent=1 // pred_check
      _
    $region19: #{model_forward_pallas.1} parent=1 // pred_check_branch
      %21 = sbr.rel (0) target = $region21
    $region20: #{model_forward_pallas.1} parent=1 // pred_region
      _
    $region21: #{model_forward_pallas.1} parent=1 // pred_fallthru
      _
    // Predicated region
    $region22: #{model_forward_pallas.1} parent=1 // pred_check
      _
    $region23: #{model_forward_pallas.1} parent=1 // pred_check_branch
      %23 = sbr.rel (0) target = $region25
    $region24: #{model_forward_pallas.1} parent=1 // pred_region
      _
    $region25: #{model_forward_pallas.1} parent=1 // pred_fallthru
      _
    %v25 = vld [vmem:[%s0] sm:$0xf]
    %v26 = vld [vmem:[%s0 + $0x4] sm:$0xf]
    %v27 = vld [vmem:[%s0 + $0x8] sm:$0xf]
    %v28 = vld [vmem:[%s0 + $0xc] sm:$0xf]
    %v29 = vld [vmem:[%s0 + $0x10] sm:$0xf]
    %v30 = vld [vmem:[%s0 + $0x14] sm:$0xf]
    %v31 = vld [vmem:[%s0 + $0x18] sm:$0xf]
    %v32 = vld [vmem:[%s0 + $0x1c] sm:$0xf]
    %v33 = vld [vmem:[%s0 + $0x20] sm:$0xf]
    %v34 = vld [vmem:[%s0 + $0x24] sm:$0xf]
    %v35 = vld [vmem:[%s0 + $0x28] sm:$0xf]
    %v36 = vld [vmem:[%s0 + $0x2c] sm:$0xf]
    %v37 = vld [vmem:[%s0 + $0x30] sm:$0xf]
    %v38 = vld [vmem:[%s0 + $0x34] sm:$0xf]
    %v39 = vld [vmem:[%s0 + $0x38] sm:$0xf]
    %v40 = vld [vmem:[%s0 + $0x3c] sm:$0xf]
    %v41 = vld [vmem:[%s0 + $0x40] sm:$0xf]
    %v42 = vld [vmem:[%s0 + $0x44] sm:$0xf]
    %v43 = vld [vmem:[%s0 + $0x48] sm:$0xf]
    %v44 = vld [vmem:[%s0 + $0x4c] sm:$0xf]
    %v45 = vld [vmem:[%s0 + $0x50] sm:$0xf]
    %v46 = vld [vmem:[%s0 + $0x54] sm:$0xf]
    %v47 = vld [vmem:[%s0 + $0x58] sm:$0xf]
    %v48 = vld [vmem:[%s0 + $0x5c] sm:$0xf]
    %v49 = vld [vmem:[%s0 + $0x60] sm:$0xf]
    %v50 = vld [vmem:[%s0 + $0x64] sm:$0xf]
    %v51 = vld [vmem:[%s0 + $0x68] sm:$0xf]
    %v52 = vld [vmem:[%s0 + $0x6c] sm:$0xf]
    %v53 = vld [vmem:[%s0 + $0x70] sm:$0xf]
    %v54 = vld [vmem:[%s0 + $0x74] sm:$0xf]
    %v55 = vld [vmem:[%s0 + $0x78] sm:$0xf]
    %v56 = vld [vmem:[%s0 + $0x7c] sm:$0xf]
    %v57 = vld [vmem:[%s0 + $0x80] sm:$0xf]
    %v58 = vld [vmem:[%s0 + $0x84] sm:$0xf]
    %v59 = vld [vmem:[%s0 + $0x88] sm:$0xf]
    %v60 = vld [vmem:[%s0 + $0x8c] sm:$0xf]
    %v61 = vld [vmem:[%s0 + $0x90] sm:$0xf]
    %v62 = vld [vmem:[%s0 + $0x94] sm:$0xf]
    %v63 = vld [vmem:[%s0 + $0x98] sm:$0xf]
    %v64 = vld [vmem:[%s0 + $0x9c] sm:$0xf]
    %v65 = vld [vmem:[%s0 + $0xa0] sm:$0xf]
    %v66 = vld [vmem:[%s0 + $0xa4] sm:$0xf]
    %v67 = vld [vmem:[%s0 + $0xa8] sm:$0xf]
    %v68 = vld [vmem:[%s0 + $0xac] sm:$0xf]
    %v69 = vld [vmem:[%s0 + $0xb0] sm:$0xf]
    %v70 = vld [vmem:[%s0 + $0xb4] sm:$0xf]
    %v71 = vld [vmem:[%s0 + $0xb8] sm:$0xf]
    %v72 = vld [vmem:[%s0 + $0xbc] sm:$0xf]
    %v73 = vld [vmem:[%s0 + $0xc0] sm:$0xf]
    %v74 = vld [vmem:[%s0 + $0xc4] sm:$0xf]
    %v75 = vld [vmem:[%s0 + $0xc8] sm:$0xf]
    %v76 = vld [vmem:[%s0 + $0xcc] sm:$0xf]
    %v77 = vld [vmem:[%s0 + $0xd0] sm:$0xf]
    %v78 = vld [vmem:[%s0 + $0xd4] sm:$0xf]
    %v79 = vld [vmem:[%s0 + $0xd8] sm:$0xf]
    %v80 = vld [vmem:[%s0 + $0xdc] sm:$0xf]
    %v81 = vld [vmem:[%s0 + $0xe0] sm:$0xf]
    %v82 = vld [vmem:[%s0 + $0xe4] sm:$0xf]
    %v83 = vld [vmem:[%s0 + $0xe8] sm:$0xf]
    %v84 = vld [vmem:[%s0 + $0xec] sm:$0xf]
    %v85 = vld [vmem:[%s0 + $0xf0] sm:$0xf]
    %v86 = vld [vmem:[%s0 + $0xf4] sm:$0xf]
    %v87 = vld [vmem:[%s0 + $0xf8] sm:$0xf]
    %v88 = vld [vmem:[%s0 + $0xfc] sm:$0xf]
    %v89 = vld [vmem:[%s0 + $0x100] sm:$0xf]
    %v90 = vld [vmem:[%s0 + $0x104] sm:$0xf]
    %v91 = vld [vmem:[%s0 + $0x108] sm:$0xf]
    %v92 = vld [vmem:[%s0 + $0x10c] sm:$0xf]
    %v93 = vld [vmem:[%s0 + $0x110] sm:$0xf]
    %v94 = vld [vmem:[%s0 + $0x114] sm:$0xf]
    %v95 = vld [vmem:[%s0 + $0x118] sm:$0xf]
    %v96 = vld [vmem:[%s0 + $0x11c] sm:$0xf]
    %v97 = vld [vmem:[%s0 + $0x120] sm:$0xf]
    %v98 = vld [vmem:[%s0 + $0x124] sm:$0xf]
    %v99 = vld [vmem:[%s0 + $0x128] sm:$0xf]
    %v100 = vld [vmem:[%s0 + $0x12c] sm:$0xf]
    %v101 = vld [vmem:[%s0 + $0x130] sm:$0xf]
    %v102 = vld [vmem:[%s0 + $0x134] sm:$0xf]
    %v103 = vld [vmem:[%s0 + $0x138] sm:$0xf]
    %v104 = vld [vmem:[%s0 + $0x13c] sm:$0xf]
    %v105 = vld [vmem:[%s0 + $0x140] sm:$0xf]
    %v106 = vld [vmem:[%s0 + $0x144] sm:$0xf]
    %v107 = vld [vmem:[%s0 + $0x148] sm:$0xf]
    %v108 = vld [vmem:[%s0 + $0x14c] sm:$0xf]
    %v109 = vld [vmem:[%s0 + $0x150] sm:$0xf]
    %v110 = vld [vmem:[%s0 + $0x154] sm:$0xf]
    %v111 = vld [vmem:[%s0 + $0x158] sm:$0xf]
    %v112 = vld [vmem:[%s0 + $0x15c] sm:$0xf]
    %v113 = vld [vmem:[%s0 + $0x160] sm:$0xf]
    %v114 = vld [vmem:[%s0 + $0x164] sm:$0xf]
    %v115 = vld [vmem:[%s0 + $0x168] sm:$0xf]
    %v116 = vld [vmem:[%s0 + $0x16c] sm:$0xf]
    %v117 = vld [vmem:[%s0 + $0x170] sm:$0xf]
    %v118 = vld [vmem:[%s0 + $0x174] sm:$0xf]
    %v119 = vld [vmem:[%s0 + $0x178] sm:$0xf]
    %v120 = vld [vmem:[%s0 + $0x17c] sm:$0xf]
    %v121 = vld [vmem:[%s0 + $0x180] sm:$0xf]
    %v122 = vld [vmem:[%s0 + $0x184] sm:$0xf]
    %v123 = vld [vmem:[%s0 + $0x188] sm:$0xf]
    %v124 = vld [vmem:[%s0 + $0x18c] sm:$0xf]
    %v125 = vld [vmem:[%s0 + $0x190] sm:$0xf]
    %v126 = vld [vmem:[%s0 + $0x194] sm:$0xf]
    %v127 = vld [vmem:[%s0 + $0x198] sm:$0xf]
    %v128 = vld [vmem:[%s0 + $0x19c] sm:$0xf]
    %v129 = vld [vmem:[%s0 + $0x1a0] sm:$0xf]
    %v130 = vld [vmem:[%s0 + $0x1a4] sm:$0xf]
    %v131 = vld [vmem:[%s0 + $0x1a8] sm:$0xf]
    %v132 = vld [vmem:[%s0 + $0x1ac] sm:$0xf]
    %v133 = vld [vmem:[%s0 + $0x1b0] sm:$0xf]
    %v134 = vld [vmem:[%s0 + $0x1b4] sm:$0xf]
    %v135 = vld [vmem:[%s0 + $0x1b8] sm:$0xf]
    %v136 = vld [vmem:[%s0 + $0x1bc] sm:$0xf]
    %v137 = vld [vmem:[%s0 + $0x1c0] sm:$0xf]
    %v138 = vld [vmem:[%s0 + $0x1c4] sm:$0xf]
    %v139 = vld [vmem:[%s0 + $0x1c8] sm:$0xf]
    %v140 = vld [vmem:[%s0 + $0x1cc] sm:$0xf]
    %v141 = vld [vmem:[%s0 + $0x1d0] sm:$0xf]
    %v142 = vld [vmem:[%s0 + $0x1d4] sm:$0xf]
    %v143 = vld [vmem:[%s0 + $0x1d8] sm:$0xf]
    %v144 = vld [vmem:[%s0 + $0x1dc] sm:$0xf]
    %v145 = vld [vmem:[%s0 + $0x1e0] sm:$0xf]
    %v146 = vld [vmem:[%s0 + $0x1e4] sm:$0xf]
    %v147 = vld [vmem:[%s0 + $0x1e8] sm:$0xf]
    %v148 = vld [vmem:[%s0 + $0x1ec] sm:$0xf]
    %v149 = vld [vmem:[%s0 + $0x1f0] sm:$0xf]
    %v150 = vld [vmem:[%s0 + $0x1f4] sm:$0xf]
    %v151 = vld [vmem:[%s0 + $0x1f8] sm:$0xf]
    %v152 = vld [vmem:[%s0 + $0x1fc] sm:$0xf]
    %v153 = vld [vmem:[%s0 + $0x200] sm:$0xf]
    %v154 = vld [vmem:[%s0 + $0x204] sm:$0xf]
    %v155 = vld [vmem:[%s0 + $0x208] sm:$0xf]
    %v156 = vld [vmem:[%s0 + $0x20c] sm:$0xf]
    %v157 = vld [vmem:[%s0 + $0x210] sm:$0xf]
    %v158 = vld [vmem:[%s0 + $0x214] sm:$0xf]
    %v159 = vld [vmem:[%s0 + $0x218] sm:$0xf]
    %v160 = vld [vmem:[%s0 + $0x21c] sm:$0xf]
    %v161 = vld [vmem:[%s0 + $0x220] sm:$0xf]
    %v162 = vld [vmem:[%s0 + $0x224] sm:$0xf]
    %v163 = vld [vmem:[%s0 + $0x228] sm:$0xf]
    %v164 = vld [vmem:[%s0 + $0x22c] sm:$0xf]
    %v165 = vld [vmem:[%s0 + $0x230] sm:$0xf]
    %v166 = vld [vmem:[%s0 + $0x234] sm:$0xf]
    %v167 = vld [vmem:[%s0 + $0x238] sm:$0xf]
    %v168 = vld [vmem:[%s0 + $0x23c] sm:$0xf]
    %v169 = vld [vmem:[%s0 + $0x240] sm:$0xf]
    %v170 = vld [vmem:[%s0 + $0x244] sm:$0xf]
    %v171 = vld [vmem:[%s0 + $0x248] sm:$0xf]
    %v172 = vld [vmem:[%s0 + $0x24c] sm:$0xf]
    %v173 = vld [vmem:[%s0 + $0x250] sm:$0xf]
    %v174 = vld [vmem:[%s0 + $0x254] sm:$0xf]
    %v175 = vld [vmem:[%s0 + $0x258] sm:$0xf]
    %v176 = vld [vmem:[%s0 + $0x25c] sm:$0xf]
    %v177 = vld [vmem:[%s0 + $0x260] sm:$0xf]
    %v178 = vld [vmem:[%s0 + $0x264] sm:$0xf]
    %v179 = vld [vmem:[%s0 + $0x268] sm:$0xf]
    %v180 = vld [vmem:[%s0 + $0x26c] sm:$0xf]
    %v181 = vld [vmem:[%s0 + $0x270] sm:$0xf]
    %v182 = vld [vmem:[%s0 + $0x274] sm:$0xf]
    %v183 = vld [vmem:[%s0 + $0x278] sm:$0xf]
    %v184 = vld [vmem:[%s0 + $0x27c] sm:$0xf]
    %v185 = vld [vmem:[%s0 + $0x280] sm:$0xf]
    %v186 = vld [vmem:[%s0 + $0x284] sm:$0xf]
    %v187 = vld [vmem:[%s0 + $0x288] sm:$0xf]
    %v188 = vld [vmem:[%s0 + $0x28c] sm:$0xf]
    %v189 = vld [vmem:[%s0 + $0x290] sm:$0xf]
    %v190 = vld [vmem:[%s0 + $0x294] sm:$0xf]
    %v191 = vld [vmem:[%s0 + $0x298] sm:$0xf]
    %v192 = vld [vmem:[%s0 + $0x29c] sm:$0xf]
    %v193 = vld [vmem:[%s0 + $0x2a0] sm:$0xf]
    %v194 = vld [vmem:[%s0 + $0x2a4] sm:$0xf]
    %v195 = vld [vmem:[%s0 + $0x2a8] sm:$0xf]
    %v196 = vld [vmem:[%s0 + $0x2ac] sm:$0xf]
    %v197 = vld [vmem:[%s0 + $0x2b0] sm:$0xf]
    %v198 = vld [vmem:[%s0 + $0x2b4] sm:$0xf]
    %v199 = vld [vmem:[%s0 + $0x2b8] sm:$0xf]
    %v200 = vld [vmem:[%s0 + $0x2bc] sm:$0xf]
    %v201 = vld [vmem:[%s0 + $0x2c0] sm:$0xf]
    %v202 = vld [vmem:[%s0 + $0x2c4] sm:$0xf]
    %v203 = vld [vmem:[%s0 + $0x2c8] sm:$0xf]
    %v204 = vld [vmem:[%s0 + $0x2cc] sm:$0xf]
    %v205 = vld [vmem:[%s0 + $0x2d0] sm:$0xf]
    %v206 = vld [vmem:[%s0 + $0x2d4] sm:$0xf]
    %v207 = vld [vmem:[%s0 + $0x2d8] sm:$0xf]
    %v208 = vld [vmem:[%s0 + $0x2dc] sm:$0xf]
    %v209 = vld [vmem:[%s0 + $0x2e0] sm:$0xf]
    %v210 = vld [vmem:[%s0 + $0x2e4] sm:$0xf]
    %v211 = vld [vmem:[%s0 + $0x2e8] sm:$0xf]
    %v212 = vld [vmem:[%s0 + $0x2ec] sm:$0xf]
    %v213 = vld [vmem:[%s0 + $0x2f0] sm:$0xf]
    %v214 = vld [vmem:[%s0 + $0x2f4] sm:$0xf]
    %v215 = vld [vmem:[%s0 + $0x2f8] sm:$0xf]
    %v216 = vld [vmem:[%s0 + $0x2fc] sm:$0xf]
    %v217 = vld [vmem:[%s0 + $0x300] sm:$0xf]
    %v218 = vld [vmem:[%s0 + $0x304] sm:$0xf]
    %v219 = vld [vmem:[%s0 + $0x308] sm:$0xf]
    %v220 = vld [vmem:[%s0 + $0x30c] sm:$0xf]
    %v221 = vld [vmem:[%s0 + $0x310] sm:$0xf]
    %v222 = vld [vmem:[%s0 + $0x314] sm:$0xf]
    %v223 = vld [vmem:[%s0 + $0x318] sm:$0xf]
    %v224 = vld [vmem:[%s0 + $0x31c] sm:$0xf]
    %v225 = vld [vmem:[%s0 + $0x320] sm:$0xf]
    %v226 = vld [vmem:[%s0 + $0x324] sm:$0xf]
    %v227 = vld [vmem:[%s0 + $0x328] sm:$0xf]
    %v228 = vld [vmem:[%s0 + $0x32c] sm:$0xf]
    %v229 = vld [vmem:[%s0 + $0x330] sm:$0xf]
    %v230 = vld [vmem:[%s0 + $0x334] sm:$0xf]
    %v231 = vld [vmem:[%s0 + $0x338] sm:$0xf]
    %v232 = vld [vmem:[%s0 + $0x33c] sm:$0xf]
    %v233 = vld [vmem:[%s0 + $0x340] sm:$0xf]
    %v234 = vld [vmem:[%s0 + $0x344] sm:$0xf]
    %v235 = vld [vmem:[%s0 + $0x348] sm:$0xf]
    %v236 = vld [vmem:[%s0 + $0x34c] sm:$0xf]
    %v237 = vld [vmem:[%s0 + $0x350] sm:$0xf]
    %v238 = vld [vmem:[%s0 + $0x354] sm:$0xf]
    %v239 = vld [vmem:[%s0 + $0x358] sm:$0xf]
    %v240 = vld [vmem:[%s0 + $0x35c] sm:$0xf]
    %v241 = vld [vmem:[%s0 + $0x360] sm:$0xf]
    %v242 = vld [vmem:[%s0 + $0x364] sm:$0xf]
    %v243 = vld [vmem:[%s0 + $0x368] sm:$0xf]
    %v244 = vld [vmem:[%s0 + $0x36c] sm:$0xf]
    %v245 = vld [vmem:[%s0 + $0x370] sm:$0xf]
    %v246 = vld [vmem:[%s0 + $0x374] sm:$0xf]
    %v247 = vld [vmem:[%s0 + $0x378] sm:$0xf]
    %v248 = vld [vmem:[%s0 + $0x37c] sm:$0xf]
    %v249 = vld [vmem:[%s0 + $0x380] sm:$0xf]
    %v250 = vld [vmem:[%s0 + $0x384] sm:$0xf]
    %v251 = vld [vmem:[%s0 + $0x388] sm:$0xf]
    %v252 = vld [vmem:[%s0 + $0x38c] sm:$0xf]
    %v253 = vld [vmem:[%s0 + $0x390] sm:$0xf]
    %v254 = vld [vmem:[%s0 + $0x394] sm:$0xf]
    %v255 = vld [vmem:[%s0 + $0x398] sm:$0xf]
    %v256 = vld [vmem:[%s0 + $0x39c] sm:$0xf]
    %v257 = vld [vmem:[%s0 + $0x3a0] sm:$0xf]
    %v258 = vld [vmem:[%s0 + $0x3a4] sm:$0xf]
    %v259 = vld [vmem:[%s0 + $0x3a8] sm:$0xf]
    %v260 = vld [vmem:[%s0 + $0x3ac] sm:$0xf]
    %v261 = vld [vmem:[%s0 + $0x3b0] sm:$0xf]
    %v262 = vld [vmem:[%s0 + $0x3b4] sm:$0xf]
    %v263 = vld [vmem:[%s0 + $0x3b8] sm:$0xf]
    %v264 = vld [vmem:[%s0 + $0x3bc] sm:$0xf]
    %v265 = vld [vmem:[%s0 + $0x3c0] sm:$0xf]
    %v266 = vld [vmem:[%s0 + $0x3c4] sm:$0xf]
    %v267 = vld [vmem:[%s0 + $0x3c8] sm:$0xf]
    %v268 = vld [vmem:[%s0 + $0x3cc] sm:$0xf]
    %v269 = vld [vmem:[%s0 + $0x3d0] sm:$0xf]
    %v270 = vld [vmem:[%s0 + $0x3d4] sm:$0xf]
    %v271 = vld [vmem:[%s0 + $0x3d8] sm:$0xf]
    %v272 = vld [vmem:[%s0 + $0x3dc] sm:$0xf]
    %v273 = vld [vmem:[%s0 + $0x3e0] sm:$0xf]
    %v274 = vld [vmem:[%s0 + $0x3e4] sm:$0xf]
    %v275 = vld [vmem:[%s0 + $0x3e8] sm:$0xf]
    %v276 = vld [vmem:[%s0 + $0x3ec] sm:$0xf]
    %v277 = vld [vmem:[%s0 + $0x3f0] sm:$0xf]
    %v278 = vld [vmem:[%s0 + $0x3f4] sm:$0xf]
    %v279 = vld [vmem:[%s0 + $0x3f8] sm:$0xf]
    %v280 = vld [vmem:[%s0 + $0x3fc] sm:$0xf]
    %v281 = vld [vmem:[%s1] sm:$0xf]
    %v282 = vld [vmem:[%s1 + $0x4] sm:$0xf]
    %v283 = vld [vmem:[%s1 + $0x8] sm:$0xf]
    %v284 = vld [vmem:[%s1 + $0xc] sm:$0xf]
    %v541 = vunpack.c.l.b16 %v25
    %v542 = vunpack.c.l.b16 %v26
    %v543 = vunpack.c.l.b16 %v27
    %v544 = vunpack.c.l.b16 %v28
    %v545 = vunpack.c.l.b16 %v29
    %v546 = vunpack.c.l.b16 %v30
    %v547 = vunpack.c.l.b16 %v31
    %v548 = vunpack.c.l.b16 %v32
    %v549 = vunpack.c.l.b16 %v33
    %v550 = vunpack.c.l.b16 %v34
    %v551 = vunpack.c.l.b16 %v35
    %v552 = vunpack.c.l.b16 %v36
    %v553 = vunpack.c.l.b16 %v37
    %v554 = vunpack.c.l.b16 %v38
    %v555 = vunpack.c.l.b16 %v39
    %v556 = vunpack.c.l.b16 %v40
    %v557 = vunpack.c.l.b16 %v41
    %v558 = vunpack.c.l.b16 %v42
    %v559 = vunpack.c.l.b16 %v43
    %v560 = vunpack.c.l.b16 %v44
    %v561 = vunpack.c.l.b16 %v45
    %v562 = vunpack.c.l.b16 %v46
    %v563 = vunpack.c.l.b16 %v47
    %v564 = vunpack.c.l.b16 %v48
    %v565 = vunpack.c.l.b16 %v49
    %v566 = vunpack.c.l.b16 %v50
    %v567 = vunpack.c.l.b16 %v51
    %v568 = vunpack.c.l.b16 %v52
    %v569 = vunpack.c.l.b16 %v53
    %v570 = vunpack.c.l.b16 %v54
    %v571 = vunpack.c.l.b16 %v55
    %v572 = vunpack.c.l.b16 %v56
    %v573 = vunpack.c.l.b16 %v57
    %v574 = vunpack.c.l.b16 %v58
    %v575 = vunpack.c.l.b16 %v59
    %v576 = vunpack.c.l.b16 %v60
    %v577 = vunpack.c.l.b16 %v61
    %v578 = vunpack.c.l.b16 %v62
    %v579 = vunpack.c.l.b16 %v63
    %v580 = vunpack.c.l.b16 %v64
    %v581 = vunpack.c.l.b16 %v65
    %v582 = vunpack.c.l.b16 %v66
    %v583 = vunpack.c.l.b16 %v67
    %v584 = vunpack.c.l.b16 %v68
    %v585 = vunpack.c.l.b16 %v69
    %v586 = vunpack.c.l.b16 %v70
    %v587 = vunpack.c.l.b16 %v71
    %v588 = vunpack.c.l.b16 %v72
    %v589 = vunpack.c.l.b16 %v73
    %v590 = vunpack.c.l.b16 %v74
    %v591 = vunpack.c.l.b16 %v75
    %v592 = vunpack.c.l.b16 %v76
    %v593 = vunpack.c.l.b16 %v77
    %v594 = vunpack.c.l.b16 %v78
    %v595 = vunpack.c.l.b16 %v79
    %v596 = vunpack.c.l.b16 %v80
    %v597 = vunpack.c.l.b16 %v81
    %v598 = vunpack.c.l.b16 %v82
    %v599 = vunpack.c.l.b16 %v83
    %v600 = vunpack.c.l.b16 %v84
    %v601 = vunpack.c.l.b16 %v85
    %v602 = vunpack.c.l.b16 %v86
    %v603 = vunpack.c.l.b16 %v87
    %v604 = vunpack.c.l.b16 %v88
    %v605 = vunpack.c.l.b16 %v89
    %v606 = vunpack.c.l.b16 %v90
    %v607 = vunpack.c.l.b16 %v91
    %v608 = vunpack.c.l.b16 %v92
    %v609 = vunpack.c.l.b16 %v93
    %v610 = vunpack.c.l.b16 %v94
    %v611 = vunpack.c.l.b16 %v95
    %v612 = vunpack.c.l.b16 %v96
    %v613 = vunpack.c.l.b16 %v97
    %v614 = vunpack.c.l.b16 %v98
    %v615 = vunpack.c.l.b16 %v99
    %v616 = vunpack.c.l.b16 %v100
    %v617 = vunpack.c.l.b16 %v101
    %v618 = vunpack.c.l.b16 %v102
    %v619 = vunpack.c.l.b16 %v103
    %v620 = vunpack.c.l.b16 %v104
    %v621 = vunpack.c.l.b16 %v105
    %v622 = vunpack.c.l.b16 %v106
    %v623 = vunpack.c.l.b16 %v107
    %v624 = vunpack.c.l.b16 %v108
    %v625 = vunpack.c.l.b16 %v109
    %v626 = vunpack.c.l.b16 %v110
    %v627 = vunpack.c.l.b16 %v111
    %v628 = vunpack.c.l.b16 %v112
    %v629 = vunpack.c.l.b16 %v113
    %v630 = vunpack.c.l.b16 %v114
    %v631 = vunpack.c.l.b16 %v115
    %v632 = vunpack.c.l.b16 %v116
    %v633 = vunpack.c.l.b16 %v117
    %v634 = vunpack.c.l.b16 %v118
    %v635 = vunpack.c.l.b16 %v119
    %v636 = vunpack.c.l.b16 %v120
    %v637 = vunpack.c.l.b16 %v121
    %v638 = vunpack.c.l.b16 %v122
    %v639 = vunpack.c.l.b16 %v123
    %v640 = vunpack.c.l.b16 %v124
    %v641 = vunpack.c.l.b16 %v125
    %v642 = vunpack.c.l.b16 %v126
    %v643 = vunpack.c.l.b16 %v127
    %v644 = vunpack.c.l.b16 %v128
    %v645 = vunpack.c.l.b16 %v129
    %v646 = vunpack.c.l.b16 %v130
    %v647 = vunpack.c.l.b16 %v131
    %v648 = vunpack.c.l.b16 %v132
    %v649 = vunpack.c.l.b16 %v133
    %v650 = vunpack.c.l.b16 %v134
    %v651 = vunpack.c.l.b16 %v135
    %v652 = vunpack.c.l.b16 %v136
    %v653 = vunpack.c.l.b16 %v137
    %v654 = vunpack.c.l.b16 %v138
    %v655 = vunpack.c.l.b16 %v139
    %v656 = vunpack.c.l.b16 %v140
    %v657 = vunpack.c.l.b16 %v141
    %v658 = vunpack.c.l.b16 %v142
    %v659 = vunpack.c.l.b16 %v143
    %v660 = vunpack.c.l.b16 %v144
    %v661 = vunpack.c.l.b16 %v145
    %v662 = vunpack.c.l.b16 %v146
    %v663 = vunpack.c.l.b16 %v147
    %v664 = vunpack.c.l.b16 %v148
    %v665 = vunpack.c.l.b16 %v149
    %v666 = vunpack.c.l.b16 %v150
    %v667 = vunpack.c.l.b16 %v151
    %v668 = vunpack.c.l.b16 %v152
    %v669 = vunpack.c.l.b16 %v153
    %v670 = vunpack.c.l.b16 %v154
    %v671 = vunpack.c.l.b16 %v155
    %v672 = vunpack.c.l.b16 %v156
    %v673 = vunpack.c.l.b16 %v157
    %v674 = vunpack.c.l.b16 %v158
    %v675 = vunpack.c.l.b16 %v159
    %v676 = vunpack.c.l.b16 %v160
    %v677 = vunpack.c.l.b16 %v161
    %v678 = vunpack.c.l.b16 %v162
    %v679 = vunpack.c.l.b16 %v163
    %v680 = vunpack.c.l.b16 %v164
    %v681 = vunpack.c.l.b16 %v165
    %v682 = vunpack.c.l.b16 %v166
    %v683 = vunpack.c.l.b16 %v167
    %v684 = vunpack.c.l.b16 %v168
    %v685 = vunpack.c.l.b16 %v169
    %v686 = vunpack.c.l.b16 %v170
    %v687 = vunpack.c.l.b16 %v171
    %v688 = vunpack.c.l.b16 %v172
    %v689 = vunpack.c.l.b16 %v173
    %v690 = vunpack.c.l.b16 %v174
    %v691 = vunpack.c.l.b16 %v175
    %v692 = vunpack.c.l.b16 %v176
    %v693 = vunpack.c.l.b16 %v177
    %v694 = vunpack.c.l.b16 %v178
    %v695 = vunpack.c.l.b16 %v179
    %v696 = vunpack.c.l.b16 %v180
    %v697 = vunpack.c.l.b16 %v181
    %v698 = vunpack.c.l.b16 %v182
    %v699 = vunpack.c.l.b16 %v183
    %v700 = vunpack.c.l.b16 %v184
    %v701 = vunpack.c.l.b16 %v185
    %v702 = vunpack.c.l.b16 %v186
    %v703 = vunpack.c.l.b16 %v187
    %v704 = vunpack.c.l.b16 %v188
    %v705 = vunpack.c.l.b16 %v189
    %v706 = vunpack.c.l.b16 %v190
    %v707 = vunpack.c.l.b16 %v191
    %v708 = vunpack.c.l.b16 %v192
    %v709 = vunpack.c.l.b16 %v193
    %v710 = vunpack.c.l.b16 %v194
    %v711 = vunpack.c.l.b16 %v195
    %v712 = vunpack.c.l.b16 %v196
    %v713 = vunpack.c.l.b16 %v197
    %v714 = vunpack.c.l.b16 %v198
    %v715 = vunpack.c.l.b16 %v199
    %v716 = vunpack.c.l.b16 %v200
    %v717 = vunpack.c.l.b16 %v201
    %v718 = vunpack.c.l.b16 %v202
    %v719 = vunpack.c.l.b16 %v203
    %v720 = vunpack.c.l.b16 %v204
    %v721 = vunpack.c.l.b16 %v205
    %v722 = vunpack.c.l.b16 %v206
    %v723 = vunpack.c.l.b16 %v207
    %v724 = vunpack.c.l.b16 %v208
    %v725 = vunpack.c.l.b16 %v209
    %v726 = vunpack.c.l.b16 %v210
    %v727 = vunpack.c.l.b16 %v211
    %v728 = vunpack.c.l.b16 %v212
    %v729 = vunpack.c.l.b16 %v213
    %v730 = vunpack.c.l.b16 %v214
    %v731 = vunpack.c.l.b16 %v215
    %v732 = vunpack.c.l.b16 %v216
    %v733 = vunpack.c.l.b16 %v217
    %v734 = vunpack.c.l.b16 %v218
    %v735 = vunpack.c.l.b16 %v219
    %v736 = vunpack.c.l.b16 %v220
    %v737 = vunpack.c.l.b16 %v221
    %v738 = vunpack.c.l.b16 %v222
    %v739 = vunpack.c.l.b16 %v223
    %v740 = vunpack.c.l.b16 %v224
    %v741 = vunpack.c.l.b16 %v225
    %v742 = vunpack.c.l.b16 %v226
    %v743 = vunpack.c.l.b16 %v227
    %v744 = vunpack.c.l.b16 %v228
    %v745 = vunpack.c.l.b16 %v229
    %v746 = vunpack.c.l.b16 %v230
    %v747 = vunpack.c.l.b16 %v231
    %v748 = vunpack.c.l.b16 %v232
    %v749 = vunpack.c.l.b16 %v233
    %v750 = vunpack.c.l.b16 %v234
    %v751 = vunpack.c.l.b16 %v235
    %v752 = vunpack.c.l.b16 %v236
    %v753 = vunpack.c.l.b16 %v237
    %v754 = vunpack.c.l.b16 %v238
    %v755 = vunpack.c.l.b16 %v239
    %v756 = vunpack.c.l.b16 %v240
    %v757 = vunpack.c.l.b16 %v241
    %v758 = vunpack.c.l.b16 %v242
    %v759 = vunpack.c.l.b16 %v243
    %v760 = vunpack.c.l.b16 %v244
    %v761 = vunpack.c.l.b16 %v245
    %v762 = vunpack.c.l.b16 %v246
    %v763 = vunpack.c.l.b16 %v247
    %v764 = vunpack.c.l.b16 %v248
    %v765 = vunpack.c.l.b16 %v249
    %v766 = vunpack.c.l.b16 %v250
    %v767 = vunpack.c.l.b16 %v251
    %v768 = vunpack.c.l.b16 %v252
    %v769 = vunpack.c.l.b16 %v253
    %v770 = vunpack.c.l.b16 %v254
    %v771 = vunpack.c.l.b16 %v255
    %v772 = vunpack.c.l.b16 %v256
    %v773 = vunpack.c.l.b16 %v257
    %v774 = vunpack.c.l.b16 %v258
    %v775 = vunpack.c.l.b16 %v259
    %v776 = vunpack.c.l.b16 %v260
    %v777 = vunpack.c.l.b16 %v261
    %v778 = vunpack.c.l.b16 %v262
    %v779 = vunpack.c.l.b16 %v263
    %v780 = vunpack.c.l.b16 %v264
    %v781 = vunpack.c.l.b16 %v265
    %v782 = vunpack.c.l.b16 %v266
    %v783 = vunpack.c.l.b16 %v267
    %v784 = vunpack.c.l.b16 %v268
    %v785 = vunpack.c.l.b16 %v269
    %v786 = vunpack.c.l.b16 %v270
    %v787 = vunpack.c.l.b16 %v271
    %v788 = vunpack.c.l.b16 %v272
    %v789 = vunpack.c.l.b16 %v273
    %v790 = vunpack.c.l.b16 %v274
    %v791 = vunpack.c.l.b16 %v275
    %v792 = vunpack.c.l.b16 %v276
    %v793 = vunpack.c.l.b16 %v277
    %v794 = vunpack.c.l.b16 %v278
    %v795 = vunpack.c.l.b16 %v279
    %v796 = vunpack.c.l.b16 %v280
    %v797 = vpack.c.b16 %v542, %v541
    %v798 = vpack.c.b16 %v544, %v543
    %v799 = vpack.c.b16 %v546, %v545
    %v800 = vpack.c.b16 %v548, %v547
    %v801 = vpack.c.b16 %v550, %v549
    %v802 = vpack.c.b16 %v552, %v551
    %v803 = vpack.c.b16 %v554, %v553
    %v804 = vpack.c.b16 %v556, %v555
    %v805 = vpack.c.b16 %v558, %v557
    %v806 = vpack.c.b16 %v560, %v559
    %v807 = vpack.c.b16 %v562, %v561
    %v808 = vpack.c.b16 %v564, %v563
    %v809 = vpack.c.b16 %v566, %v565
    %v810 = vpack.c.b16 %v568, %v567
    %v811 = vpack.c.b16 %v570, %v569
    %v812 = vpack.c.b16 %v572, %v571
    %v813 = vpack.c.b16 %v574, %v573
    %v814 = vpack.c.b16 %v576, %v575
    %v815 = vpack.c.b16 %v578, %v577
    %v816 = vpack.c.b16 %v580, %v579
    %v817 = vpack.c.b16 %v582, %v581
    %v818 = vpack.c.b16 %v584, %v583
    %v819 = vpack.c.b16 %v586, %v585
    %v820 = vpack.c.b16 %v588, %v587
    %v821 = vpack.c.b16 %v590, %v589
    %v822 = vpack.c.b16 %v592, %v591
    %v823 = vpack.c.b16 %v594, %v593
    %v824 = vpack.c.b16 %v596, %v595
    %v825 = vpack.c.b16 %v598, %v597
    %v826 = vpack.c.b16 %v600, %v599
    %v827 = vpack.c.b16 %v602, %v601
    %v828 = vpack.c.b16 %v604, %v603
    %v829 = vpack.c.b16 %v606, %v605
    %v830 = vpack.c.b16 %v608, %v607
    %v831 = vpack.c.b16 %v610, %v609
    %v832 = vpack.c.b16 %v612, %v611
    %v833 = vpack.c.b16 %v614, %v613
    %v834 = vpack.c.b16 %v616, %v615
    %v835 = vpack.c.b16 %v618, %v617
    %v836 = vpack.c.b16 %v620, %v619
    %v837 = vpack.c.b16 %v622, %v621
    %v838 = vpack.c.b16 %v624, %v623
    %v839 = vpack.c.b16 %v626, %v625
    %v840 = vpack.c.b16 %v628, %v627
    %v841 = vpack.c.b16 %v630, %v629
    %v842 = vpack.c.b16 %v632, %v631
    %v843 = vpack.c.b16 %v634, %v633
    %v844 = vpack.c.b16 %v636, %v635
    %v845 = vpack.c.b16 %v638, %v637
    %v846 = vpack.c.b16 %v640, %v639
    %v847 = vpack.c.b16 %v642, %v641
    %v848 = vpack.c.b16 %v644, %v643
    %v849 = vpack.c.b16 %v646, %v645
    %v850 = vpack.c.b16 %v648, %v647
    %v851 = vpack.c.b16 %v650, %v649
    %v852 = vpack.c.b16 %v652, %v651
    %v853 = vpack.c.b16 %v654, %v653
    %v854 = vpack.c.b16 %v656, %v655
    %v855 = vpack.c.b16 %v658, %v657
    %v856 = vpack.c.b16 %v660, %v659
    %v857 = vpack.c.b16 %v662, %v661
    %v858 = vpack.c.b16 %v664, %v663
    %v859 = vpack.c.b16 %v666, %v665
    %v860 = vpack.c.b16 %v668, %v667
    %v861 = vpack.c.b16 %v670, %v669
    %v862 = vpack.c.b16 %v672, %v671
    %v863 = vpack.c.b16 %v674, %v673
    %v864 = vpack.c.b16 %v676, %v675
    %v865 = vpack.c.b16 %v678, %v677
    %v866 = vpack.c.b16 %v680, %v679
    %v867 = vpack.c.b16 %v682, %v681
    %v868 = vpack.c.b16 %v684, %v683
    %v869 = vpack.c.b16 %v686, %v685
    %v870 = vpack.c.b16 %v688, %v687
    %v871 = vpack.c.b16 %v690, %v689
    %v872 = vpack.c.b16 %v692, %v691
    %v873 = vpack.c.b16 %v694, %v693
    %v874 = vpack.c.b16 %v696, %v695
    %v875 = vpack.c.b16 %v698, %v697
    %v876 = vpack.c.b16 %v700, %v699
    %v877 = vpack.c.b16 %v702, %v701
    %v878 = vpack.c.b16 %v704, %v703
    %v879 = vpack.c.b16 %v706, %v705
    %v880 = vpack.c.b16 %v708, %v707
    %v881 = vpack.c.b16 %v710, %v709
    %v882 = vpack.c.b16 %v712, %v711
    %v883 = vpack.c.b16 %v714, %v713
    %v884 = vpack.c.b16 %v716, %v715
    %v885 = vpack.c.b16 %v718, %v717
    %v886 = vpack.c.b16 %v720, %v719
    %v887 = vpack.c.b16 %v722, %v721
    %v888 = vpack.c.b16 %v724, %v723
    %v889 = vpack.c.b16 %v726, %v725
    %v890 = vpack.c.b16 %v728, %v727
    %v891 = vpack.c.b16 %v730, %v729
    %v892 = vpack.c.b16 %v732, %v731
    %v893 = vpack.c.b16 %v734, %v733
    %v894 = vpack.c.b16 %v736, %v735
    %v895 = vpack.c.b16 %v738, %v737
    %v896 = vpack.c.b16 %v740, %v739
    %v897 = vpack.c.b16 %v742, %v741
    %v898 = vpack.c.b16 %v744, %v743
    %v899 = vpack.c.b16 %v746, %v745
    %v900 = vpack.c.b16 %v748, %v747
    %v901 = vpack.c.b16 %v750, %v749
    %v902 = vpack.c.b16 %v752, %v751
    %v903 = vpack.c.b16 %v754, %v753
    %v904 = vpack.c.b16 %v756, %v755
    %v905 = vpack.c.b16 %v758, %v757
    %v906 = vpack.c.b16 %v760, %v759
    %v907 = vpack.c.b16 %v762, %v761
    %v908 = vpack.c.b16 %v764, %v763
    %v909 = vpack.c.b16 %v766, %v765
    %v910 = vpack.c.b16 %v768, %v767
    %v911 = vpack.c.b16 %v770, %v769
    %v912 = vpack.c.b16 %v772, %v771
    %v913 = vpack.c.b16 %v774, %v773
    %v914 = vpack.c.b16 %v776, %v775
    %v915 = vpack.c.b16 %v778, %v777
    %v916 = vpack.c.b16 %v780, %v779
    %v917 = vpack.c.b16 %v782, %v781
    %v918 = vpack.c.b16 %v784, %v783
    %v919 = vpack.c.b16 %v786, %v785
    %v920 = vpack.c.b16 %v788, %v787
    %v921 = vpack.c.b16 %v790, %v789
    %v922 = vpack.c.b16 %v792, %v791
    %v923 = vpack.c.b16 %v794, %v793
    %v924 = vpack.c.b16 %v796, %v795
    %v929 = vunpack.c.l.b16 %v281
    %v930 = vunpack.c.l.b16 %v282
    %v931 = vunpack.c.l.b16 %v283
    %v932 = vunpack.c.l.b16 %v284
    %v933 = vpack.c.b16 %v930, %v929
    %v934 = vpack.c.b16 %v932, %v931
    %vm937 = vcmask 261120
    %v939 = vsel %vm937, %v797, 0
    %v942 = vsel %vm937, %v798, 0
    %v945 = vsel %vm937, %v799, 0
    %v948 = vsel %vm937, %v800, 0
    %v951 = vsel %vm937, %v801, 0
    %v954 = vsel %vm937, %v802, 0
    %v957 = vsel %vm937, %v803, 0
    %v960 = vsel %vm937, %v804, 0
    %v963 = vsel %vm937, %v805, 0
    %v966 = vsel %vm937, %v806, 0
    %v969 = vsel %vm937, %v807, 0
    %v972 = vsel %vm937, %v808, 0
    %v975 = vsel %vm937, %v809, 0
    %v978 = vsel %vm937, %v810, 0
    %v981 = vsel %vm937, %v811, 0
    %v984 = vsel %vm937, %v812, 0
    %v987 = vsel %vm937, %v813, 0
    %v990 = vsel %vm937, %v814, 0
    %v993 = vsel %vm937, %v815, 0
    %v996 = vsel %vm937, %v816, 0
    %v999 = vsel %vm937, %v817, 0
    %v1002 = vsel %vm937, %v818, 0
    %v1005 = vsel %vm937, %v819, 0
    %v1008 = vsel %vm937, %v820, 0
    %v1011 = vsel %vm937, %v821, 0
    %v1014 = vsel %vm937, %v822, 0
    %v1017 = vsel %vm937, %v823, 0
    %v1020 = vsel %vm937, %v824, 0
    %v1023 = vsel %vm937, %v825, 0
    %v1026 = vsel %vm937, %v826, 0
    %v1029 = vsel %vm937, %v827, 0
    %v1032 = vsel %vm937, %v828, 0
    %v1035 = vsel %vm937, %v829, 0
    %v1038 = vsel %vm937, %v830, 0
    %v1041 = vsel %vm937, %v831, 0
    %v1044 = vsel %vm937, %v832, 0
    %v1047 = vsel %vm937, %v833, 0
    %v1050 = vsel %vm937, %v834, 0
    %v1053 = vsel %vm937, %v835, 0
    %v1056 = vsel %vm937, %v836, 0
    %v1059 = vsel %vm937, %v837, 0
    %v1062 = vsel %vm937, %v838, 0
    %v1065 = vsel %vm937, %v839, 0
    %v1068 = vsel %vm937, %v840, 0
    %v1071 = vsel %vm937, %v841, 0
    %v1074 = vsel %vm937, %v842, 0
    %v1077 = vsel %vm937, %v843, 0
    %v1080 = vsel %vm937, %v844, 0
    %v1083 = vsel %vm937, %v845, 0
    %v1086 = vsel %vm937, %v846, 0
    %v1089 = vsel %vm937, %v847, 0
    %v1092 = vsel %vm937, %v848, 0
    %v1095 = vsel %vm937, %v849, 0
    %v1098 = vsel %vm937, %v850, 0
    %v1101 = vsel %vm937, %v851, 0
    %v1104 = vsel %vm937, %v852, 0
    %v1107 = vsel %vm937, %v853, 0
    %v1110 = vsel %vm937, %v854, 0
    %v1113 = vsel %vm937, %v855, 0
    %v1116 = vsel %vm937, %v856, 0
    %v1119 = vsel %vm937, %v857, 0
    %v1122 = vsel %vm937, %v858, 0
    %v1125 = vsel %vm937, %v859, 0
    %v1128 = vsel %vm937, %v860, 0
    %v1131 = vsel %vm937, %v861, 0
    %v1134 = vsel %vm937, %v862, 0
    %v1137 = vsel %vm937, %v863, 0
    %v1140 = vsel %vm937, %v864, 0
    %v1143 = vsel %vm937, %v865, 0
    %v1146 = vsel %vm937, %v866, 0
    %v1149 = vsel %vm937, %v867, 0
    %v1152 = vsel %vm937, %v868, 0
    %v1155 = vsel %vm937, %v869, 0
    %v1158 = vsel %vm937, %v870, 0
    %v1161 = vsel %vm937, %v871, 0
    %v1164 = vsel %vm937, %v872, 0
    %v1167 = vsel %vm937, %v873, 0
    %v1170 = vsel %vm937, %v874, 0
    %v1173 = vsel %vm937, %v875, 0
    %v1176 = vsel %vm937, %v876, 0
    %v1179 = vsel %vm937, %v877, 0
    %v1182 = vsel %vm937, %v878, 0
    %v1185 = vsel %vm937, %v879, 0
    %v1188 = vsel %vm937, %v880, 0
    %v1191 = vsel %vm937, %v881, 0
    %v1194 = vsel %vm937, %v882, 0
    %v1197 = vsel %vm937, %v883, 0
    %v1200 = vsel %vm937, %v884, 0
    %v1203 = vsel %vm937, %v885, 0
    %v1206 = vsel %vm937, %v886, 0
    %v1209 = vsel %vm937, %v887, 0
    %v1212 = vsel %vm937, %v888, 0
    %v1215 = vsel %vm937, %v889, 0
    %v1218 = vsel %vm937, %v890, 0
    %v1221 = vsel %vm937, %v891, 0
    %v1224 = vsel %vm937, %v892, 0
    %v1227 = vsel %vm937, %v893, 0
    %v1230 = vsel %vm937, %v894, 0
    %v1233 = vsel %vm937, %v895, 0
    %v1236 = vsel %vm937, %v896, 0
    %v1239 = vsel %vm937, %v897, 0
    %v1242 = vsel %vm937, %v898, 0
    %v1245 = vsel %vm937, %v899, 0
    %v1248 = vsel %vm937, %v900, 0
    %v1251 = vsel %vm937, %v901, 0
    %v1254 = vsel %vm937, %v902, 0
    %v1257 = vsel %vm937, %v903, 0
    %v1260 = vsel %vm937, %v904, 0
    %v1263 = vsel %vm937, %v905, 0
    %v1266 = vsel %vm937, %v906, 0
    %v1269 = vsel %vm937, %v907, 0
    %v1272 = vsel %vm937, %v908, 0
    %v1275 = vsel %vm937, %v909, 0
    %v1278 = vsel %vm937, %v910, 0
    %v1281 = vsel %vm937, %v911, 0
    %v1284 = vsel %vm937, %v912, 0
    %v1287 = vsel %vm937, %v913, 0
    %v1290 = vsel %vm937, %v914, 0
    %v1293 = vsel %vm937, %v915, 0
    %v1296 = vsel %vm937, %v916, 0
    %v1299 = vsel %vm937, %v917, 0
    %v1302 = vsel %vm937, %v918, 0
    %v1305 = vsel %vm937, %v919, 0
    %v1308 = vsel %vm937, %v920, 0
    %v1311 = vsel %vm937, %v921, 0
    %v1314 = vsel %vm937, %v922, 0
    %v1317 = vsel %vm937, %v923, 0
    %v1320 = vsel %vm937, %v924, 0
    %1322 = vmatprep.subr.bf16.mxu0 0
    %1323 = vmatpush1.bf16.msra.mxu0 %v933
    %1324 = vmatprep.subr.bf16.mxu0 0
    %1325 = vmatpush1.bf16.msra.mxu0 %v934
    %1326 = vmatprep.subr.bf16.mxu0 0
    %1327 = vmatpush1.bf16.msra.mxu0 0
    %1328 = vmatprep.subr.bf16.mxu0 0
    %1329 = vmatpush1.bf16.msra.mxu0 0
    %1330 = vmatprep.subr.bf16.mxu0 0
    %1331 = vmatpush1.bf16.msra.mxu0 0
    %1332 = vmatprep.subr.bf16.mxu0 0
    %1333 = vmatpush1.bf16.msra.mxu0 0
    %1334 = vmatprep.subr.bf16.mxu0 0
    %1335 = vmatpush1.bf16.msra.mxu0 0
    %1336 = vmatprep.subr.bf16.mxu0 0
    %1337 = vmatpush1.bf16.msra.mxu0 0
    %1338 = vmatprep.subr.bf16.mxu0 0
    %1339 = vmatpush1.bf16.msra.mxu0 0
    %1340 = vmatprep.subr.bf16.mxu0 0
    %1341 = vmatpush1.bf16.msra.mxu0 0
    %1342 = vmatprep.subr.bf16.mxu0 0
    %1343 = vmatpush1.bf16.msra.mxu0 0
    %1344 = vmatprep.subr.bf16.mxu0 0
    %1345 = vmatpush1.bf16.msra.mxu0 0
    %1346 = vmatprep.subr.bf16.mxu0 0
    %1347 = vmatpush1.bf16.msra.mxu0 0
    %1348 = vmatprep.subr.bf16.mxu0 0
    %1349 = vmatpush1.bf16.msra.mxu0 0
    %1350 = vmatprep.subr.bf16.mxu0 0
    %1351 = vmatpush1.bf16.msra.mxu0 0
    %1352 = vmatprep.subr.bf16.mxu0 0
    %1353 = vmatpush1.bf16.msra.mxu0 0
    %1354 = vmatprep.mubr.bf16.mxu0 0
    %1355 = vmatmul.mubr.bf16.gmra.mrb[0].mxu0 %v939
    %v1356 = vpop.f32.mrb[0].mxu0
    %v1357 = vadd.f32 0.0, %v1356
    %v1358 = vpop.f32.mrb[0].mxu0
    %v1359 = vpop.f32.mrb[0].mxu0
    %v1360 = vadd.f32 0.0, %v1359
    %v1361 = vpop.f32.mrb[0].mxu0
    %1362 = vmatprep.mubr.bf16.mxu0 0
    %1363 = vmatmul.mubr.bf16.gmra.mrb[0].mxu0 %v942
    %v1364 = vpop.f32.mrb[0].mxu0
    %v1365 = vadd.f32 0.0, %v1364
    %v1366 = vpop.f32.mrb[0].mxu0
    %v1367 = vpop.f32.mrb[0].mxu0
    %v1368 = vadd.f32 0.0, %v1367
    %v1369 = vpop.f32.mrb[0].mxu0
    %1370 = vmatprep.mubr.bf16.mxu0 0
    %1371 = vmatmul.mubr.bf16.gmra.mrb[0].mxu0 %v945
    %v1372 = vpop.f32.mrb[0].mxu0
    %v1373 = vadd.f32 0.0, %v1372
    %v1374 = vpop.f32.mrb[0].mxu0
    %v1375 = vpop.f32.mrb[0].mxu0
    %v1376 = vadd.f32 0.0, %v1375
    %v1377 = vpop.f32.mrb[0].mxu0
    %1378 = vmatprep.mubr.bf16.mxu0 0
    %1379 = vmatmul.mubr.bf16.gmra.mrb[0].mxu0 %v948
    %v1380 = vpop.f32.mrb[0].mxu0
    %v1381 = vadd.f32 0.0, %v1380
    %v1382 = vpop.f32.mrb[0].mxu0
    %v1383 = vpop.f32.mrb[0].mxu0
    %v1384 = vadd.f32 0.0, %v1383
    %v1385 = vpop.f32.mrb[0].mxu0
    %1386 = vmatprep.mubr.bf16.mxu0 0
    %1387 = vmatmul.mubr.bf16.gmra.mrb[0].mxu0 %v951
    %v1388 = vpop.f32.mrb[0].mxu0
    %v1389 = vadd.f32 0.0, %v1388
    %v1390 = vpop.f32.mrb[0].mxu0
    %v1391 = vpop.f32.mrb[0].mxu0
    %v1392 = vadd.f32 0.0, %v1391
    %v1393 = vpop.f32.mrb[0].mxu0
    %1394 = vmatprep.mubr.bf16.mxu0 0
    %1395 = vmatmul.mubr.bf16.gmra.mrb[0].mxu0 %v954
    %v1396 = vpop.f32.mrb[0].mxu0
    %v1397 = vadd.f32 0.0, %v1396
    %v1398 = vpop.f32.mrb[0].mxu0
    %v1399 = vpop.f32.mrb[0].mxu0
    %v1400 = vadd.f32 0.0, %v1399
    %v1401 = vpop.f32.mrb[0].mxu0
    %1402 = vmatprep.mubr.bf16.mxu0 0
    %1403 = vmatmul.mubr.bf16.gmra.mrb[0].mxu0 %v957
    %v1404 = vpop.f32.mrb[0].mxu0
    %v1405 = vadd.f32 0.0, %v1404
    %v1406 = vpop.f32.mrb[0].mxu0
    %v1407 = vpop.f32.mrb[0].mxu0
    %v1408 = vadd.f32 0.0, %v1407
    %v1409 = vpop.f32.mrb[0].mxu0
    %1410 = vmatprep.mubr.bf16.mxu0 0
    %1411 = vmatmul.mubr.bf16.gmra.mrb[0].mxu0 %v960
    %v1412 = vpop.f32.mrb[0].mxu0
    %v1413 = vadd.f32 0.0, %v1412
    %v1414 = vpop.f32.mrb[0].mxu0
    %v1415 = vpop.f32.mrb[0].mxu0
    %v1416 = vadd.f32 0.0, %v1415
    %v1417 = vpop.f32.mrb[0].mxu0
    %1418 = vmatprep.mubr.bf16.mxu0 0
    %1419 = vmatmul.mubr.bf16.gmra.mrb[0].mxu0 %v963
    %v1420 = vpop.f32.mrb[0].mxu0
    %v1421 = vadd.f32 0.0, %v1420
    %v1422 = vpop.f32.mrb[0].mxu0
    %v1423 = vpop.f32.mrb[0].mxu0
    %v1424 = vadd.f32 0.0, %v1423
    %v1425 = vpop.f32.mrb[0].mxu0
    %1426 = vmatprep.mubr.bf16.mxu0 0
    %1427 = vmatmul.mubr.bf16.gmra.mrb[0].mxu0 %v966
    %v1428 = vpop.f32.mrb[0].mxu0
    %v1429 = vadd.f32 0.0, %v1428
    %v1430 = vpop.f32.mrb[0].mxu0
    %v1431 = vpop.f32.mrb[0].mxu0
    %v1432 = vadd.f32 0.0, %v1431
    %v1433 = vpop.f32.mrb[0].mxu0
    %1434 = vmatprep.mubr.bf16.mxu0 0
    %1435 = vmatmul.mubr.bf16.gmra.mrb[0].mxu0 %v969
    %v1436 = vpop.f32.mrb[0].mxu0
    %v1437 = vadd.f32 0.0, %v1436
    %v1438 = vpop.f32.mrb[0].mxu0
    %v1439 = vpop.f32.mrb[0].mxu0
    %v1440 = vadd.f32 0.0, %v1439
    %v1441 = vpop.f32.mrb[0].mxu0
    %1442 = vmatprep.mubr.bf16.mxu0 0
    %1443 = vmatmul.mubr.bf16.gmra.mrb[0].mxu0 %v972
    %v1444 = vpop.f32.mrb[0].mxu0
    %v1445 = vadd.f32 0.0, %v1444
    %v1446 = vpop.f32.mrb[0].mxu0
    %v1447 = vpop.f32.mrb[0].mxu0
    %v1448 = vadd.f32 0.0, %v1447
    %v1449 = vpop.f32.mrb[0].mxu0
    %1450 = vmatprep.mubr.bf16.mxu0 0
    %1451 = vmatmul.mubr.bf16.gmra.mrb[0].mxu0 %v975
    %v1452 = vpop.f32.mrb[0].mxu0
    %v1453 = vadd.f32 0.0, %v1452
    %v1454 = vpop.f32.mrb[0].mxu0
    %v1455 = vpop.f32.mrb[0].mxu0
    %v1456 = vadd.f32 0.0, %v1455
    %v1457 = vpop.f32.mrb[0].mxu0
    %1458 = vmatprep.mubr.bf16.mxu0 0
    %1459 = vmatmul.mubr.bf16.gmra.mrb[0].mxu0 %v978
    %v1460 = vpop.f32.mrb[0].mxu0
    %v1461 = vadd.f32 0.0, %v1460
    %v1462 = vpop.f32.mrb[0].mxu0
    %v1463 = vpop.f32.mrb[0].mxu0
    %v1464 = vadd.f32 0.0, %v1463
    %v1465 = vpop.f32.mrb[0].mxu0
    %1466 = vmatprep.mubr.bf16.mxu0 0
    %1467 = vmatmul.mubr.bf16.gmra.mrb[0].mxu0 %v981
    %v1468 = vpop.f32.mrb[0].mxu0
    %v1469 = vadd.f32 0.0, %v1468
    %v1470 = vpop.f32.mrb[0].mxu0
    %v1471 = vpop.f32.mrb[0].mxu0
    %v1472 = vadd.f32 0.0, %v1471
    %v1473 = vpop.f32.mrb[0].mxu0
    %1474 = vmatprep.mubr.bf16.mxu0 0
    %1475 = vmatmul.mubr.bf16.gmra.mrb[0].mxu0 %v984
    %v1476 = vpop.f32.mrb[0].mxu0
    %v1477 = vadd.f32 0.0, %v1476
    %v1478 = vpop.f32.mrb[0].mxu0
    %v1479 = vpop.f32.mrb[0].mxu0
    %v1480 = vadd.f32 0.0, %v1479
    %v1481 = vpop.f32.mrb[0].mxu0
    %1482 = vmatprep.mubr.bf16.mxu0 0
    %1483 = vmatmul.mubr.bf16.gmra.mrb[0].mxu0 %v987
    %v1484 = vpop.f32.mrb[0].mxu0
    %v1485 = vadd.f32 0.0, %v1484
    %v1486 = vpop.f32.mrb[0].mxu0
    %v1487 = vpop.f32.mrb[0].mxu0
    %v1488 = vadd.f32 0.0, %v1487
    %v1489 = vpop.f32.mrb[0].mxu0
    %1490 = vmatprep.mubr.bf16.mxu0 0
    %1491 = vmatmul.mubr.bf16.gmra.mrb[0].mxu0 %v990
    %v1492 = vpop.f32.mrb[0].mxu0
    %v1493 = vadd.f32 0.0, %v1492
    %v1494 = vpop.f32.mrb[0].mxu0
    %v1495 = vpop.f32.mrb[0].mxu0
    %v1496 = vadd.f32 0.0, %v1495
    %v1497 = vpop.f32.mrb[0].mxu0
    %1498 = vmatprep.mubr.bf16.mxu0 0
    %1499 = vmatmul.mubr.bf16.gmra.mrb[0].mxu0 %v993
    %v1500 = vpop.f32.mrb[0].mxu0
    %v1501 = vadd.f32 0.0, %v1500
    %v1502 = vpop.f32.mrb[0].mxu0
    %v1503 = vpop.f32.mrb[0].mxu0
    %v1504 = vadd.f32 0.0, %v1503
    %v1505 = vpop.f32.mrb[0].mxu0
    %1506 = vmatprep.mubr.bf16.mxu0 0
    %1507 = vmatmul.mubr.bf16.gmra.mrb[0].mxu0 %v996
    %v1508 = vpop.f32.mrb[0].mxu0
    %v1509 = vadd.f32 0.0, %v1508
    %v1510 = vpop.f32.mrb[0].mxu0
    %v1511 = vpop.f32.mrb[0].mxu0
    %v1512 = vadd.f32 0.0, %v1511
    %v1513 = vpop.f32.mrb[0].mxu0
    %1514 = vmatprep.mubr.bf16.mxu0 0
    %1515 = vmatmul.mubr.bf16.gmra.mrb[0].mxu0 %v999
    %v1516 = vpop.f32.mrb[0].mxu0
    %v1517 = vadd.f32 0.0, %v1516
    %v1518 = vpop.f32.mrb[0].mxu0
    %v1519 = vpop.f32.mrb[0].mxu0
    %v1520 = vadd.f32 0.0, %v1519
    %v1521 = vpop.f32.mrb[0].mxu0
    %1522 = vmatprep.mubr.bf16.mxu0 0
    %1523 = vmatmul.mubr.bf16.gmra.mrb[0].mxu0 %v1002
    %v1524 = vpop.f32.mrb[0].mxu0
    %v1525 = vadd.f32 0.0, %v1524
    %v1526 = vpop.f32.mrb[0].mxu0
    %v1527 = vpop.f32.mrb[0].mxu0
    %v1528 = vadd.f32 0.0, %v1527
    %v1529 = vpop.f32.mrb[0].mxu0
    %1530 = vmatprep.mubr.bf16.mxu0 0
    %1531 = vmatmul.mubr.bf16.gmra.mrb[0].mxu0 %v1005
    %v1532 = vpop.f32.mrb[0].mxu0
    %v1533 = vadd.f32 0.0, %v1532
    %v1534 = vpop.f32.mrb[0].mxu0
    %v1535 = vpop.f32.mrb[0].mxu0
    %v1536 = vadd.f32 0.0, %v1535
    %v1537 = vpop.f32.mrb[0].mxu0
    %1538 = vmatprep.mubr.bf16.mxu0 0
    %1539 = vmatmul.mubr.bf16.gmra.mrb[0].mxu0 %v1008
    %v1540 = vpop.f32.mrb[0].mxu0
    %v1541 = vadd.f32 0.0, %v1540
    %v1542 = vpop.f32.mrb[0].mxu0
    %v1543 = vpop.f32.mrb[0].mxu0
    %v1544 = vadd.f32 0.0, %v1543
    %v1545 = vpop.f32.mrb[0].mxu0
    %1546 = vmatprep.mubr.bf16.mxu0 0
    %1547 = vmatmul.mubr.bf16.gmra.mrb[0].mxu0 %v1011
    %v1548 = vpop.f32.mrb[0].mxu0
    %v1549 = vadd.f32 0.0, %v1548
    %v1550 = vpop.f32.mrb[0].mxu0
    %v1551 = vpop.f32.mrb[0].mxu0
    %v1552 = vadd.f32 0.0, %v1551
    %v1553 = vpop.f32.mrb[0].mxu0
    %1554 = vmatprep.mubr.bf16.mxu0 0
    %1555 = vmatmul.mubr.bf16.gmra.mrb[0].mxu0 %v1014
    %v1556 = vpop.f32.mrb[0].mxu0
    %v1557 = vadd.f32 0.0, %v1556
    %v1558 = vpop.f32.mrb[0].mxu0
    %v1559 = vpop.f32.mrb[0].mxu0
    %v1560 = vadd.f32 0.0, %v1559
    %v1561 = vpop.f32.mrb[0].mxu0
    %1562 = vmatprep.mubr.bf16.mxu0 0
    %1563 = vmatmul.mubr.bf16.gmra.mrb[0].mxu0 %v1017
    %v1564 = vpop.f32.mrb[0].mxu0
    %v1565 = vadd.f32 0.0, %v1564
    %v1566 = vpop.f32.mrb[0].mxu0
    %v1567 = vpop.f32.mrb[0].mxu0
    %v1568 = vadd.f32 0.0, %v1567
    %v1569 = vpop.f32.mrb[0].mxu0
    %1570 = vmatprep.mubr.bf16.mxu0 0
    %1571 = vmatmul.mubr.bf16.gmra.mrb[0].mxu0 %v1020
    %v1572 = vpop.f32.mrb[0].mxu0
    %v1573 = vadd.f32 0.0, %v1572
    %v1574 = vpop.f32.mrb[0].mxu0
    %v1575 = vpop.f32.mrb[0].mxu0
    %v1576 = vadd.f32 0.0, %v1575
    %v1577 = vpop.f32.mrb[0].mxu0
    %1578 = vmatprep.mubr.bf16.mxu0 0
    %1579 = vmatmul.mubr.bf16.gmra.mrb[0].mxu0 %v1023
    %v1580 = vpop.f32.mrb[0].mxu0
    %v1581 = vadd.f32 0.0, %v1580
    %v1582 = vpop.f32.mrb[0].mxu0
    %v1583 = vpop.f32.mrb[0].mxu0
    %v1584 = vadd.f32 0.0, %v1583
    %v1585 = vpop.f32.mrb[0].mxu0
    %1586 = vmatprep.mubr.bf16.mxu0 0
    %1587 = vmatmul.mubr.bf16.gmra.mrb[0].mxu0 %v1026
    %v1588 = vpop.f32.mrb[0].mxu0
    %v1589 = vadd.f32 0.0, %v1588
    %v1590 = vpop.f32.mrb[0].mxu0
    %v1591 = vpop.f32.mrb[0].mxu0
    %v1592 = vadd.f32 0.0, %v1591
    %v1593 = vpop.f32.mrb[0].mxu0
    %1594 = vmatprep.mubr.bf16.mxu0 0
    %1595 = vmatmul.mubr.bf16.gmra.mrb[0].mxu0 %v1029
    %v1596 = vpop.f32.mrb[0].mxu0
    %v1597 = vadd.f32 0.0, %v1596
    %v1598 = vpop.f32.mrb[0].mxu0
    %v1599 = vpop.f32.mrb[0].mxu0
    %v1600 = vadd.f32 0.0, %v1599
    %v1601 = vpop.f32.mrb[0].mxu0
    %1602 = vmatprep.mubr.bf16.mxu0 0
    %1603 = vmatmul.mubr.bf16.gmra.mrb[0].mxu0 %v1032
    %v1604 = vpop.f32.mrb[0].mxu0
    %v1605 = vadd.f32 0.0, %v1604
    %v1606 = vpop.f32.mrb[0].mxu0
    %v1607 = vpop.f32.mrb[0].mxu0
    %v1608 = vadd.f32 0.0, %v1607
    %v1609 = vpop.f32.mrb[0].mxu0
    %1610 = vmatprep.mubr.bf16.mxu0 0
    %1611 = vmatmul.mubr.bf16.gmra.mrb[0].mxu0 %v1035
    %v1612 = vpop.f32.mrb[0].mxu0
    %v1613 = vadd.f32 0.0, %v1612
    %v1614 = vpop.f32.mrb[0].mxu0
    %v1615 = vpop.f32.mrb[0].mxu0
    %v1616 = vadd.f32 0.0, %v1615
    %v1617 = vpop.f32.mrb[0].mxu0
    %1618 = vmatprep.mubr.bf16.mxu0 0
    %1619 = vmatmul.mubr.bf16.gmra.mrb[0].mxu0 %v1038
    %v1620 = vpop.f32.mrb[0].mxu0
    %v1621 = vadd.f32 0.0, %v1620
    %v1622 = vpop.f32.mrb[0].mxu0
    %v1623 = vpop.f32.mrb[0].mxu0
    %v1624 = vadd.f32 0.0, %v1623
    %v1625 = vpop.f32.mrb[0].mxu0
    %1626 = vmatprep.mubr.bf16.mxu0 0
    %1627 = vmatmul.mubr.bf16.gmra.mrb[0].mxu0 %v1041
    %v1628 = vpop.f32.mrb[0].mxu0
    %v1629 = vadd.f32 0.0, %v1628
    %v1630 = vpop.f32.mrb[0].mxu0
    %v1631 = vpop.f32.mrb[0].mxu0
    %v1632 = vadd.f32 0.0, %v1631
    %v1633 = vpop.f32.mrb[0].mxu0
    %1634 = vmatprep.mubr.bf16.mxu0 0
    %1635 = vmatmul.mubr.bf16.gmra.mrb[0].mxu0 %v1044
    %v1636 = vpop.f32.mrb[0].mxu0
    %v1637 = vadd.f32 0.0, %v1636
    %v1638 = vpop.f32.mrb[0].mxu0
    %v1639 = vpop.f32.mrb[0].mxu0
    %v1640 = vadd.f32 0.0, %v1639
    %v1641 = vpop.f32.mrb[0].mxu0
    %1642 = vmatprep.mubr.bf16.mxu0 0
    %1643 = vmatmul.mubr.bf16.gmra.mrb[0].mxu0 %v1047
    %v1644 = vpop.f32.mrb[0].mxu0
    %v1645 = vadd.f32 0.0, %v1644
    %v1646 = vpop.f32.mrb[0].mxu0
    %v1647 = vpop.f32.mrb[0].mxu0
    %v1648 = vadd.f32 0.0, %v1647
    %v1649 = vpop.f32.mrb[0].mxu0
    %1650 = vmatprep.mubr.bf16.mxu0 0
    %1651 = vmatmul.mubr.bf16.gmra.mrb[0].mxu0 %v1050
    %v1652 = vpop.f32.mrb[0].mxu0
    %v1653 = vadd.f32 0.0, %v1652
    %v1654 = vpop.f32.mrb[0].mxu0
    %v1655 = vpop.f32.mrb[0].mxu0
    %v1656 = vadd.f32 0.0, %v1655
    %v1657 = vpop.f32.mrb[0].mxu0
    %1658 = vmatprep.mubr.bf16.mxu0 0
    %1659 = vmatmul.mubr.bf16.gmra.mrb[0].mxu0 %v1053
    %v1660 = vpop.f32.mrb[0].mxu0
    %v1661 = vadd.f32 0.0, %v1660
    %v1662 = vpop.f32.mrb[0].mxu0
    %v1663 = vpop.f32.mrb[0].mxu0
    %v1664 = vadd.f32 0.0, %v1663
    %v1665 = vpop.f32.mrb[0].mxu0
    %1666 = vmatprep.mubr.bf16.mxu0 0
    %1667 = vmatmul.mubr.bf16.gmra.mrb[0].mxu0 %v1056
    %v1668 = vpop.f32.mrb[0].mxu0
    %v1669 = vadd.f32 0.0, %v1668
    %v1670 = vpop.f32.mrb[0].mxu0
    %v1671 = vpop.f32.mrb[0].mxu0
    %v1672 = vadd.f32 0.0, %v1671
    %v1673 = vpop.f32.mrb[0].mxu0
    %1674 = vmatprep.mubr.bf16.mxu0 0
    %1675 = vmatmul.mubr.bf16.gmra.mrb[0].mxu0 %v1059
    %v1676 = vpop.f32.mrb[0].mxu0
    %v1677 = vadd.f32 0.0, %v1676
    %v1678 = vpop.f32.mrb[0].mxu0
    %v1679 = vpop.f32.mrb[0].mxu0
    %v1680 = vadd.f32 0.0, %v1679
    %v1681 = vpop.f32.mrb[0].mxu0
    %1682 = vmatprep.mubr.bf16.mxu0 0
    %1683 = vmatmul.mubr.bf16.gmra.mrb[0].mxu0 %v1062
    %v1684 = vpop.f32.mrb[0].mxu0
    %v1685 = vadd.f32 0.0, %v1684
    %v1686 = vpop.f32.mrb[0].mxu0
    %v1687 = vpop.f32.mrb[0].mxu0
    %v1688 = vadd.f32 0.0, %v1687
    %v1689 = vpop.f32.mrb[0].mxu0
    %1690 = vmatprep.mubr.bf16.mxu0 0
    %1691 = vmatmul.mubr.bf16.gmra.mrb[0].mxu0 %v1065
    %v1692 = vpop.f32.mrb[0].mxu0
    %v1693 = vadd.f32 0.0, %v1692
    %v1694 = vpop.f32.mrb[0].mxu0
    %v1695 = vpop.f32.mrb[0].mxu0
    %v1696 = vadd.f32 0.0, %v1695
    %v1697 = vpop.f32.mrb[0].mxu0
    %1698 = vmatprep.mubr.bf16.mxu0 0
    %1699 = vmatmul.mubr.bf16.gmra.mrb[0].mxu0 %v1068
    %v1700 = vpop.f32.mrb[0].mxu0
    %v1701 = vadd.f32 0.0, %v1700
    %v1702 = vpop.f32.mrb[0].mxu0
    %v1703 = vpop.f32.mrb[0].mxu0
    %v1704 = vadd.f32 0.0, %v1703
    %v1705 = vpop.f32.mrb[0].mxu0
    %1706 = vmatprep.mubr.bf16.mxu0 0
    %1707 = vmatmul.mubr.bf16.gmra.mrb[0].mxu0 %v1071
    %v1708 = vpop.f32.mrb[0].mxu0
    %v1709 = vadd.f32 0.0, %v1708
    %v1710 = vpop.f32.mrb[0].mxu0
    %v1711 = vpop.f32.mrb[0].mxu0
    %v1712 = vadd.f32 0.0, %v1711
    %v1713 = vpop.f32.mrb[0].mxu0
    %1714 = vmatprep.mubr.bf16.mxu0 0
    %1715 = vmatmul.mubr.bf16.gmra.mrb[0].mxu0 %v1074
    %v1716 = vpop.f32.mrb[0].mxu0
    %v1717 = vadd.f32 0.0, %v1716
    %v1718 = vpop.f32.mrb[0].mxu0
    %v1719 = vpop.f32.mrb[0].mxu0
    %v1720 = vadd.f32 0.0, %v1719
    %v1721 = vpop.f32.mrb[0].mxu0
    %1722 = vmatprep.mubr.bf16.mxu0 0
    %1723 = vmatmul.mubr.bf16.gmra.mrb[0].mxu0 %v1077
    %v1724 = vpop.f32.mrb[0].mxu0
    %v1725 = vadd.f32 0.0, %v1724
    %v1726 = vpop.f32.mrb[0].mxu0
    %v1727 = vpop.f32.mrb[0].mxu0
    %v1728 = vadd.f32 0.0, %v1727
    %v1729 = vpop.f32.mrb[0].mxu0
    %1730 = vmatprep.mubr.bf16.mxu0 0
    %1731 = vmatmul.mubr.bf16.gmra.mrb[0].mxu0 %v1080
    %v1732 = vpop.f32.mrb[0].mxu0
    %v1733 = vadd.f32 0.0, %v1732
    %v1734 = vpop.f32.mrb[0].mxu0
    %v1735 = vpop.f32.mrb[0].mxu0
    %v1736 = vadd.f32 0.0, %v1735
    %v1737 = vpop.f32.mrb[0].mxu0
    %1738 = vmatprep.mubr.bf16.mxu0 0
    %1739 = vmatmul.mubr.bf16.gmra.mrb[0].mxu0 %v1083
    %v1740 = vpop.f32.mrb[0].mxu0
    %v1741 = vadd.f32 0.0, %v1740
    %v1742 = vpop.f32.mrb[0].mxu0
    %v1743 = vpop.f32.mrb[0].mxu0
    %v1744 = vadd.f32 0.0, %v1743
    %v1745 = vpop.f32.mrb[0].mxu0
    %1746 = vmatprep.mubr.bf16.mxu0 0
    %1747 = vmatmul.mubr.bf16.gmra.mrb[0].mxu0 %v1086
    %v1748 = vpop.f32.mrb[0].mxu0
    %v1749 = vadd.f32 0.0, %v1748
    %v1750 = vpop.f32.mrb[0].mxu0
    %v1751 = vpop.f32.mrb[0].mxu0
    %v1752 = vadd.f32 0.0, %v1751
    %v1753 = vpop.f32.mrb[0].mxu0
    %1754 = vmatprep.mubr.bf16.mxu0 0
    %1755 = vmatmul.mubr.bf16.gmra.mrb[0].mxu0 %v1089
    %v1756 = vpop.f32.mrb[0].mxu0
    %v1757 = vadd.f32 0.0, %v1756
    %v1758 = vpop.f32.mrb[0].mxu0
    %v1759 = vpop.f32.mrb[0].mxu0
    %v1760 = vadd.f32 0.0, %v1759
    %v1761 = vpop.f32.mrb[0].mxu0
    %1762 = vmatprep.mubr.bf16.mxu0 0
    %1763 = vmatmul.mubr.bf16.gmra.mrb[0].mxu0 %v1092
    %v1764 = vpop.f32.mrb[0].mxu0
    %v1765 = vadd.f32 0.0, %v1764
    %v1766 = vpop.f32.mrb[0].mxu0
    %v1767 = vpop.f32.mrb[0].mxu0
    %v1768 = vadd.f32 0.0, %v1767
    %v1769 = vpop.f32.mrb[0].mxu0
    %1770 = vmatprep.mubr.bf16.mxu0 0
    %1771 = vmatmul.mubr.bf16.gmra.mrb[0].mxu0 %v1095
    %v1772 = vpop.f32.mrb[0].mxu0
    %v1773 = vadd.f32 0.0, %v1772
    %v1774 = vpop.f32.mrb[0].mxu0
    %v1775 = vpop.f32.mrb[0].mxu0
    %v1776 = vadd.f32 0.0, %v1775
    %v1777 = vpop.f32.mrb[0].mxu0
    %1778 = vmatprep.mubr.bf16.mxu0 0
    %1779 = vmatmul.mubr.bf16.gmra.mrb[0].mxu0 %v1098
    %v1780 = vpop.f32.mrb[0].mxu0
    %v1781 = vadd.f32 0.0, %v1780
    %v1782 = vpop.f32.mrb[0].mxu0
    %v1783 = vpop.f32.mrb[0].mxu0
    %v1784 = vadd.f32 0.0, %v1783
    %v1785 = vpop.f32.mrb[0].mxu0
    %1786 = vmatprep.mubr.bf16.mxu0 0
    %1787 = vmatmul.mubr.bf16.gmra.mrb[0].mxu0 %v1101
    %v1788 = vpop.f32.mrb[0].mxu0
    %v1789 = vadd.f32 0.0, %v1788
    %v1790 = vpop.f32.mrb[0].mxu0
    %v1791 = vpop.f32.mrb[0].mxu0
    %v1792 = vadd.f32 0.0, %v1791
    %v1793 = vpop.f32.mrb[0].mxu0
    %1794 = vmatprep.mubr.bf16.mxu0 0
    %1795 = vmatmul.mubr.bf16.gmra.mrb[0].mxu0 %v1104
    %v1796 = vpop.f32.mrb[0].mxu0
    %v1797 = vadd.f32 0.0, %v1796
    %v1798 = vpop.f32.mrb[0].mxu0
    %v1799 = vpop.f32.mrb[0].mxu0
    %v1800 = vadd.f32 0.0, %v1799
    %v1801 = vpop.f32.mrb[0].mxu0
    %1802 = vmatprep.mubr.bf16.mxu0 0
    %1803 = vmatmul.mubr.bf16.gmra.mrb[0].mxu0 %v1107
    %v1804 = vpop.f32.mrb[0].mxu0
    %v1805 = vadd.f32 0.0, %v1804
    %v1806 = vpop.f32.mrb[0].mxu0
    %v1807 = vpop.f32.mrb[0].mxu0
    %v1808 = vadd.f32 0.0, %v1807
    %v1809 = vpop.f32.mrb[0].mxu0
    %1810 = vmatprep.mubr.bf16.mxu0 0
    %1811 = vmatmul.mubr.bf16.gmra.mrb[0].mxu0 %v1110
    %v1812 = vpop.f32.mrb[0].mxu0
    %v1813 = vadd.f32 0.0, %v1812
    %v1814 = vpop.f32.mrb[0].mxu0
    %v1815 = vpop.f32.mrb[0].mxu0
    %v1816 = vadd.f32 0.0, %v1815
    %v1817 = vpop.f32.mrb[0].mxu0
    %1818 = vmatprep.mubr.bf16.mxu0 0
    %1819 = vmatmul.mubr.bf16.gmra.mrb[0].mxu0 %v1113
    %v1820 = vpop.f32.mrb[0].mxu0
    %v1821 = vadd.f32 0.0, %v1820
    %v1822 = vpop.f32.mrb[0].mxu0
    %v1823 = vpop.f32.mrb[0].mxu0
    %v1824 = vadd.f32 0.0, %v1823
    %v1825 = vpop.f32.mrb[0].mxu0
    %1826 = vmatprep.mubr.bf16.mxu0 0
    %1827 = vmatmul.mubr.bf16.gmra.mrb[0].mxu0 %v1116
    %v1828 = vpop.f32.mrb[0].mxu0
    %v1829 = vadd.f32 0.0, %v1828
    %v1830 = vpop.f32.mrb[0].mxu0
    %v1831 = vpop.f32.mrb[0].mxu0
    %v1832 = vadd.f32 0.0, %v1831
    %v1833 = vpop.f32.mrb[0].mxu0
    %1834 = vmatprep.mubr.bf16.mxu0 0
    %1835 = vmatmul.mubr.bf16.gmra.mrb[0].mxu0 %v1119
    %v1836 = vpop.f32.mrb[0].mxu0
    %v1837 = vadd.f32 0.0, %v1836
    %v1838 = vpop.f32.mrb[0].mxu0
    %v1839 = vpop.f32.mrb[0].mxu0
    %v1840 = vadd.f32 0.0, %v1839
    %v1841 = vpop.f32.mrb[0].mxu0
    %1842 = vmatprep.mubr.bf16.mxu0 0
    %1843 = vmatmul.mubr.bf16.gmra.mrb[0].mxu0 %v1122
    %v1844 = vpop.f32.mrb[0].mxu0
    %v1845 = vadd.f32 0.0, %v1844
    %v1846 = vpop.f32.mrb[0].mxu0
    %v1847 = vpop.f32.mrb[0].mxu0
    %v1848 = vadd.f32 0.0, %v1847
    %v1849 = vpop.f32.mrb[0].mxu0
    %1850 = vmatprep.mubr.bf16.mxu0 0
    %1851 = vmatmul.mubr.bf16.gmra.mrb[0].mxu0 %v1125
    %v1852 = vpop.f32.mrb[0].mxu0
    %v1853 = vadd.f32 0.0, %v1852
    %v1854 = vpop.f32.mrb[0].mxu0
    %v1855 = vpop.f32.mrb[0].mxu0
    %v1856 = vadd.f32 0.0, %v1855
    %v1857 = vpop.f32.mrb[0].mxu0
    %1858 = vmatprep.mubr.bf16.mxu0 0
    %1859 = vmatmul.mubr.bf16.gmra.mrb[0].mxu0 %v1128
    %v1860 = vpop.f32.mrb[0].mxu0
    %v1861 = vadd.f32 0.0, %v1860
    %v1862 = vpop.f32.mrb[0].mxu0
    %v1863 = vpop.f32.mrb[0].mxu0
    %v1864 = vadd.f32 0.0, %v1863
    %v1865 = vpop.f32.mrb[0].mxu0
    %1866 = vmatprep.mubr.bf16.mxu0 0
    %1867 = vmatmul.mubr.bf16.gmra.mrb[0].mxu0 %v1131
    %v1868 = vpop.f32.mrb[0].mxu0
    %v1869 = vadd.f32 0.0, %v1868
    %v1870 = vpop.f32.mrb[0].mxu0
    %v1871 = vpop.f32.mrb[0].mxu0
    %v1872 = vadd.f32 0.0, %v1871
    %v1873 = vpop.f32.mrb[0].mxu0
    %1874 = vmatprep.mubr.bf16.mxu0 0
    %1875 = vmatmul.mubr.bf16.gmra.mrb[0].mxu0 %v1134
    %v1876 = vpop.f32.mrb[0].mxu0
    %v1877 = vadd.f32 0.0, %v1876
    %v1878 = vpop.f32.mrb[0].mxu0
    %v1879 = vpop.f32.mrb[0].mxu0
    %v1880 = vadd.f32 0.0, %v1879
    %v1881 = vpop.f32.mrb[0].mxu0
    %1882 = vmatprep.mubr.bf16.mxu0 0
    %1883 = vmatmul.mubr.bf16.gmra.mrb[0].mxu0 %v1137
    %v1884 = vpop.f32.mrb[0].mxu0
    %v1885 = vadd.f32 0.0, %v1884
    %v1886 = vpop.f32.mrb[0].mxu0
    %v1887 = vpop.f32.mrb[0].mxu0
    %v1888 = vadd.f32 0.0, %v1887
    %v1889 = vpop.f32.mrb[0].mxu0
    %1890 = vmatprep.mubr.bf16.mxu0 0
    %1891 = vmatmul.mubr.bf16.gmra.mrb[0].mxu0 %v1140
    %v1892 = vpop.f32.mrb[0].mxu0
    %v1893 = vadd.f32 0.0, %v1892
    %v1894 = vpop.f32.mrb[0].mxu0
    %v1895 = vpop.f32.mrb[0].mxu0
    %v1896 = vadd.f32 0.0, %v1895
    %v1897 = vpop.f32.mrb[0].mxu0
    %1898 = vmatprep.mubr.bf16.mxu0 0
    %1899 = vmatmul.mubr.bf16.gmra.mrb[0].mxu0 %v1143
    %v1900 = vpop.f32.mrb[0].mxu0
    %v1901 = vadd.f32 0.0, %v1900
    %v1902 = vpop.f32.mrb[0].mxu0
    %v1903 = vpop.f32.mrb[0].mxu0
    %v1904 = vadd.f32 0.0, %v1903
    %v1905 = vpop.f32.mrb[0].mxu0
    %1906 = vmatprep.mubr.bf16.mxu0 0
    %1907 = vmatmul.mubr.bf16.gmra.mrb[0].mxu0 %v1146
    %v1908 = vpop.f32.mrb[0].mxu0
    %v1909 = vadd.f32 0.0, %v1908
    %v1910 = vpop.f32.mrb[0].mxu0
    %v1911 = vpop.f32.mrb[0].mxu0
    %v1912 = vadd.f32 0.0, %v1911
    %v1913 = vpop.f32.mrb[0].mxu0
    %1914 = vmatprep.mubr.bf16.mxu0 0
    %1915 = vmatmul.mubr.bf16.gmra.mrb[0].mxu0 %v1149
    %v1916 = vpop.f32.mrb[0].mxu0
    %v1917 = vadd.f32 0.0, %v1916
    %v1918 = vpop.f32.mrb[0].mxu0
    %v1919 = vpop.f32.mrb[0].mxu0
    %v1920 = vadd.f32 0.0, %v1919
    %v1921 = vpop.f32.mrb[0].mxu0
    %1922 = vmatprep.mubr.bf16.mxu0 0
    %1923 = vmatmul.mubr.bf16.gmra.mrb[0].mxu0 %v1152
    %v1924 = vpop.f32.mrb[0].mxu0
    %v1925 = vadd.f32 0.0, %v1924
    %v1926 = vpop.f32.mrb[0].mxu0
    %v1927 = vpop.f32.mrb[0].mxu0
    %v1928 = vadd.f32 0.0, %v1927
    %v1929 = vpop.f32.mrb[0].mxu0
    %1930 = vmatprep.mubr.bf16.mxu0 0
    %1931 = vmatmul.mubr.bf16.gmra.mrb[0].mxu0 %v1155
    %v1932 = vpop.f32.mrb[0].mxu0
    %v1933 = vadd.f32 0.0, %v1932
    %v1934 = vpop.f32.mrb[0].mxu0
    %v1935 = vpop.f32.mrb[0].mxu0
    %v1936 = vadd.f32 0.0, %v1935
    %v1937 = vpop.f32.mrb[0].mxu0
    %1938 = vmatprep.mubr.bf16.mxu0 0
    %1939 = vmatmul.mubr.bf16.gmra.mrb[0].mxu0 %v1158
    %v1940 = vpop.f32.mrb[0].mxu0
    %v1941 = vadd.f32 0.0, %v1940
    %v1942 = vpop.f32.mrb[0].mxu0
    %v1943 = vpop.f32.mrb[0].mxu0
    %v1944 = vadd.f32 0.0, %v1943
    %v1945 = vpop.f32.mrb[0].mxu0
    %1946 = vmatprep.mubr.bf16.mxu0 0
    %1947 = vmatmul.mubr.bf16.gmra.mrb[0].mxu0 %v1161
    %v1948 = vpop.f32.mrb[0].mxu0
    %v1949 = vadd.f32 0.0, %v1948
    %v1950 = vpop.f32.mrb[0].mxu0
    %v1951 = vpop.f32.mrb[0].mxu0
    %v1952 = vadd.f32 0.0, %v1951
    %v1953 = vpop.f32.mrb[0].mxu0
    %1954 = vmatprep.mubr.bf16.mxu0 0
    %1955 = vmatmul.mubr.bf16.gmra.mrb[0].mxu0 %v1164
    %v1956 = vpop.f32.mrb[0].mxu0
    %v1957 = vadd.f32 0.0, %v1956
    %v1958 = vpop.f32.mrb[0].mxu0
    %v1959 = vpop.f32.mrb[0].mxu0
    %v1960 = vadd.f32 0.0, %v1959
    %v1961 = vpop.f32.mrb[0].mxu0
    %1962 = vmatprep.mubr.bf16.mxu0 0
    %1963 = vmatmul.mubr.bf16.gmra.mrb[0].mxu0 %v1167
    %v1964 = vpop.f32.mrb[0].mxu0
    %v1965 = vadd.f32 0.0, %v1964
    %v1966 = vpop.f32.mrb[0].mxu0
    %v1967 = vpop.f32.mrb[0].mxu0
    %v1968 = vadd.f32 0.0, %v1967
    %v1969 = vpop.f32.mrb[0].mxu0
    %1970 = vmatprep.mubr.bf16.mxu0 0
    %1971 = vmatmul.mubr.bf16.gmra.mrb[0].mxu0 %v1170
    %v1972 = vpop.f32.mrb[0].mxu0
    %v1973 = vadd.f32 0.0, %v1972
    %v1974 = vpop.f32.mrb[0].mxu0
    %v1975 = vpop.f32.mrb[0].mxu0
    %v1976 = vadd.f32 0.0, %v1975
    %v1977 = vpop.f32.mrb[0].mxu0
    %1978 = vmatprep.mubr.bf16.mxu0 0
    %1979 = vmatmul.mubr.bf16.gmra.mrb[0].mxu0 %v1173
    %v1980 = vpop.f32.mrb[0].mxu0
    %v1981 = vadd.f32 0.0, %v1980
    %v1982 = vpop.f32.mrb[0].mxu0
    %v1983 = vpop.f32.mrb[0].mxu0
    %v1984 = vadd.f32 0.0, %v1983
    %v1985 = vpop.f32.mrb[0].mxu0
    %1986 = vmatprep.mubr.bf16.mxu0 0
    %1987 = vmatmul.mubr.bf16.gmra.mrb[0].mxu0 %v1176
    %v1988 = vpop.f32.mrb[0].mxu0
    %v1989 = vadd.f32 0.0, %v1988
    %v1990 = vpop.f32.mrb[0].mxu0
    %v1991 = vpop.f32.mrb[0].mxu0
    %v1992 = vadd.f32 0.0, %v1991
    %v1993 = vpop.f32.mrb[0].mxu0
    %1994 = vmatprep.mubr.bf16.mxu0 0
    %1995 = vmatmul.mubr.bf16.gmra.mrb[0].mxu0 %v1179
    %v1996 = vpop.f32.mrb[0].mxu0
    %v1997 = vadd.f32 0.0, %v1996
    %v1998 = vpop.f32.mrb[0].mxu0
    %v1999 = vpop.f32.mrb[0].mxu0
    %v2000 = vadd.f32 0.0, %v1999
    %v2001 = vpop.f32.mrb[0].mxu0
    %2002 = vmatprep.mubr.bf16.mxu0 0
    %2003 = vmatmul.mubr.bf16.gmra.mrb[0].mxu0 %v1182
    %v2004 = vpop.f32.mrb[0].mxu0
    %v2005 = vadd.f32 0.0, %v2004
    %v2006 = vpop.f32.mrb[0].mxu0
    %v2007 = vpop.f32.mrb[0].mxu0
    %v2008 = vadd.f32 0.0, %v2007
    %v2009 = vpop.f32.mrb[0].mxu0
    %2010 = vmatprep.mubr.bf16.mxu0 0
    %2011 = vmatmul.mubr.bf16.gmra.mrb[0].mxu0 %v1185
    %v2012 = vpop.f32.mrb[0].mxu0
    %v2013 = vadd.f32 0.0, %v2012
    %v2014 = vpop.f32.mrb[0].mxu0
    %v2015 = vpop.f32.mrb[0].mxu0
    %v2016 = vadd.f32 0.0, %v2015
    %v2017 = vpop.f32.mrb[0].mxu0
    %2018 = vmatprep.mubr.bf16.mxu0 0
    %2019 = vmatmul.mubr.bf16.gmra.mrb[0].mxu0 %v1188
    %v2020 = vpop.f32.mrb[0].mxu0
    %v2021 = vadd.f32 0.0, %v2020
    %v2022 = vpop.f32.mrb[0].mxu0
    %v2023 = vpop.f32.mrb[0].mxu0
    %v2024 = vadd.f32 0.0, %v2023
    %v2025 = vpop.f32.mrb[0].mxu0
    %2026 = vmatprep.mubr.bf16.mxu0 0
    %2027 = vmatmul.mubr.bf16.gmra.mrb[0].mxu0 %v1191
    %v2028 = vpop.f32.mrb[0].mxu0
    %v2029 = vadd.f32 0.0, %v2028
    %v2030 = vpop.f32.mrb[0].mxu0
    %v2031 = vpop.f32.mrb[0].mxu0
    %v2032 = vadd.f32 0.0, %v2031
    %v2033 = vpop.f32.mrb[0].mxu0
    %2034 = vmatprep.mubr.bf16.mxu0 0
    %2035 = vmatmul.mubr.bf16.gmra.mrb[0].mxu0 %v1194
    %v2036 = vpop.f32.mrb[0].mxu0
    %v2037 = vadd.f32 0.0, %v2036
    %v2038 = vpop.f32.mrb[0].mxu0
    %v2039 = vpop.f32.mrb[0].mxu0
    %v2040 = vadd.f32 0.0, %v2039
    %v2041 = vpop.f32.mrb[0].mxu0
    %2042 = vmatprep.mubr.bf16.mxu0 0
    %2043 = vmatmul.mubr.bf16.gmra.mrb[0].mxu0 %v1197
    %v2044 = vpop.f32.mrb[0].mxu0
    %v2045 = vadd.f32 0.0, %v2044
    %v2046 = vpop.f32.mrb[0].mxu0
    %v2047 = vpop.f32.mrb[0].mxu0
    %v2048 = vadd.f32 0.0, %v2047
    %v2049 = vpop.f32.mrb[0].mxu0
    %2050 = vmatprep.mubr.bf16.mxu0 0
    %2051 = vmatmul.mubr.bf16.gmra.mrb[0].mxu0 %v1200
    %v2052 = vpop.f32.mrb[0].mxu0
    %v2053 = vadd.f32 0.0, %v2052
    %v2054 = vpop.f32.mrb[0].mxu0
    %v2055 = vpop.f32.mrb[0].mxu0
    %v2056 = vadd.f32 0.0, %v2055
    %v2057 = vpop.f32.mrb[0].mxu0
    %2058 = vmatprep.mubr.bf16.mxu0 0
    %2059 = vmatmul.mubr.bf16.gmra.mrb[0].mxu0 %v1203
    %v2060 = vpop.f32.mrb[0].mxu0
    %v2061 = vadd.f32 0.0, %v2060
    %v2062 = vpop.f32.mrb[0].mxu0
    %v2063 = vpop.f32.mrb[0].mxu0
    %v2064 = vadd.f32 0.0, %v2063
    %v2065 = vpop.f32.mrb[0].mxu0
    %2066 = vmatprep.mubr.bf16.mxu0 0
    %2067 = vmatmul.mubr.bf16.gmra.mrb[0].mxu0 %v1206
    %v2068 = vpop.f32.mrb[0].mxu0
    %v2069 = vadd.f32 0.0, %v2068
    %v2070 = vpop.f32.mrb[0].mxu0
    %v2071 = vpop.f32.mrb[0].mxu0
    %v2072 = vadd.f32 0.0, %v2071
    %v2073 = vpop.f32.mrb[0].mxu0
    %2074 = vmatprep.mubr.bf16.mxu0 0
    %2075 = vmatmul.mubr.bf16.gmra.mrb[0].mxu0 %v1209
    %v2076 = vpop.f32.mrb[0].mxu0
    %v2077 = vadd.f32 0.0, %v2076
    %v2078 = vpop.f32.mrb[0].mxu0
    %v2079 = vpop.f32.mrb[0].mxu0
    %v2080 = vadd.f32 0.0, %v2079
    %v2081 = vpop.f32.mrb[0].mxu0
    %2082 = vmatprep.mubr.bf16.mxu0 0
    %2083 = vmatmul.mubr.bf16.gmra.mrb[0].mxu0 %v1212
    %v2084 = vpop.f32.mrb[0].mxu0
    %v2085 = vadd.f32 0.0, %v2084
    %v2086 = vpop.f32.mrb[0].mxu0
    %v2087 = vpop.f32.mrb[0].mxu0
    %v2088 = vadd.f32 0.0, %v2087
    %v2089 = vpop.f32.mrb[0].mxu0
    %2090 = vmatprep.mubr.bf16.mxu0 0
    %2091 = vmatmul.mubr.bf16.gmra.mrb[0].mxu0 %v1215
    %v2092 = vpop.f32.mrb[0].mxu0
    %v2093 = vadd.f32 0.0, %v2092
    %v2094 = vpop.f32.mrb[0].mxu0
    %v2095 = vpop.f32.mrb[0].mxu0
    %v2096 = vadd.f32 0.0, %v2095
    %v2097 = vpop.f32.mrb[0].mxu0
    %2098 = vmatprep.mubr.bf16.mxu0 0
    %2099 = vmatmul.mubr.bf16.gmra.mrb[0].mxu0 %v1218
    %v2100 = vpop.f32.mrb[0].mxu0
    %v2101 = vadd.f32 0.0, %v2100
    %v2102 = vpop.f32.mrb[0].mxu0
    %v2103 = vpop.f32.mrb[0].mxu0
    %v2104 = vadd.f32 0.0, %v2103
    %v2105 = vpop.f32.mrb[0].mxu0
    %2106 = vmatprep.mubr.bf16.mxu0 0
    %2107 = vmatmul.mubr.bf16.gmra.mrb[0].mxu0 %v1221
    %v2108 = vpop.f32.mrb[0].mxu0
    %v2109 = vadd.f32 0.0, %v2108
    %v2110 = vpop.f32.mrb[0].mxu0
    %v2111 = vpop.f32.mrb[0].mxu0
    %v2112 = vadd.f32 0.0, %v2111
    %v2113 = vpop.f32.mrb[0].mxu0
    %2114 = vmatprep.mubr.bf16.mxu0 0
    %2115 = vmatmul.mubr.bf16.gmra.mrb[0].mxu0 %v1224
    %v2116 = vpop.f32.mrb[0].mxu0
    %v2117 = vadd.f32 0.0, %v2116
    %v2118 = vpop.f32.mrb[0].mxu0
    %v2119 = vpop.f32.mrb[0].mxu0
    %v2120 = vadd.f32 0.0, %v2119
    %v2121 = vpop.f32.mrb[0].mxu0
    %2122 = vmatprep.mubr.bf16.mxu0 0
    %2123 = vmatmul.mubr.bf16.gmra.mrb[0].mxu0 %v1227
    %v2124 = vpop.f32.mrb[0].mxu0
    %v2125 = vadd.f32 0.0, %v2124
    %v2126 = vpop.f32.mrb[0].mxu0
    %v2127 = vpop.f32.mrb[0].mxu0
    %v2128 = vadd.f32 0.0, %v2127
    %v2129 = vpop.f32.mrb[0].mxu0
    %2130 = vmatprep.mubr.bf16.mxu0 0
    %2131 = vmatmul.mubr.bf16.gmra.mrb[0].mxu0 %v1230
    %v2132 = vpop.f32.mrb[0].mxu0
    %v2133 = vadd.f32 0.0, %v2132
    %v2134 = vpop.f32.mrb[0].mxu0
    %v2135 = vpop.f32.mrb[0].mxu0
    %v2136 = vadd.f32 0.0, %v2135
    %v2137 = vpop.f32.mrb[0].mxu0
    %2138 = vmatprep.mubr.bf16.mxu0 0
    %2139 = vmatmul.mubr.bf16.gmra.mrb[0].mxu0 %v1233
    %v2140 = vpop.f32.mrb[0].mxu0
    %v2141 = vadd.f32 0.0, %v2140
    %v2142 = vpop.f32.mrb[0].mxu0
    %v2143 = vpop.f32.mrb[0].mxu0
    %v2144 = vadd.f32 0.0, %v2143
    %v2145 = vpop.f32.mrb[0].mxu0
    %2146 = vmatprep.mubr.bf16.mxu0 0
    %2147 = vmatmul.mubr.bf16.gmra.mrb[0].mxu0 %v1236
    %v2148 = vpop.f32.mrb[0].mxu0
    %v2149 = vadd.f32 0.0, %v2148
    %v2150 = vpop.f32.mrb[0].mxu0
    %v2151 = vpop.f32.mrb[0].mxu0
    %v2152 = vadd.f32 0.0, %v2151
    %v2153 = vpop.f32.mrb[0].mxu0
    %2154 = vmatprep.mubr.bf16.mxu0 0
    %2155 = vmatmul.mubr.bf16.gmra.mrb[0].mxu0 %v1239
    %v2156 = vpop.f32.mrb[0].mxu0
    %v2157 = vadd.f32 0.0, %v2156
    %v2158 = vpop.f32.mrb[0].mxu0
    %v2159 = vpop.f32.mrb[0].mxu0
    %v2160 = vadd.f32 0.0, %v2159
    %v2161 = vpop.f32.mrb[0].mxu0
    %2162 = vmatprep.mubr.bf16.mxu0 0
    %2163 = vmatmul.mubr.bf16.gmra.mrb[0].mxu0 %v1242
    %v2164 = vpop.f32.mrb[0].mxu0
    %v2165 = vadd.f32 0.0, %v2164
    %v2166 = vpop.f32.mrb[0].mxu0
    %v2167 = vpop.f32.mrb[0].mxu0
    %v2168 = vadd.f32 0.0, %v2167
    %v2169 = vpop.f32.mrb[0].mxu0
    %2170 = vmatprep.mubr.bf16.mxu0 0
    %2171 = vmatmul.mubr.bf16.gmra.mrb[0].mxu0 %v1245
    %v2172 = vpop.f32.mrb[0].mxu0
    %v2173 = vadd.f32 0.0, %v2172
    %v2174 = vpop.f32.mrb[0].mxu0
    %v2175 = vpop.f32.mrb[0].mxu0
    %v2176 = vadd.f32 0.0, %v2175
    %v2177 = vpop.f32.mrb[0].mxu0
    %2178 = vmatprep.mubr.bf16.mxu0 0
    %2179 = vmatmul.mubr.bf16.gmra.mrb[0].mxu0 %v1248
    %v2180 = vpop.f32.mrb[0].mxu0
    %v2181 = vadd.f32 0.0, %v2180
    %v2182 = vpop.f32.mrb[0].mxu0
    %v2183 = vpop.f32.mrb[0].mxu0
    %v2184 = vadd.f32 0.0, %v2183
    %v2185 = vpop.f32.mrb[0].mxu0
    %2186 = vmatprep.mubr.bf16.mxu0 0
    %2187 = vmatmul.mubr.bf16.gmra.mrb[0].mxu0 %v1251
    %v2188 = vpop.f32.mrb[0].mxu0
    %v2189 = vadd.f32 0.0, %v2188
    %v2190 = vpop.f32.mrb[0].mxu0
    %v2191 = vpop.f32.mrb[0].mxu0
    %v2192 = vadd.f32 0.0, %v2191
    %v2193 = vpop.f32.mrb[0].mxu0
    %2194 = vmatprep.mubr.bf16.mxu0 0
    %2195 = vmatmul.mubr.bf16.gmra.mrb[0].mxu0 %v1254
    %v2196 = vpop.f32.mrb[0].mxu0
    %v2197 = vadd.f32 0.0, %v2196
    %v2198 = vpop.f32.mrb[0].mxu0
    %v2199 = vpop.f32.mrb[0].mxu0
    %v2200 = vadd.f32 0.0, %v2199
    %v2201 = vpop.f32.mrb[0].mxu0
    %2202 = vmatprep.mubr.bf16.mxu0 0
    %2203 = vmatmul.mubr.bf16.gmra.mrb[0].mxu0 %v1257
    %v2204 = vpop.f32.mrb[0].mxu0
    %v2205 = vadd.f32 0.0, %v2204
    %v2206 = vpop.f32.mrb[0].mxu0
    %v2207 = vpop.f32.mrb[0].mxu0
    %v2208 = vadd.f32 0.0, %v2207
    %v2209 = vpop.f32.mrb[0].mxu0
    %2210 = vmatprep.mubr.bf16.mxu0 0
    %2211 = vmatmul.mubr.bf16.gmra.mrb[0].mxu0 %v1260
    %v2212 = vpop.f32.mrb[0].mxu0
    %v2213 = vadd.f32 0.0, %v2212
    %v2214 = vpop.f32.mrb[0].mxu0
    %v2215 = vpop.f32.mrb[0].mxu0
    %v2216 = vadd.f32 0.0, %v2215
    %v2217 = vpop.f32.mrb[0].mxu0
    %2218 = vmatprep.mubr.bf16.mxu0 0
    %2219 = vmatmul.mubr.bf16.gmra.mrb[0].mxu0 %v1263
    %v2220 = vpop.f32.mrb[0].mxu0
    %v2221 = vadd.f32 0.0, %v2220
    %v2222 = vpop.f32.mrb[0].mxu0
    %v2223 = vpop.f32.mrb[0].mxu0
    %v2224 = vadd.f32 0.0, %v2223
    %v2225 = vpop.f32.mrb[0].mxu0
    %2226 = vmatprep.mubr.bf16.mxu0 0
    %2227 = vmatmul.mubr.bf16.gmra.mrb[0].mxu0 %v1266
    %v2228 = vpop.f32.mrb[0].mxu0
    %v2229 = vadd.f32 0.0, %v2228
    %v2230 = vpop.f32.mrb[0].mxu0
    %v2231 = vpop.f32.mrb[0].mxu0
    %v2232 = vadd.f32 0.0, %v2231
    %v2233 = vpop.f32.mrb[0].mxu0
    %2234 = vmatprep.mubr.bf16.mxu0 0
    %2235 = vmatmul.mubr.bf16.gmra.mrb[0].mxu0 %v1269
    %v2236 = vpop.f32.mrb[0].mxu0
    %v2237 = vadd.f32 0.0, %v2236
    %v2238 = vpop.f32.mrb[0].mxu0
    %v2239 = vpop.f32.mrb[0].mxu0
    %v2240 = vadd.f32 0.0, %v2239
    %v2241 = vpop.f32.mrb[0].mxu0
    %2242 = vmatprep.mubr.bf16.mxu0 0
    %2243 = vmatmul.mubr.bf16.gmra.mrb[0].mxu0 %v1272
    %v2244 = vpop.f32.mrb[0].mxu0
    %v2245 = vadd.f32 0.0, %v2244
    %v2246 = vpop.f32.mrb[0].mxu0
    %v2247 = vpop.f32.mrb[0].mxu0
    %v2248 = vadd.f32 0.0, %v2247
    %v2249 = vpop.f32.mrb[0].mxu0
    %2250 = vmatprep.mubr.bf16.mxu0 0
    %2251 = vmatmul.mubr.bf16.gmra.mrb[0].mxu0 %v1275
    %v2252 = vpop.f32.mrb[0].mxu0
    %v2253 = vadd.f32 0.0, %v2252
    %v2254 = vpop.f32.mrb[0].mxu0
    %v2255 = vpop.f32.mrb[0].mxu0
    %v2256 = vadd.f32 0.0, %v2255
    %v2257 = vpop.f32.mrb[0].mxu0
    %2258 = vmatprep.mubr.bf16.mxu0 0
    %2259 = vmatmul.mubr.bf16.gmra.mrb[0].mxu0 %v1278
    %v2260 = vpop.f32.mrb[0].mxu0
    %v2261 = vadd.f32 0.0, %v2260
    %v2262 = vpop.f32.mrb[0].mxu0
    %v2263 = vpop.f32.mrb[0].mxu0
    %v2264 = vadd.f32 0.0, %v2263
    %v2265 = vpop.f32.mrb[0].mxu0
    %2266 = vmatprep.mubr.bf16.mxu0 0
    %2267 = vmatmul.mubr.bf16.gmra.mrb[0].mxu0 %v1281
    %v2268 = vpop.f32.mrb[0].mxu0
    %v2269 = vadd.f32 0.0, %v2268
    %v2270 = vpop.f32.mrb[0].mxu0
    %v2271 = vpop.f32.mrb[0].mxu0
    %v2272 = vadd.f32 0.0, %v2271
    %v2273 = vpop.f32.mrb[0].mxu0
    %2274 = vmatprep.mubr.bf16.mxu0 0
    %2275 = vmatmul.mubr.bf16.gmra.mrb[0].mxu0 %v1284
    %v2276 = vpop.f32.mrb[0].mxu0
    %v2277 = vadd.f32 0.0, %v2276
    %v2278 = vpop.f32.mrb[0].mxu0
    %v2279 = vpop.f32.mrb[0].mxu0
    %v2280 = vadd.f32 0.0, %v2279
    %v2281 = vpop.f32.mrb[0].mxu0
    %2282 = vmatprep.mubr.bf16.mxu0 0
    %2283 = vmatmul.mubr.bf16.gmra.mrb[0].mxu0 %v1287
    %v2284 = vpop.f32.mrb[0].mxu0
    %v2285 = vadd.f32 0.0, %v2284
    %v2286 = vpop.f32.mrb[0].mxu0
    %v2287 = vpop.f32.mrb[0].mxu0
    %v2288 = vadd.f32 0.0, %v2287
    %v2289 = vpop.f32.mrb[0].mxu0
    %2290 = vmatprep.mubr.bf16.mxu0 0
    %2291 = vmatmul.mubr.bf16.gmra.mrb[0].mxu0 %v1290
    %v2292 = vpop.f32.mrb[0].mxu0
    %v2293 = vadd.f32 0.0, %v2292
    %v2294 = vpop.f32.mrb[0].mxu0
    %v2295 = vpop.f32.mrb[0].mxu0
    %v2296 = vadd.f32 0.0, %v2295
    %v2297 = vpop.f32.mrb[0].mxu0
    %2298 = vmatprep.mubr.bf16.mxu0 0
    %2299 = vmatmul.mubr.bf16.gmra.mrb[0].mxu0 %v1293
    %v2300 = vpop.f32.mrb[0].mxu0
    %v2301 = vadd.f32 0.0, %v2300
    %v2302 = vpop.f32.mrb[0].mxu0
    %v2303 = vpop.f32.mrb[0].mxu0
    %v2304 = vadd.f32 0.0, %v2303
    %v2305 = vpop.f32.mrb[0].mxu0
    %2306 = vmatprep.mubr.bf16.mxu0 0
    %2307 = vmatmul.mubr.bf16.gmra.mrb[0].mxu0 %v1296
    %v2308 = vpop.f32.mrb[0].mxu0
    %v2309 = vadd.f32 0.0, %v2308
    %v2310 = vpop.f32.mrb[0].mxu0
    %v2311 = vpop.f32.mrb[0].mxu0
    %v2312 = vadd.f32 0.0, %v2311
    %v2313 = vpop.f32.mrb[0].mxu0
    %2314 = vmatprep.mubr.bf16.mxu0 0
    %2315 = vmatmul.mubr.bf16.gmra.mrb[0].mxu0 %v1299
    %v2316 = vpop.f32.mrb[0].mxu0
    %v2317 = vadd.f32 0.0, %v2316
    %v2318 = vpop.f32.mrb[0].mxu0
    %v2319 = vpop.f32.mrb[0].mxu0
    %v2320 = vadd.f32 0.0, %v2319
    %v2321 = vpop.f32.mrb[0].mxu0
    %2322 = vmatprep.mubr.bf16.mxu0 0
    %2323 = vmatmul.mubr.bf16.gmra.mrb[0].mxu0 %v1302
    %v2324 = vpop.f32.mrb[0].mxu0
    %v2325 = vadd.f32 0.0, %v2324
    %v2326 = vpop.f32.mrb[0].mxu0
    %v2327 = vpop.f32.mrb[0].mxu0
    %v2328 = vadd.f32 0.0, %v2327
    %v2329 = vpop.f32.mrb[0].mxu0
    %2330 = vmatprep.mubr.bf16.mxu0 0
    %2331 = vmatmul.mubr.bf16.gmra.mrb[0].mxu0 %v1305
    %v2332 = vpop.f32.mrb[0].mxu0
    %v2333 = vadd.f32 0.0, %v2332
    %v2334 = vpop.f32.mrb[0].mxu0
    %v2335 = vpop.f32.mrb[0].mxu0
    %v2336 = vadd.f32 0.0, %v2335
    %v2337 = vpop.f32.mrb[0].mxu0
    %2338 = vmatprep.mubr.bf16.mxu0 0
    %2339 = vmatmul.mubr.bf16.gmra.mrb[0].mxu0 %v1308
    %v2340 = vpop.f32.mrb[0].mxu0
    %v2341 = vadd.f32 0.0, %v2340
    %v2342 = vpop.f32.mrb[0].mxu0
    %v2343 = vpop.f32.mrb[0].mxu0
    %v2344 = vadd.f32 0.0, %v2343
    %v2345 = vpop.f32.mrb[0].mxu0
    %2346 = vmatprep.mubr.bf16.mxu0 0
    %2347 = vmatmul.mubr.bf16.gmra.mrb[0].mxu0 %v1311
    %v2348 = vpop.f32.mrb[0].mxu0
    %v2349 = vadd.f32 0.0, %v2348
    %v2350 = vpop.f32.mrb[0].mxu0
    %v2351 = vpop.f32.mrb[0].mxu0
    %v2352 = vadd.f32 0.0, %v2351
    %v2353 = vpop.f32.mrb[0].mxu0
    %2354 = vmatprep.mubr.bf16.mxu0 0
    %2355 = vmatmul.mubr.bf16.gmra.mrb[0].mxu0 %v1314
    %v2356 = vpop.f32.mrb[0].mxu0
    %v2357 = vadd.f32 0.0, %v2356
    %v2358 = vpop.f32.mrb[0].mxu0
    %v2359 = vpop.f32.mrb[0].mxu0
    %v2360 = vadd.f32 0.0, %v2359
    %v2361 = vpop.f32.mrb[0].mxu0
    %2362 = vmatprep.mubr.bf16.mxu0 0
    %2363 = vmatmul.mubr.bf16.gmra.mrb[0].mxu0 %v1317
    %v2364 = vpop.f32.mrb[0].mxu0
    %v2365 = vadd.f32 0.0, %v2364
    %v2366 = vpop.f32.mrb[0].mxu0
    %v2367 = vpop.f32.mrb[0].mxu0
    %v2368 = vadd.f32 0.0, %v2367
    %v2369 = vpop.f32.mrb[0].mxu0
    %2370 = vmatprep.mubr.bf16.mxu0 0
    %2371 = vmatmul.mubr.bf16.gmra.mrb[0].mxu0 %v1320
    %v2372 = vpop.f32.mrb[0].mxu0
    %v2373 = vadd.f32 0.0, %v2372
    %v2374 = vpop.f32.mrb[0].mxu0
    %v2375 = vpop.f32.mrb[0].mxu0
    %v2376 = vadd.f32 0.0, %v2375
    %v2377 = vpop.f32.mrb[0].mxu0
    %2378 = vdwg.mxu0
    %v2379 = vld [vmem:[%s2] sm:$0x1]
    %v2381 = vlaneseq
    %v2382 = vshrl.u32 %v2381, 7
    %v2383 = vsub.s32 0, %v2382
    %v2384 = vrot.slane %v2379, %v2383
    %v2386 = vmul.f32 %v1357, %v2384
    %v2387 = vmul.f32 %v1360, %v2384
    %v2388 = vmul.f32 %v1365, %v2384
    %v2389 = vmul.f32 %v1368, %v2384
    %v2390 = vmul.f32 %v1373, %v2384
    %v2391 = vmul.f32 %v1376, %v2384
    %v2392 = vmul.f32 %v1381, %v2384
    %v2393 = vmul.f32 %v1384, %v2384
    %v2394 = vmul.f32 %v1389, %v2384
    %v2395 = vmul.f32 %v1392, %v2384
    %v2396 = vmul.f32 %v1397, %v2384
    %v2397 = vmul.f32 %v1400, %v2384
    %v2398 = vmul.f32 %v1405, %v2384
    %v2399 = vmul.f32 %v1408, %v2384
    %v2400 = vmul.f32 %v1413, %v2384
    %v2401 = vmul.f32 %v1416, %v2384
    %v2402 = vmul.f32 %v1421, %v2384
    %v2403 = vmul.f32 %v1424, %v2384
    %v2404 = vmul.f32 %v1429, %v2384
    %v2405 = vmul.f32 %v1432, %v2384
    %v2406 = vmul.f32 %v1437, %v2384
    %v2407 = vmul.f32 %v1440, %v2384
    %v2408 = vmul.f32 %v1445, %v2384
    %v2409 = vmul.f32 %v1448, %v2384
    %v2410 = vmul.f32 %v1453, %v2384
    %v2411 = vmul.f32 %v1456, %v2384
    %v2412 = vmul.f32 %v1461, %v2384
    %v2413 = vmul.f32 %v1464, %v2384
    %v2414 = vmul.f32 %v1469, %v2384
    %v2415 = vmul.f32 %v1472, %v2384
    %v2416 = vmul.f32 %v1477, %v2384
    %v2417 = vmul.f32 %v1480, %v2384
    %v2418 = vmul.f32 %v1485, %v2384
    %v2419 = vmul.f32 %v1488, %v2384
    %v2420 = vmul.f32 %v1493, %v2384
    %v2421 = vmul.f32 %v1496, %v2384
    %v2422 = vmul.f32 %v1501, %v2384
    %v2423 = vmul.f32 %v1504, %v2384
    %v2424 = vmul.f32 %v1509, %v2384
    %v2425 = vmul.f32 %v1512, %v2384
    %v2426 = vmul.f32 %v1517, %v2384
    %v2427 = vmul.f32 %v1520, %v2384
    %v2428 = vmul.f32 %v1525, %v2384
    %v2429 = vmul.f32 %v1528, %v2384
    %v2430 = vmul.f32 %v1533, %v2384
    %v2431 = vmul.f32 %v1536, %v2384
    %v2432 = vmul.f32 %v1541, %v2384
    %v2433 = vmul.f32 %v1544, %v2384
    %v2434 = vmul.f32 %v1549, %v2384
    %v2435 = vmul.f32 %v1552, %v2384
    %v2436 = vmul.f32 %v1557, %v2384
    %v2437 = vmul.f32 %v1560, %v2384
    %v2438 = vmul.f32 %v1565, %v2384
    %v2439 = vmul.f32 %v1568, %v2384
    %v2440 = vmul.f32 %v1573, %v2384
    %v2441 = vmul.f32 %v1576, %v2384
    %v2442 = vmul.f32 %v1581, %v2384
    %v2443 = vmul.f32 %v1584, %v2384
    %v2444 = vmul.f32 %v1589, %v2384
    %v2445 = vmul.f32 %v1592, %v2384
    %v2446 = vmul.f32 %v1597, %v2384
    %v2447 = vmul.f32 %v1600, %v2384
    %v2448 = vmul.f32 %v1605, %v2384
    %v2449 = vmul.f32 %v1608, %v2384
    %v2450 = vmul.f32 %v1613, %v2384
    %v2451 = vmul.f32 %v1616, %v2384
    %v2452 = vmul.f32 %v1621, %v2384
    %v2453 = vmul.f32 %v1624, %v2384
    %v2454 = vmul.f32 %v1629, %v2384
    %v2455 = vmul.f32 %v1632, %v2384
    %v2456 = vmul.f32 %v1637, %v2384
    %v2457 = vmul.f32 %v1640, %v2384
    %v2458 = vmul.f32 %v1645, %v2384
    %v2459 = vmul.f32 %v1648, %v2384
    %v2460 = vmul.f32 %v1653, %v2384
    %v2461 = vmul.f32 %v1656, %v2384
    %v2462 = vmul.f32 %v1661, %v2384
    %v2463 = vmul.f32 %v1664, %v2384
    %v2464 = vmul.f32 %v1669, %v2384
    %v2465 = vmul.f32 %v1672, %v2384
    %v2466 = vmul.f32 %v1677, %v2384
    %v2467 = vmul.f32 %v1680, %v2384
    %v2468 = vmul.f32 %v1685, %v2384
    %v2469 = vmul.f32 %v1688, %v2384
    %v2470 = vmul.f32 %v1693, %v2384
    %v2471 = vmul.f32 %v1696, %v2384
    %v2472 = vmul.f32 %v1701, %v2384
    %v2473 = vmul.f32 %v1704, %v2384
    %v2474 = vmul.f32 %v1709, %v2384
    %v2475 = vmul.f32 %v1712, %v2384
    %v2476 = vmul.f32 %v1717, %v2384
    %v2477 = vmul.f32 %v1720, %v2384
    %v2478 = vmul.f32 %v1725, %v2384
    %v2479 = vmul.f32 %v1728, %v2384
    %v2480 = vmul.f32 %v1733, %v2384
    %v2481 = vmul.f32 %v1736, %v2384
    %v2482 = vmul.f32 %v1741, %v2384
    %v2483 = vmul.f32 %v1744, %v2384
    %v2484 = vmul.f32 %v1749, %v2384
    %v2485 = vmul.f32 %v1752, %v2384
    %v2486 = vmul.f32 %v1757, %v2384
    %v2487 = vmul.f32 %v1760, %v2384
    %v2488 = vmul.f32 %v1765, %v2384
    %v2489 = vmul.f32 %v1768, %v2384
    %v2490 = vmul.f32 %v1773, %v2384
    %v2491 = vmul.f32 %v1776, %v2384
    %v2492 = vmul.f32 %v1781, %v2384
    %v2493 = vmul.f32 %v1784, %v2384
    %v2494 = vmul.f32 %v1789, %v2384
    %v2495 = vmul.f32 %v1792, %v2384
    %v2496 = vmul.f32 %v1797, %v2384
    %v2497 = vmul.f32 %v1800, %v2384
    %v2498 = vmul.f32 %v1805, %v2384
    %v2499 = vmul.f32 %v1808, %v2384
    %v2500 = vmul.f32 %v1813, %v2384
    %v2501 = vmul.f32 %v1816, %v2384
    %v2502 = vmul.f32 %v1821, %v2384
    %v2503 = vmul.f32 %v1824, %v2384
    %v2504 = vmul.f32 %v1829, %v2384
    %v2505 = vmul.f32 %v1832, %v2384
    %v2506 = vmul.f32 %v1837, %v2384
    %v2507 = vmul.f32 %v1840, %v2384
    %v2508 = vmul.f32 %v1845, %v2384
    %v2509 = vmul.f32 %v1848, %v2384
    %v2510 = vmul.f32 %v1853, %v2384
    %v2511 = vmul.f32 %v1856, %v2384
    %v2512 = vmul.f32 %v1861, %v2384
    %v2513 = vmul.f32 %v1864, %v2384
    %v2514 = vmul.f32 %v1869, %v2384
    %v2515 = vmul.f32 %v1872, %v2384
    %v2516 = vmul.f32 %v1877, %v2384
    %v2517 = vmul.f32 %v1880, %v2384
    %v2518 = vmul.f32 %v1885, %v2384
    %v2519 = vmul.f32 %v1888, %v2384
    %v2520 = vmul.f32 %v1893, %v2384
    %v2521 = vmul.f32 %v1896, %v2384
    %v2522 = vmul.f32 %v1901, %v2384
    %v2523 = vmul.f32 %v1904, %v2384
    %v2524 = vmul.f32 %v1909, %v2384
    %v2525 = vmul.f32 %v1912, %v2384
    %v2526 = vmul.f32 %v1917, %v2384
    %v2527 = vmul.f32 %v1920, %v2384
    %v2528 = vmul.f32 %v1925, %v2384
    %v2529 = vmul.f32 %v1928, %v2384
    %v2530 = vmul.f32 %v1933, %v2384
    %v2531 = vmul.f32 %v1936, %v2384
    %v2532 = vmul.f32 %v1941, %v2384
    %v2533 = vmul.f32 %v1944, %v2384
    %v2534 = vmul.f32 %v1949, %v2384
    %v2535 = vmul.f32 %v1952, %v2384
    %v2536 = vmul.f32 %v1957, %v2384
    %v2537 = vmul.f32 %v1960, %v2384
    %v2538 = vmul.f32 %v1965, %v2384
    %v2539 = vmul.f32 %v1968, %v2384
    %v2540 = vmul.f32 %v1973, %v2384
    %v2541 = vmul.f32 %v1976, %v2384
    %v2542 = vmul.f32 %v1981, %v2384
    %v2543 = vmul.f32 %v1984, %v2384
    %v2544 = vmul.f32 %v1989, %v2384
    %v2545 = vmul.f32 %v1992, %v2384
    %v2546 = vmul.f32 %v1997, %v2384
    %v2547 = vmul.f32 %v2000, %v2384
    %v2548 = vmul.f32 %v2005, %v2384
    %v2549 = vmul.f32 %v2008, %v2384
    %v2550 = vmul.f32 %v2013, %v2384
    %v2551 = vmul.f32 %v2016, %v2384
    %v2552 = vmul.f32 %v2021, %v2384
    %v2553 = vmul.f32 %v2024, %v2384
    %v2554 = vmul.f32 %v2029, %v2384
    %v2555 = vmul.f32 %v2032, %v2384
    %v2556 = vmul.f32 %v2037, %v2384
    %v2557 = vmul.f32 %v2040, %v2384
    %v2558 = vmul.f32 %v2045, %v2384
    %v2559 = vmul.f32 %v2048, %v2384
    %v2560 = vmul.f32 %v2053, %v2384
    %v2561 = vmul.f32 %v2056, %v2384
    %v2562 = vmul.f32 %v2061, %v2384
    %v2563 = vmul.f32 %v2064, %v2384
    %v2564 = vmul.f32 %v2069, %v2384
    %v2565 = vmul.f32 %v2072, %v2384
    %v2566 = vmul.f32 %v2077, %v2384
    %v2567 = vmul.f32 %v2080, %v2384
    %v2568 = vmul.f32 %v2085, %v2384
    %v2569 = vmul.f32 %v2088, %v2384
    %v2570 = vmul.f32 %v2093, %v2384
    %v2571 = vmul.f32 %v2096, %v2384
    %v2572 = vmul.f32 %v2101, %v2384
    %v2573 = vmul.f32 %v2104, %v2384
    %v2574 = vmul.f32 %v2109, %v2384
    %v2575 = vmul.f32 %v2112, %v2384
    %v2576 = vmul.f32 %v2117, %v2384
    %v2577 = vmul.f32 %v2120, %v2384
    %v2578 = vmul.f32 %v2125, %v2384
    %v2579 = vmul.f32 %v2128, %v2384
    %v2580 = vmul.f32 %v2133, %v2384
    %v2581 = vmul.f32 %v2136, %v2384
    %v2582 = vmul.f32 %v2141, %v2384
    %v2583 = vmul.f32 %v2144, %v2384
    %v2584 = vmul.f32 %v2149, %v2384
    %v2585 = vmul.f32 %v2152, %v2384
    %v2586 = vmul.f32 %v2157, %v2384
    %v2587 = vmul.f32 %v2160, %v2384
    %v2588 = vmul.f32 %v2165, %v2384
    %v2589 = vmul.f32 %v2168, %v2384
    %v2590 = vmul.f32 %v2173, %v2384
    %v2591 = vmul.f32 %v2176, %v2384
    %v2592 = vmul.f32 %v2181, %v2384
    %v2593 = vmul.f32 %v2184, %v2384
    %v2594 = vmul.f32 %v2189, %v2384
    %v2595 = vmul.f32 %v2192, %v2384
    %v2596 = vmul.f32 %v2197, %v2384
    %v2597 = vmul.f32 %v2200, %v2384
    %v2598 = vmul.f32 %v2205, %v2384
    %v2599 = vmul.f32 %v2208, %v2384
    %v2600 = vmul.f32 %v2213, %v2384
    %v2601 = vmul.f32 %v2216, %v2384
    %v2602 = vmul.f32 %v2221, %v2384
    %v2603 = vmul.f32 %v2224, %v2384
    %v2604 = vmul.f32 %v2229, %v2384
    %v2605 = vmul.f32 %v2232, %v2384
    %v2606 = vmul.f32 %v2237, %v2384
    %v2607 = vmul.f32 %v2240, %v2384
    %v2608 = vmul.f32 %v2245, %v2384
    %v2609 = vmul.f32 %v2248, %v2384
    %v2610 = vmul.f32 %v2253, %v2384
    %v2611 = vmul.f32 %v2256, %v2384
    %v2612 = vmul.f32 %v2261, %v2384
    %v2613 = vmul.f32 %v2264, %v2384
    %v2614 = vmul.f32 %v2269, %v2384
    %v2615 = vmul.f32 %v2272, %v2384
    %v2616 = vmul.f32 %v2277, %v2384
    %v2617 = vmul.f32 %v2280, %v2384
    %v2618 = vmul.f32 %v2285, %v2384
    %v2619 = vmul.f32 %v2288, %v2384
    %v2620 = vmul.f32 %v2293, %v2384
    %v2621 = vmul.f32 %v2296, %v2384
    %v2622 = vmul.f32 %v2301, %v2384
    %v2623 = vmul.f32 %v2304, %v2384
    %v2624 = vmul.f32 %v2309, %v2384
    %v2625 = vmul.f32 %v2312, %v2384
    %v2626 = vmul.f32 %v2317, %v2384
    %v2627 = vmul.f32 %v2320, %v2384
    %v2628 = vmul.f32 %v2325, %v2384
    %v2629 = vmul.f32 %v2328, %v2384
    %v2630 = vmul.f32 %v2333, %v2384
    %v2631 = vmul.f32 %v2336, %v2384
    %v2632 = vmul.f32 %v2341, %v2384
    %v2633 = vmul.f32 %v2344, %v2384
    %v2634 = vmul.f32 %v2349, %v2384
    %v2635 = vmul.f32 %v2352, %v2384
    %v2636 = vmul.f32 %v2357, %v2384
    %v2637 = vmul.f32 %v2360, %v2384
    %v2638 = vmul.f32 %v2365, %v2384
    %v2639 = vmul.f32 %v2368, %v2384
    %v2640 = vmul.f32 %v2373, %v2384
    %v2641 = vmul.f32 %v2376, %v2384
    %v2642 = vld [vmem:[%s3] sm:$0x1]
    %v2644 = vlaneseq
    %v2645 = vshrl.u32 %v2644, 7
    %v2646 = vsub.s32 0, %v2645
    %v2647 = vrot.slane %v2642, %v2646
    %v2649 = vadd.f32 %v2386, %v2647
    %v2650 = vadd.f32 %v2387, %v2647
    %v2651 = vadd.f32 %v2388, %v2647
    %v2652 = vadd.f32 %v2389, %v2647
    %v2653 = vadd.f32 %v2390, %v2647
    %v2654 = vadd.f32 %v2391, %v2647
    %v2655 = vadd.f32 %v2392, %v2647
    %v2656 = vadd.f32 %v2393, %v2647
    %v2657 = vadd.f32 %v2394, %v2647
    %v2658 = vadd.f32 %v2395, %v2647
    %v2659 = vadd.f32 %v2396, %v2647
    %v2660 = vadd.f32 %v2397, %v2647
    %v2661 = vadd.f32 %v2398, %v2647
    %v2662 = vadd.f32 %v2399, %v2647
    %v2663 = vadd.f32 %v2400, %v2647
    %v2664 = vadd.f32 %v2401, %v2647
    %v2665 = vadd.f32 %v2402, %v2647
    %v2666 = vadd.f32 %v2403, %v2647
    %v2667 = vadd.f32 %v2404, %v2647
    %v2668 = vadd.f32 %v2405, %v2647
    %v2669 = vadd.f32 %v2406, %v2647
    %v2670 = vadd.f32 %v2407, %v2647
    %v2671 = vadd.f32 %v2408, %v2647
    %v2672 = vadd.f32 %v2409, %v2647
    %v2673 = vadd.f32 %v2410, %v2647
    %v2674 = vadd.f32 %v2411, %v2647
    %v2675 = vadd.f32 %v2412, %v2647
    %v2676 = vadd.f32 %v2413, %v2647
    %v2677 = vadd.f32 %v2414, %v2647
    %v2678 = vadd.f32 %v2415, %v2647
    %v2679 = vadd.f32 %v2416, %v2647
    %v2680 = vadd.f32 %v2417, %v2647
    %v2681 = vadd.f32 %v2418, %v2647
    %v2682 = vadd.f32 %v2419, %v2647
    %v2683 = vadd.f32 %v2420, %v2647
    %v2684 = vadd.f32 %v2421, %v2647
    %v2685 = vadd.f32 %v2422, %v2647
    %v2686 = vadd.f32 %v2423, %v2647
    %v2687 = vadd.f32 %v2424, %v2647
    %v2688 = vadd.f32 %v2425, %v2647
    %v2689 = vadd.f32 %v2426, %v2647
    %v2690 = vadd.f32 %v2427, %v2647
    %v2691 = vadd.f32 %v2428, %v2647
    %v2692 = vadd.f32 %v2429, %v2647
    %v2693 = vadd.f32 %v2430, %v2647
    %v2694 = vadd.f32 %v2431, %v2647
    %v2695 = vadd.f32 %v2432, %v2647
    %v2696 = vadd.f32 %v2433, %v2647
    %v2697 = vadd.f32 %v2434, %v2647
    %v2698 = vadd.f32 %v2435, %v2647
    %v2699 = vadd.f32 %v2436, %v2647
    %v2700 = vadd.f32 %v2437, %v2647
    %v2701 = vadd.f32 %v2438, %v2647
    %v2702 = vadd.f32 %v2439, %v2647
    %v2703 = vadd.f32 %v2440, %v2647
    %v2704 = vadd.f32 %v2441, %v2647
    %v2705 = vadd.f32 %v2442, %v2647
    %v2706 = vadd.f32 %v2443, %v2647
    %v2707 = vadd.f32 %v2444, %v2647
    %v2708 = vadd.f32 %v2445, %v2647
    %v2709 = vadd.f32 %v2446, %v2647
    %v2710 = vadd.f32 %v2447, %v2647
    %v2711 = vadd.f32 %v2448, %v2647
    %v2712 = vadd.f32 %v2449, %v2647
    %v2713 = vadd.f32 %v2450, %v2647
    %v2714 = vadd.f32 %v2451, %v2647
    %v2715 = vadd.f32 %v2452, %v2647
    %v2716 = vadd.f32 %v2453, %v2647
    %v2717 = vadd.f32 %v2454, %v2647
    %v2718 = vadd.f32 %v2455, %v2647
    %v2719 = vadd.f32 %v2456, %v2647
    %v2720 = vadd.f32 %v2457, %v2647
    %v2721 = vadd.f32 %v2458, %v2647
    %v2722 = vadd.f32 %v2459, %v2647
    %v2723 = vadd.f32 %v2460, %v2647
    %v2724 = vadd.f32 %v2461, %v2647
    %v2725 = vadd.f32 %v2462, %v2647
    %v2726 = vadd.f32 %v2463, %v2647
    %v2727 = vadd.f32 %v2464, %v2647
    %v2728 = vadd.f32 %v2465, %v2647
    %v2729 = vadd.f32 %v2466, %v2647
    %v2730 = vadd.f32 %v2467, %v2647
    %v2731 = vadd.f32 %v2468, %v2647
    %v2732 = vadd.f32 %v2469, %v2647
    %v2733 = vadd.f32 %v2470, %v2647
    %v2734 = vadd.f32 %v2471, %v2647
    %v2735 = vadd.f32 %v2472, %v2647
    %v2736 = vadd.f32 %v2473, %v2647
    %v2737 = vadd.f32 %v2474, %v2647
    %v2738 = vadd.f32 %v2475, %v2647
    %v2739 = vadd.f32 %v2476, %v2647
    %v2740 = vadd.f32 %v2477, %v2647
    %v2741 = vadd.f32 %v2478, %v2647
    %v2742 = vadd.f32 %v2479, %v2647
    %v2743 = vadd.f32 %v2480, %v2647
    %v2744 = vadd.f32 %v2481, %v2647
    %v2745 = vadd.f32 %v2482, %v2647
    %v2746 = vadd.f32 %v2483, %v2647
    %v2747 = vadd.f32 %v2484, %v2647
    %v2748 = vadd.f32 %v2485, %v2647
    %v2749 = vadd.f32 %v2486, %v2647
    %v2750 = vadd.f32 %v2487, %v2647
    %v2751 = vadd.f32 %v2488, %v2647
    %v2752 = vadd.f32 %v2489, %v2647
    %v2753 = vadd.f32 %v2490, %v2647
    %v2754 = vadd.f32 %v2491, %v2647
    %v2755 = vadd.f32 %v2492, %v2647
    %v2756 = vadd.f32 %v2493, %v2647
    %v2757 = vadd.f32 %v2494, %v2647
    %v2758 = vadd.f32 %v2495, %v2647
    %v2759 = vadd.f32 %v2496, %v2647
    %v2760 = vadd.f32 %v2497, %v2647
    %v2761 = vadd.f32 %v2498, %v2647
    %v2762 = vadd.f32 %v2499, %v2647
    %v2763 = vadd.f32 %v2500, %v2647
    %v2764 = vadd.f32 %v2501, %v2647
    %v2765 = vadd.f32 %v2502, %v2647
    %v2766 = vadd.f32 %v2503, %v2647
    %v2767 = vadd.f32 %v2504, %v2647
    %v2768 = vadd.f32 %v2505, %v2647
    %v2769 = vadd.f32 %v2506, %v2647
    %v2770 = vadd.f32 %v2507, %v2647
    %v2771 = vadd.f32 %v2508, %v2647
    %v2772 = vadd.f32 %v2509, %v2647
    %v2773 = vadd.f32 %v2510, %v2647
    %v2774 = vadd.f32 %v2511, %v2647
    %v2775 = vadd.f32 %v2512, %v2647
    %v2776 = vadd.f32 %v2513, %v2647
    %v2777 = vadd.f32 %v2514, %v2647
    %v2778 = vadd.f32 %v2515, %v2647
    %v2779 = vadd.f32 %v2516, %v2647
    %v2780 = vadd.f32 %v2517, %v2647
    %v2781 = vadd.f32 %v2518, %v2647
    %v2782 = vadd.f32 %v2519, %v2647
    %v2783 = vadd.f32 %v2520, %v2647
    %v2784 = vadd.f32 %v2521, %v2647
    %v2785 = vadd.f32 %v2522, %v2647
    %v2786 = vadd.f32 %v2523, %v2647
    %v2787 = vadd.f32 %v2524, %v2647
    %v2788 = vadd.f32 %v2525, %v2647
    %v2789 = vadd.f32 %v2526, %v2647
    %v2790 = vadd.f32 %v2527, %v2647
    %v2791 = vadd.f32 %v2528, %v2647
    %v2792 = vadd.f32 %v2529, %v2647
    %v2793 = vadd.f32 %v2530, %v2647
    %v2794 = vadd.f32 %v2531, %v2647
    %v2795 = vadd.f32 %v2532, %v2647
    %v2796 = vadd.f32 %v2533, %v2647
    %v2797 = vadd.f32 %v2534, %v2647
    %v2798 = vadd.f32 %v2535, %v2647
    %v2799 = vadd.f32 %v2536, %v2647
    %v2800 = vadd.f32 %v2537, %v2647
    %v2801 = vadd.f32 %v2538, %v2647
    %v2802 = vadd.f32 %v2539, %v2647
    %v2803 = vadd.f32 %v2540, %v2647
    %v2804 = vadd.f32 %v2541, %v2647
    %v2805 = vadd.f32 %v2542, %v2647
    %v2806 = vadd.f32 %v2543, %v2647
    %v2807 = vadd.f32 %v2544, %v2647
    %v2808 = vadd.f32 %v2545, %v2647
    %v2809 = vadd.f32 %v2546, %v2647
    %v2810 = vadd.f32 %v2547, %v2647
    %v2811 = vadd.f32 %v2548, %v2647
    %v2812 = vadd.f32 %v2549, %v2647
    %v2813 = vadd.f32 %v2550, %v2647
    %v2814 = vadd.f32 %v2551, %v2647
    %v2815 = vadd.f32 %v2552, %v2647
    %v2816 = vadd.f32 %v2553, %v2647
    %v2817 = vadd.f32 %v2554, %v2647
    %v2818 = vadd.f32 %v2555, %v2647
    %v2819 = vadd.f32 %v2556, %v2647
    %v2820 = vadd.f32 %v2557, %v2647
    %v2821 = vadd.f32 %v2558, %v2647
    %v2822 = vadd.f32 %v2559, %v2647
    %v2823 = vadd.f32 %v2560, %v2647
    %v2824 = vadd.f32 %v2561, %v2647
    %v2825 = vadd.f32 %v2562, %v2647
    %v2826 = vadd.f32 %v2563, %v2647
    %v2827 = vadd.f32 %v2564, %v2647
    %v2828 = vadd.f32 %v2565, %v2647
    %v2829 = vadd.f32 %v2566, %v2647
    %v2830 = vadd.f32 %v2567, %v2647
    %v2831 = vadd.f32 %v2568, %v2647
    %v2832 = vadd.f32 %v2569, %v2647
    %v2833 = vadd.f32 %v2570, %v2647
    %v2834 = vadd.f32 %v2571, %v2647
    %v2835 = vadd.f32 %v2572, %v2647
    %v2836 = vadd.f32 %v2573, %v2647
    %v2837 = vadd.f32 %v2574, %v2647
    %v2838 = vadd.f32 %v2575, %v2647
    %v2839 = vadd.f32 %v2576, %v2647
    %v2840 = vadd.f32 %v2577, %v2647
    %v2841 = vadd.f32 %v2578, %v2647
    %v2842 = vadd.f32 %v2579, %v2647
    %v2843 = vadd.f32 %v2580, %v2647
    %v2844 = vadd.f32 %v2581, %v2647
    %v2845 = vadd.f32 %v2582, %v2647
    %v2846 = vadd.f32 %v2583, %v2647
    %v2847 = vadd.f32 %v2584, %v2647
    %v2848 = vadd.f32 %v2585, %v2647
    %v2849 = vadd.f32 %v2586, %v2647
    %v2850 = vadd.f32 %v2587, %v2647
    %v2851 = vadd.f32 %v2588, %v2647
    %v2852 = vadd.f32 %v2589, %v2647
    %v2853 = vadd.f32 %v2590, %v2647
    %v2854 = vadd.f32 %v2591, %v2647
    %v2855 = vadd.f32 %v2592, %v2647
    %v2856 = vadd.f32 %v2593, %v2647
    %v2857 = vadd.f32 %v2594, %v2647
    %v2858 = vadd.f32 %v2595, %v2647
    %v2859 = vadd.f32 %v2596, %v2647
    %v2860 = vadd.f32 %v2597, %v2647
    %v2861 = vadd.f32 %v2598, %v2647
    %v2862 = vadd.f32 %v2599, %v2647
    %v2863 = vadd.f32 %v2600, %v2647
    %v2864 = vadd.f32 %v2601, %v2647
    %v2865 = vadd.f32 %v2602, %v2647
    %v2866 = vadd.f32 %v2603, %v2647
    %v2867 = vadd.f32 %v2604, %v2647
    %v2868 = vadd.f32 %v2605, %v2647
    %v2869 = vadd.f32 %v2606, %v2647
    %v2870 = vadd.f32 %v2607, %v2647
    %v2871 = vadd.f32 %v2608, %v2647
    %v2872 = vadd.f32 %v2609, %v2647
    %v2873 = vadd.f32 %v2610, %v2647
    %v2874 = vadd.f32 %v2611, %v2647
    %v2875 = vadd.f32 %v2612, %v2647
    %v2876 = vadd.f32 %v2613, %v2647
    %v2877 = vadd.f32 %v2614, %v2647
    %v2878 = vadd.f32 %v2615, %v2647
    %v2879 = vadd.f32 %v2616, %v2647
    %v2880 = vadd.f32 %v2617, %v2647
    %v2881 = vadd.f32 %v2618, %v2647
    %v2882 = vadd.f32 %v2619, %v2647
    %v2883 = vadd.f32 %v2620, %v2647
    %v2884 = vadd.f32 %v2621, %v2647
    %v2885 = vadd.f32 %v2622, %v2647
    %v2886 = vadd.f32 %v2623, %v2647
    %v2887 = vadd.f32 %v2624, %v2647
    %v2888 = vadd.f32 %v2625, %v2647
    %v2889 = vadd.f32 %v2626, %v2647
    %v2890 = vadd.f32 %v2627, %v2647
    %v2891 = vadd.f32 %v2628, %v2647
    %v2892 = vadd.f32 %v2629, %v2647
    %v2893 = vadd.f32 %v2630, %v2647
    %v2894 = vadd.f32 %v2631, %v2647
    %v2895 = vadd.f32 %v2632, %v2647
    %v2896 = vadd.f32 %v2633, %v2647
    %v2897 = vadd.f32 %v2634, %v2647
    %v2898 = vadd.f32 %v2635, %v2647
    %v2899 = vadd.f32 %v2636, %v2647
    %v2900 = vadd.f32 %v2637, %v2647
    %v2901 = vadd.f32 %v2638, %v2647
    %v2902 = vadd.f32 %v2639, %v2647
    %v2903 = vadd.f32 %v2640, %v2647
    %v2904 = vadd.f32 %v2641, %v2647
    %v2905 = vmax.f32 %v2649, 0.0
    %v2906 = vmax.f32 %v2650, 0.0
    %v2907 = vmax.f32 %v2651, 0.0
    %v2908 = vmax.f32 %v2652, 0.0
    %v2909 = vmax.f32 %v2653, 0.0
    %v2910 = vmax.f32 %v2654, 0.0
    %v2911 = vmax.f32 %v2655, 0.0
    %v2912 = vmax.f32 %v2656, 0.0
    %v2913 = vmax.f32 %v2657, 0.0
    %v2914 = vmax.f32 %v2658, 0.0
    %v2915 = vmax.f32 %v2659, 0.0
    %v2916 = vmax.f32 %v2660, 0.0
    %v2917 = vmax.f32 %v2661, 0.0
    %v2918 = vmax.f32 %v2662, 0.0
    %v2919 = vmax.f32 %v2663, 0.0
    %v2920 = vmax.f32 %v2664, 0.0
    %v2921 = vmax.f32 %v2665, 0.0
    %v2922 = vmax.f32 %v2666, 0.0
    %v2923 = vmax.f32 %v2667, 0.0
    %v2924 = vmax.f32 %v2668, 0.0
    %v2925 = vmax.f32 %v2669, 0.0
    %v2926 = vmax.f32 %v2670, 0.0
    %v2927 = vmax.f32 %v2671, 0.0
    %v2928 = vmax.f32 %v2672, 0.0
    %v2929 = vmax.f32 %v2673, 0.0
    %v2930 = vmax.f32 %v2674, 0.0
    %v2931 = vmax.f32 %v2675, 0.0
    %v2932 = vmax.f32 %v2676, 0.0
    %v2933 = vmax.f32 %v2677, 0.0
    %v2934 = vmax.f32 %v2678, 0.0
    %v2935 = vmax.f32 %v2679, 0.0
    %v2936 = vmax.f32 %v2680, 0.0
    %v2937 = vmax.f32 %v2681, 0.0
    %v2938 = vmax.f32 %v2682, 0.0
    %v2939 = vmax.f32 %v2683, 0.0
    %v2940 = vmax.f32 %v2684, 0.0
    %v2941 = vmax.f32 %v2685, 0.0
    %v2942 = vmax.f32 %v2686, 0.0
    %v2943 = vmax.f32 %v2687, 0.0
    %v2944 = vmax.f32 %v2688, 0.0
    %v2945 = vmax.f32 %v2689, 0.0
    %v2946 = vmax.f32 %v2690, 0.0
    %v2947 = vmax.f32 %v2691, 0.0
    %v2948 = vmax.f32 %v2692, 0.0
    %v2949 = vmax.f32 %v2693, 0.0
    %v2950 = vmax.f32 %v2694, 0.0
    %v2951 = vmax.f32 %v2695, 0.0
    %v2952 = vmax.f32 %v2696, 0.0
    %v2953 = vmax.f32 %v2697, 0.0
    %v2954 = vmax.f32 %v2698, 0.0
    %v2955 = vmax.f32 %v2699, 0.0
    %v2956 = vmax.f32 %v2700, 0.0
    %v2957 = vmax.f32 %v2701, 0.0
    %v2958 = vmax.f32 %v2702, 0.0
    %v2959 = vmax.f32 %v2703, 0.0
    %v2960 = vmax.f32 %v2704, 0.0
    %v2961 = vmax.f32 %v2705, 0.0
    %v2962 = vmax.f32 %v2706, 0.0
    %v2963 = vmax.f32 %v2707, 0.0
    %v2964 = vmax.f32 %v2708, 0.0
    %v2965 = vmax.f32 %v2709, 0.0
    %v2966 = vmax.f32 %v2710, 0.0
    %v2967 = vmax.f32 %v2711, 0.0
    %v2968 = vmax.f32 %v2712, 0.0
    %v2969 = vmax.f32 %v2713, 0.0
    %v2970 = vmax.f32 %v2714, 0.0
    %v2971 = vmax.f32 %v2715, 0.0
    %v2972 = vmax.f32 %v2716, 0.0
    %v2973 = vmax.f32 %v2717, 0.0
    %v2974 = vmax.f32 %v2718, 0.0
    %v2975 = vmax.f32 %v2719, 0.0
    %v2976 = vmax.f32 %v2720, 0.0
    %v2977 = vmax.f32 %v2721, 0.0
    %v2978 = vmax.f32 %v2722, 0.0
    %v2979 = vmax.f32 %v2723, 0.0
    %v2980 = vmax.f32 %v2724, 0.0
    %v2981 = vmax.f32 %v2725, 0.0
    %v2982 = vmax.f32 %v2726, 0.0
    %v2983 = vmax.f32 %v2727, 0.0
    %v2984 = vmax.f32 %v2728, 0.0
    %v2985 = vmax.f32 %v2729, 0.0
    %v2986 = vmax.f32 %v2730, 0.0
    %v2987 = vmax.f32 %v2731, 0.0
    %v2988 = vmax.f32 %v2732, 0.0
    %v2989 = vmax.f32 %v2733, 0.0
    %v2990 = vmax.f32 %v2734, 0.0
    %v2991 = vmax.f32 %v2735, 0.0
    %v2992 = vmax.f32 %v2736, 0.0
    %v2993 = vmax.f32 %v2737, 0.0
    %v2994 = vmax.f32 %v2738, 0.0
    %v2995 = vmax.f32 %v2739, 0.0
    %v2996 = vmax.f32 %v2740, 0.0
    %v2997 = vmax.f32 %v2741, 0.0
    %v2998 = vmax.f32 %v2742, 0.0
    %v2999 = vmax.f32 %v2743, 0.0
    %v3000 = vmax.f32 %v2744, 0.0
    %v3001 = vmax.f32 %v2745, 0.0
    %v3002 = vmax.f32 %v2746, 0.0
    %v3003 = vmax.f32 %v2747, 0.0
    %v3004 = vmax.f32 %v2748, 0.0
    %v3005 = vmax.f32 %v2749, 0.0
    %v3006 = vmax.f32 %v2750, 0.0
    %v3007 = vmax.f32 %v2751, 0.0
    %v3008 = vmax.f32 %v2752, 0.0
    %v3009 = vmax.f32 %v2753, 0.0
    %v3010 = vmax.f32 %v2754, 0.0
    %v3011 = vmax.f32 %v2755, 0.0
    %v3012 = vmax.f32 %v2756, 0.0
    %v3013 = vmax.f32 %v2757, 0.0
    %v3014 = vmax.f32 %v2758, 0.0
    %v3015 = vmax.f32 %v2759, 0.0
    %v3016 = vmax.f32 %v2760, 0.0
    %v3017 = vmax.f32 %v2761, 0.0
    %v3018 = vmax.f32 %v2762, 0.0
    %v3019 = vmax.f32 %v2763, 0.0
    %v3020 = vmax.f32 %v2764, 0.0
    %v3021 = vmax.f32 %v2765, 0.0
    %v3022 = vmax.f32 %v2766, 0.0
    %v3023 = vmax.f32 %v2767, 0.0
    %v3024 = vmax.f32 %v2768, 0.0
    %v3025 = vmax.f32 %v2769, 0.0
    %v3026 = vmax.f32 %v2770, 0.0
    %v3027 = vmax.f32 %v2771, 0.0
    %v3028 = vmax.f32 %v2772, 0.0
    %v3029 = vmax.f32 %v2773, 0.0
    %v3030 = vmax.f32 %v2774, 0.0
    %v3031 = vmax.f32 %v2775, 0.0
    %v3032 = vmax.f32 %v2776, 0.0
    %v3033 = vmax.f32 %v2777, 0.0
    %v3034 = vmax.f32 %v2778, 0.0
    %v3035 = vmax.f32 %v2779, 0.0
    %v3036 = vmax.f32 %v2780, 0.0
    %v3037 = vmax.f32 %v2781, 0.0
    %v3038 = vmax.f32 %v2782, 0.0
    %v3039 = vmax.f32 %v2783, 0.0
    %v3040 = vmax.f32 %v2784, 0.0
    %v3041 = vmax.f32 %v2785, 0.0
    %v3042 = vmax.f32 %v2786, 0.0
    %v3043 = vmax.f32 %v2787, 0.0
    %v3044 = vmax.f32 %v2788, 0.0
    %v3045 = vmax.f32 %v2789, 0.0
    %v3046 = vmax.f32 %v2790, 0.0
    %v3047 = vmax.f32 %v2791, 0.0
    %v3048 = vmax.f32 %v2792, 0.0
    %v3049 = vmax.f32 %v2793, 0.0
    %v3050 = vmax.f32 %v2794, 0.0
    %v3051 = vmax.f32 %v2795, 0.0
    %v3052 = vmax.f32 %v2796, 0.0
    %v3053 = vmax.f32 %v2797, 0.0
    %v3054 = vmax.f32 %v2798, 0.0
    %v3055 = vmax.f32 %v2799, 0.0
    %v3056 = vmax.f32 %v2800, 0.0
    %v3057 = vmax.f32 %v2801, 0.0
    %v3058 = vmax.f32 %v2802, 0.0
    %v3059 = vmax.f32 %v2803, 0.0
    %v3060 = vmax.f32 %v2804, 0.0
    %v3061 = vmax.f32 %v2805, 0.0
    %v3062 = vmax.f32 %v2806, 0.0
    %v3063 = vmax.f32 %v2807, 0.0
    %v3064 = vmax.f32 %v2808, 0.0
    %v3065 = vmax.f32 %v2809, 0.0
    %v3066 = vmax.f32 %v2810, 0.0
    %v3067 = vmax.f32 %v2811, 0.0
    %v3068 = vmax.f32 %v2812, 0.0
    %v3069 = vmax.f32 %v2813, 0.0
    %v3070 = vmax.f32 %v2814, 0.0
    %v3071 = vmax.f32 %v2815, 0.0
    %v3072 = vmax.f32 %v2816, 0.0
    %v3073 = vmax.f32 %v2817, 0.0
    %v3074 = vmax.f32 %v2818, 0.0
    %v3075 = vmax.f32 %v2819, 0.0
    %v3076 = vmax.f32 %v2820, 0.0
    %v3077 = vmax.f32 %v2821, 0.0
    %v3078 = vmax.f32 %v2822, 0.0
    %v3079 = vmax.f32 %v2823, 0.0
    %v3080 = vmax.f32 %v2824, 0.0
    %v3081 = vmax.f32 %v2825, 0.0
    %v3082 = vmax.f32 %v2826, 0.0
    %v3083 = vmax.f32 %v2827, 0.0
    %v3084 = vmax.f32 %v2828, 0.0
    %v3085 = vmax.f32 %v2829, 0.0
    %v3086 = vmax.f32 %v2830, 0.0
    %v3087 = vmax.f32 %v2831, 0.0
    %v3088 = vmax.f32 %v2832, 0.0
    %v3089 = vmax.f32 %v2833, 0.0
    %v3090 = vmax.f32 %v2834, 0.0
    %v3091 = vmax.f32 %v2835, 0.0
    %v3092 = vmax.f32 %v2836, 0.0
    %v3093 = vmax.f32 %v2837, 0.0
    %v3094 = vmax.f32 %v2838, 0.0
    %v3095 = vmax.f32 %v2839, 0.0
    %v3096 = vmax.f32 %v2840, 0.0
    %v3097 = vmax.f32 %v2841, 0.0
    %v3098 = vmax.f32 %v2842, 0.0
    %v3099 = vmax.f32 %v2843, 0.0
    %v3100 = vmax.f32 %v2844, 0.0
    %v3101 = vmax.f32 %v2845, 0.0
    %v3102 = vmax.f32 %v2846, 0.0
    %v3103 = vmax.f32 %v2847, 0.0
    %v3104 = vmax.f32 %v2848, 0.0
    %v3105 = vmax.f32 %v2849, 0.0
    %v3106 = vmax.f32 %v2850, 0.0
    %v3107 = vmax.f32 %v2851, 0.0
    %v3108 = vmax.f32 %v2852, 0.0
    %v3109 = vmax.f32 %v2853, 0.0
    %v3110 = vmax.f32 %v2854, 0.0
    %v3111 = vmax.f32 %v2855, 0.0
    %v3112 = vmax.f32 %v2856, 0.0
    %v3113 = vmax.f32 %v2857, 0.0
    %v3114 = vmax.f32 %v2858, 0.0
    %v3115 = vmax.f32 %v2859, 0.0
    %v3116 = vmax.f32 %v2860, 0.0
    %v3117 = vmax.f32 %v2861, 0.0
    %v3118 = vmax.f32 %v2862, 0.0
    %v3119 = vmax.f32 %v2863, 0.0
    %v3120 = vmax.f32 %v2864, 0.0
    %v3121 = vmax.f32 %v2865, 0.0
    %v3122 = vmax.f32 %v2866, 0.0
    %v3123 = vmax.f32 %v2867, 0.0
    %v3124 = vmax.f32 %v2868, 0.0
    %v3125 = vmax.f32 %v2869, 0.0
    %v3126 = vmax.f32 %v2870, 0.0
    %v3127 = vmax.f32 %v2871, 0.0
    %v3128 = vmax.f32 %v2872, 0.0
    %v3129 = vmax.f32 %v2873, 0.0
    %v3130 = vmax.f32 %v2874, 0.0
    %v3131 = vmax.f32 %v2875, 0.0
    %v3132 = vmax.f32 %v2876, 0.0
    %v3133 = vmax.f32 %v2877, 0.0
    %v3134 = vmax.f32 %v2878, 0.0
    %v3135 = vmax.f32 %v2879, 0.0
    %v3136 = vmax.f32 %v2880, 0.0
    %v3137 = vmax.f32 %v2881, 0.0
    %v3138 = vmax.f32 %v2882, 0.0
    %v3139 = vmax.f32 %v2883, 0.0
    %v3140 = vmax.f32 %v2884, 0.0
    %v3141 = vmax.f32 %v2885, 0.0
    %v3142 = vmax.f32 %v2886, 0.0
    %v3143 = vmax.f32 %v2887, 0.0
    %v3144 = vmax.f32 %v2888, 0.0
    %v3145 = vmax.f32 %v2889, 0.0
    %v3146 = vmax.f32 %v2890, 0.0
    %v3147 = vmax.f32 %v2891, 0.0
    %v3148 = vmax.f32 %v2892, 0.0
    %v3149 = vmax.f32 %v2893, 0.0
    %v3150 = vmax.f32 %v2894, 0.0
    %v3151 = vmax.f32 %v2895, 0.0
    %v3152 = vmax.f32 %v2896, 0.0
    %v3153 = vmax.f32 %v2897, 0.0
    %v3154 = vmax.f32 %v2898, 0.0
    %v3155 = vmax.f32 %v2899, 0.0
    %v3156 = vmax.f32 %v2900, 0.0
    %v3157 = vmax.f32 %v2901, 0.0
    %v3158 = vmax.f32 %v2902, 0.0
    %v3159 = vmax.f32 %v2903, 0.0
    %v3160 = vmax.f32 %v2904, 0.0
    %v3161 = vlaneseq
    %v3162 = vand.u32 %v3161, 127
    %v3163 = vadd.s32 %v3162, 128
    %v3164 = vadd.s32 %v3162, 256
    %v3165 = vadd.s32 %v3162, 384
    %v3166 = vadd.s32 %v3162, 512
    %v3167 = vadd.s32 %v3162, 640
    %v3168 = vadd.s32 %v3162, 768
    %v3169 = vadd.s32 %v3162, 896
    %v3170 = vadd.s32 %v3162, 1024
    %v3171 = vadd.s32 %v3162, 1152
    %v3172 = vadd.s32 %v3162, 1280
    %v3173 = vadd.s32 %v3162, 1408
    %v3174 = vadd.s32 %v3162, 1536
    %v3175 = vadd.s32 %v3162, 1664
    %v3176 = vadd.s32 %v3162, 1792
    %v3177 = vadd.s32 %v3162, 1920
    %v3178 = vlaneseq
    %v3179 = vshrl.u32 %v3178, 7
    %v3180 = vmul.u32 %v3179, 1024
    %vm3181 = vcmp.ge.s32.totalorder %v3162, %v3180
    %vm3182 = vcmp.ge.s32.totalorder %v3163, %v3180
    %vm3183 = vcmp.ge.s32.totalorder %v3164, %v3180
    %vm3184 = vcmp.ge.s32.totalorder %v3165, %v3180
    %vm3185 = vcmp.ge.s32.totalorder %v3166, %v3180
    %vm3186 = vcmp.ge.s32.totalorder %v3167, %v3180
    %vm3187 = vcmp.ge.s32.totalorder %v3168, %v3180
    %vm3188 = vcmp.ge.s32.totalorder %v3169, %v3180
    %vm3189 = vcmp.ge.s32.totalorder %v3170, %v3180
    %vm3190 = vcmp.ge.s32.totalorder %v3171, %v3180
    %vm3191 = vcmp.ge.s32.totalorder %v3172, %v3180
    %vm3192 = vcmp.ge.s32.totalorder %v3173, %v3180
    %vm3193 = vcmp.ge.s32.totalorder %v3174, %v3180
    %vm3194 = vcmp.ge.s32.totalorder %v3175, %v3180
    %vm3195 = vcmp.ge.s32.totalorder %v3176, %v3180
    %vm3196 = vcmp.ge.s32.totalorder %v3177, %v3180
    %v3197 = vadd.s32 %v3179, 1
    %v3198 = vmul.u32 %v3197, 1024
    %vm3199 = vcmp.lt.s32.totalorder %v3162, %v3198
    %vm3200 = vcmp.lt.s32.totalorder %v3163, %v3198
    %vm3201 = vcmp.lt.s32.totalorder %v3164, %v3198
    %vm3202 = vcmp.lt.s32.totalorder %v3165, %v3198
    %vm3203 = vcmp.lt.s32.totalorder %v3166, %v3198
    %vm3204 = vcmp.lt.s32.totalorder %v3167, %v3198
    %vm3205 = vcmp.lt.s32.totalorder %v3168, %v3198
    %vm3206 = vcmp.lt.s32.totalorder %v3169, %v3198
    %vm3207 = vcmp.lt.s32.totalorder %v3170, %v3198
    %vm3208 = vcmp.lt.s32.totalorder %v3171, %v3198
    %vm3209 = vcmp.lt.s32.totalorder %v3172, %v3198
    %vm3210 = vcmp.lt.s32.totalorder %v3173, %v3198
    %vm3211 = vcmp.lt.s32.totalorder %v3174, %v3198
    %vm3212 = vcmp.lt.s32.totalorder %v3175, %v3198
    %vm3213 = vcmp.lt.s32.totalorder %v3176, %v3198
    %vm3214 = vcmp.lt.s32.totalorder %v3177, %v3198
    %vm3215 = vmand %vm3181, %vm3199
    %vm3216 = vmand %vm3182, %vm3200
    %vm3217 = vmand %vm3183, %vm3201
    %vm3218 = vmand %vm3184, %vm3202
    %vm3219 = vmand %vm3185, %vm3203
    %vm3220 = vmand %vm3186, %vm3204
    %vm3221 = vmand %vm3187, %vm3205
    %vm3222 = vmand %vm3188, %vm3206
    %vm3223 = vmand %vm3189, %vm3207
    %vm3224 = vmand %vm3190, %vm3208
    %vm3225 = vmand %vm3191, %vm3209
    %vm3226 = vmand %vm3192, %vm3210
    %vm3227 = vmand %vm3193, %vm3211
    %vm3228 = vmand %vm3194, %vm3212
    %vm3229 = vmand %vm3195, %vm3213
    %vm3230 = vmand %vm3196, %vm3214
    %v3231 = vsel %vm3215, 0.0009765625, 0.0
    %v3232 = vsel %vm3216, 0.0009765625, 0.0
    %v3233 = vsel %vm3217, 0.0009765625, 0.0
    %v3234 = vsel %vm3218, 0.0009765625, 0.0
    %v3235 = vsel %vm3219, 0.0009765625, 0.0
    %v3236 = vsel %vm3220, 0.0009765625, 0.0
    %v3237 = vsel %vm3221, 0.0009765625, 0.0
    %v3238 = vsel %vm3222, 0.0009765625, 0.0
    %v3239 = vsel %vm3223, 0.0009765625, 0.0
    %v3240 = vsel %vm3224, 0.0009765625, 0.0
    %v3241 = vsel %vm3225, 0.0009765625, 0.0
    %v3242 = vsel %vm3226, 0.0009765625, 0.0
    %v3243 = vsel %vm3227, 0.0009765625, 0.0
    %v3244 = vsel %vm3228, 0.0009765625, 0.0
    %v3245 = vsel %vm3229, 0.0009765625, 0.0
    %v3246 = vsel %vm3230, 0.0009765625, 0.0
    %3247 = vmatprep.subr.mxu0 0.0
    %3248 = vmatpush1.msra.mxu0 %v2905
    %3249 = vmatprep.subr.mxu0 0.0
    %3250 = vmatpush1.msra.mxu0 %v2906
    %3251 = vmatprep.subr.mxu0 0.0
    %3252 = vmatpush1.msra.mxu0 %v2907
    %3253 = vmatprep.subr.mxu0 0.0
    %3254 = vmatpush1.msra.mxu0 %v2908
    %3255 = vmatprep.subr.mxu0 0.0
    %3256 = vmatpush1.msra.mxu0 %v2909
    %3257 = vmatprep.subr.mxu0 0.0
    %3258 = vmatpush1.msra.mxu0 %v2910
    %3259 = vmatprep.subr.mxu0 0.0
    %3260 = vmatpush1.msra.mxu0 %v2911
    %3261 = vmatprep.subr.mxu0 0.0
    %3262 = vmatpush1.msra.mxu0 %v2912
    %3263 = vmatprep.subr.mxu0 0.0
    %3264 = vmatpush1.msra.mxu0 %v2913
    %3265 = vmatprep.subr.mxu0 0.0
    %3266 = vmatpush1.msra.mxu0 %v2914
    %3267 = vmatprep.subr.mxu0 0.0
    %3268 = vmatpush1.msra.mxu0 %v2915
    %3269 = vmatprep.subr.mxu0 0.0
    %3270 = vmatpush1.msra.mxu0 %v2916
    %3271 = vmatprep.subr.mxu0 0.0
    %3272 = vmatpush1.msra.mxu0 %v2917
    %3273 = vmatprep.subr.mxu0 0.0
    %3274 = vmatpush1.msra.mxu0 %v2918
    %3275 = vmatprep.subr.mxu0 0.0
    %3276 = vmatpush1.msra.mxu0 %v2919
    %3277 = vmatprep.subr.mxu0 0.0
    %3278 = vmatpush1.msra.mxu0 %v2920
    %3279 = vmatprep.subr.mxu0 0.0
    %3280 = vmatpush1.msra.mxu0 %v2921
    %3281 = vmatprep.subr.mxu0 0.0
    %3282 = vmatpush1.msra.mxu0 %v2922
    %3283 = vmatprep.subr.mxu0 0.0
    %3284 = vmatpush1.msra.mxu0 %v2923
    %3285 = vmatprep.subr.mxu0 0.0
    %3286 = vmatpush1.msra.mxu0 %v2924
    %3287 = vmatprep.subr.mxu0 0.0
    %3288 = vmatpush1.msra.mxu0 %v2925
    %3289 = vmatprep.subr.mxu0 0.0
    %3290 = vmatpush1.msra.mxu0 %v2926
    %3291 = vmatprep.subr.mxu0 0.0
    %3292 = vmatpush1.msra.mxu0 %v2927
    %3293 = vmatprep.subr.mxu0 0.0
    %3294 = vmatpush1.msra.mxu0 %v2928
    %3295 = vmatprep.subr.mxu0 0.0
    %3296 = vmatpush1.msra.mxu0 %v2929
    %3297 = vmatprep.subr.mxu0 0.0
    %3298 = vmatpush1.msra.mxu0 %v2930
    %3299 = vmatprep.subr.mxu0 0.0
    %3300 = vmatpush1.msra.mxu0 %v2931
    %3301 = vmatprep.subr.mxu0 0.0
    %3302 = vmatpush1.msra.mxu0 %v2932
    %3303 = vmatprep.subr.mxu0 0.0
    %3304 = vmatpush1.msra.mxu0 %v2933
    %3305 = vmatprep.subr.mxu0 0.0
    %3306 = vmatpush1.msra.mxu0 %v2934
    %3307 = vmatprep.subr.mxu0 0.0
    %3308 = vmatpush1.msra.mxu0 %v2935
    %3309 = vmatprep.subr.mxu0 0.0
    %3310 = vmatpush1.msra.mxu0 %v2936
    %3311 = vmatprep.mubr.f32.mxu0 %v3232
    %3312 = vmatmul.mubr.f32.gmra.mrb[0].mxu0 %v3231
    %v3313 = vpop.f32.mrb[0].mxu0
    %v3314 = vadd.f32 0.0, %v3313
    %v3315 = vpop.f32.mrb[0].mxu0
    %3316 = vdwg.mxu0
    %3317 = vmatprep.subr.mxu0 0.0
    %3318 = vmatpush1.msra.mxu0 %v2937
    %3319 = vmatprep.subr.mxu0 0.0
    %3320 = vmatpush1.msra.mxu0 %v2938
    %3321 = vmatprep.subr.mxu0 0.0
    %3322 = vmatpush1.msra.mxu0 %v2939
    %3323 = vmatprep.subr.mxu0 0.0
    %3324 = vmatpush1.msra.mxu0 %v2940
    %3325 = vmatprep.subr.mxu0 0.0
    %3326 = vmatpush1.msra.mxu0 %v2941
    %3327 = vmatprep.subr.mxu0 0.0
    %3328 = vmatpush1.msra.mxu0 %v2942
    %3329 = vmatprep.subr.mxu0 0.0
    %3330 = vmatpush1.msra.mxu0 %v2943
    %3331 = vmatprep.subr.mxu0 0.0
    %3332 = vmatpush1.msra.mxu0 %v2944
    %3333 = vmatprep.subr.mxu0 0.0
    %3334 = vmatpush1.msra.mxu0 %v2945
    %3335 = vmatprep.subr.mxu0 0.0
    %3336 = vmatpush1.msra.mxu0 %v2946
    %3337 = vmatprep.subr.mxu0 0.0
    %3338 = vmatpush1.msra.mxu0 %v2947
    %3339 = vmatprep.subr.mxu0 0.0
    %3340 = vmatpush1.msra.mxu0 %v2948
    %3341 = vmatprep.subr.mxu0 0.0
    %3342 = vmatpush1.msra.mxu0 %v2949
    %3343 = vmatprep.subr.mxu0 0.0
    %3344 = vmatpush1.msra.mxu0 %v2950
    %3345 = vmatprep.subr.mxu0 0.0
    %3346 = vmatpush1.msra.mxu0 %v2951
    %3347 = vmatprep.subr.mxu0 0.0
    %3348 = vmatpush1.msra.mxu0 %v2952
    %3349 = vmatprep.subr.mxu0 0.0
    %3350 = vmatpush1.msra.mxu0 %v2953
    %3351 = vmatprep.subr.mxu0 0.0
    %3352 = vmatpush1.msra.mxu0 %v2954
    %3353 = vmatprep.subr.mxu0 0.0
    %3354 = vmatpush1.msra.mxu0 %v2955
    %3355 = vmatprep.subr.mxu0 0.0
    %3356 = vmatpush1.msra.mxu0 %v2956
    %3357 = vmatprep.subr.mxu0 0.0
    %3358 = vmatpush1.msra.mxu0 %v2957
    %3359 = vmatprep.subr.mxu0 0.0
    %3360 = vmatpush1.msra.mxu0 %v2958
    %3361 = vmatprep.subr.mxu0 0.0
    %3362 = vmatpush1.msra.mxu0 %v2959
    %3363 = vmatprep.subr.mxu0 0.0
    %3364 = vmatpush1.msra.mxu0 %v2960
    %3365 = vmatprep.subr.mxu0 0.0
    %3366 = vmatpush1.msra.mxu0 %v2961
    %3367 = vmatprep.subr.mxu0 0.0
    %3368 = vmatpush1.msra.mxu0 %v2962
    %3369 = vmatprep.subr.mxu0 0.0
    %3370 = vmatpush1.msra.mxu0 %v2963
    %3371 = vmatprep.subr.mxu0 0.0
    %3372 = vmatpush1.msra.mxu0 %v2964
    %3373 = vmatprep.subr.mxu0 0.0
    %3374 = vmatpush1.msra.mxu0 %v2965
    %3375 = vmatprep.subr.mxu0 0.0
    %3376 = vmatpush1.msra.mxu0 %v2966
    %3377 = vmatprep.subr.mxu0 0.0
    %3378 = vmatpush1.msra.mxu0 %v2967
    %3379 = vmatprep.subr.mxu0 0.0
    %3380 = vmatpush1.msra.mxu0 %v2968
    %3381 = vmatprep.mubr.f32.mxu0 %v3234
    %3382 = vmatmul.mubr.f32.gmra.mrb[0].mxu0 %v3233
    %v3383 = vpop.f32.mrb[0].mxu0
    %v3384 = vadd.f32 %v3314, %v3383
    %v3385 = vpop.f32.mrb[0].mxu0
    %3386 = vdwg.mxu0
    %3387 = vmatprep.subr.mxu0 0.0
    %3388 = vmatpush1.msra.mxu0 %v2969
    %3389 = vmatprep.subr.mxu0 0.0
    %3390 = vmatpush1.msra.mxu0 %v2970
    %3391 = vmatprep.subr.mxu0 0.0
    %3392 = vmatpush1.msra.mxu0 %v2971
    %3393 = vmatprep.subr.mxu0 0.0
    %3394 = vmatpush1.msra.mxu0 %v2972
    %3395 = vmatprep.subr.mxu0 0.0
    %3396 = vmatpush1.msra.mxu0 %v2973
    %3397 = vmatprep.subr.mxu0 0.0
    %3398 = vmatpush1.msra.mxu0 %v2974
    %3399 = vmatprep.subr.mxu0 0.0
    %3400 = vmatpush1.msra.mxu0 %v2975
    %3401 = vmatprep.subr.mxu0 0.0
    %3402 = vmatpush1.msra.mxu0 %v2976
    %3403 = vmatprep.subr.mxu0 0.0
    %3404 = vmatpush1.msra.mxu0 %v2977
    %3405 = vmatprep.subr.mxu0 0.0
    %3406 = vmatpush1.msra.mxu0 %v2978
    %3407 = vmatprep.subr.mxu0 0.0
    %3408 = vmatpush1.msra.mxu0 %v2979
    %3409 = vmatprep.subr.mxu0 0.0
    %3410 = vmatpush1.msra.mxu0 %v2980
    %3411 = vmatprep.subr.mxu0 0.0
    %3412 = vmatpush1.msra.mxu0 %v2981
    %3413 = vmatprep.subr.mxu0 0.0
    %3414 = vmatpush1.msra.mxu0 %v2982
    %3415 = vmatprep.subr.mxu0 0.0
    %3416 = vmatpush1.msra.mxu0 %v2983
    %3417 = vmatprep.subr.mxu0 0.0
    %3418 = vmatpush1.msra.mxu0 %v2984
    %3419 = vmatprep.subr.mxu0 0.0
    %3420 = vmatpush1.msra.mxu0 %v2985
    %3421 = vmatprep.subr.mxu0 0.0
    %3422 = vmatpush1.msra.mxu0 %v2986
    %3423 = vmatprep.subr.mxu0 0.0
    %3424 = vmatpush1.msra.mxu0 %v2987
    %3425 = vmatprep.subr.mxu0 0.0
    %3426 = vmatpush1.msra.mxu0 %v2988
    %3427 = vmatprep.subr.mxu0 0.0
    %3428 = vmatpush1.msra.mxu0 %v2989
    %3429 = vmatprep.subr.mxu0 0.0
    %3430 = vmatpush1.msra.mxu0 %v2990
    %3431 = vmatprep.subr.mxu0 0.0
    %3432 = vmatpush1.msra.mxu0 %v2991
    %3433 = vmatprep.subr.mxu0 0.0
    %3434 = vmatpush1.msra.mxu0 %v2992
    %3435 = vmatprep.subr.mxu0 0.0
    %3436 = vmatpush1.msra.mxu0 %v2993
    %3437 = vmatprep.subr.mxu0 0.0
    %3438 = vmatpush1.msra.mxu0 %v2994
    %3439 = vmatprep.subr.mxu0 0.0
    %3440 = vmatpush1.msra.mxu0 %v2995
    %3441 = vmatprep.subr.mxu0 0.0
    %3442 = vmatpush1.msra.mxu0 %v2996
    %3443 = vmatprep.subr.mxu0 0.0
    %3444 = vmatpush1.msra.mxu0 %v2997
    %3445 = vmatprep.subr.mxu0 0.0
    %3446 = vmatpush1.msra.mxu0 %v2998
    %3447 = vmatprep.subr.mxu0 0.0
    %3448 = vmatpush1.msra.mxu0 %v2999
    %3449 = vmatprep.subr.mxu0 0.0
    %3450 = vmatpush1.msra.mxu0 %v3000
    %3451 = vmatprep.mubr.f32.mxu0 %v3236
    %3452 = vmatmul.mubr.f32.gmra.mrb[0].mxu0 %v3235
    %v3453 = vpop.f32.mrb[0].mxu0
    %v3454 = vadd.f32 %v3384, %v3453
    %v3455 = vpop.f32.mrb[0].mxu0
    %3456 = vdwg.mxu0
    %3457 = vmatprep.subr.mxu0 0.0
    %3458 = vmatpush1.msra.mxu0 %v3001
    %3459 = vmatprep.subr.mxu0 0.0
    %3460 = vmatpush1.msra.mxu0 %v3002
    %3461 = vmatprep.subr.mxu0 0.0
    %3462 = vmatpush1.msra.mxu0 %v3003
    %3463 = vmatprep.subr.mxu0 0.0
    %3464 = vmatpush1.msra.mxu0 %v3004
    %3465 = vmatprep.subr.mxu0 0.0
    %3466 = vmatpush1.msra.mxu0 %v3005
    %3467 = vmatprep.subr.mxu0 0.0
    %3468 = vmatpush1.msra.mxu0 %v3006
    %3469 = vmatprep.subr.mxu0 0.0
    %3470 = vmatpush1.msra.mxu0 %v3007
    %3471 = vmatprep.subr.mxu0 0.0
    %3472 = vmatpush1.msra.mxu0 %v3008
    %3473 = vmatprep.subr.mxu0 0.0
    %3474 = vmatpush1.msra.mxu0 %v3009
    %3475 = vmatprep.subr.mxu0 0.0
    %3476 = vmatpush1.msra.mxu0 %v3010
    %3477 = vmatprep.subr.mxu0 0.0
    %3478 = vmatpush1.msra.mxu0 %v3011
    %3479 = vmatprep.subr.mxu0 0.0
    %3480 = vmatpush1.msra.mxu0 %v3012
    %3481 = vmatprep.subr.mxu0 0.0
    %3482 = vmatpush1.msra.mxu0 %v3013
    %3483 = vmatprep.subr.mxu0 0.0
    %3484 = vmatpush1.msra.mxu0 %v3014
    %3485 = vmatprep.subr.mxu0 0.0
    %3486 = vmatpush1.msra.mxu0 %v3015
    %3487 = vmatprep.subr.mxu0 0.0
    %3488 = vmatpush1.msra.mxu0 %v3016
    %3489 = vmatprep.subr.mxu0 0.0
    %3490 = vmatpush1.msra.mxu0 %v3017
    %3491 = vmatprep.subr.mxu0 0.0
    %3492 = vmatpush1.msra.mxu0 %v3018
    %3493 = vmatprep.subr.mxu0 0.0
    %3494 = vmatpush1.msra.mxu0 %v3019
    %3495 = vmatprep.subr.mxu0 0.0
    %3496 = vmatpush1.msra.mxu0 %v3020
    %3497 = vmatprep.subr.mxu0 0.0
    %3498 = vmatpush1.msra.mxu0 %v3021
    %3499 = vmatprep.subr.mxu0 0.0
    %3500 = vmatpush1.msra.mxu0 %v3022
    %3501 = vmatprep.subr.mxu0 0.0
    %3502 = vmatpush1.msra.mxu0 %v3023
    %3503 = vmatprep.subr.mxu0 0.0
    %3504 = vmatpush1.msra.mxu0 %v3024
    %3505 = vmatprep.subr.mxu0 0.0
    %3506 = vmatpush1.msra.mxu0 %v3025
    %3507 = vmatprep.subr.mxu0 0.0
    %3508 = vmatpush1.msra.mxu0 %v3026
    %3509 = vmatprep.subr.mxu0 0.0
    %3510 = vmatpush1.msra.mxu0 %v3027
    %3511 = vmatprep.subr.mxu0 0.0
    %3512 = vmatpush1.msra.mxu0 %v3028
    %3513 = vmatprep.subr.mxu0 0.0
    %3514 = vmatpush1.msra.mxu0 %v3029
    %3515 = vmatprep.subr.mxu0 0.0
    %3516 = vmatpush1.msra.mxu0 %v3030
    %3517 = vmatprep.subr.mxu0 0.0
    %3518 = vmatpush1.msra.mxu0 %v3031
    %3519 = vmatprep.subr.mxu0 0.0
    %3520 = vmatpush1.msra.mxu0 %v3032
    %3521 = vmatprep.mubr.f32.mxu0 %v3238
    %3522 = vmatmul.mubr.f32.gmra.mrb[0].mxu0 %v3237
    %v3523 = vpop.f32.mrb[0].mxu0
    %v3524 = vadd.f32 %v3454, %v3523
    %v3525 = vpop.f32.mrb[0].mxu0
    %3526 = vdwg.mxu0
    %3527 = vmatprep.subr.mxu0 0.0
    %3528 = vmatpush1.msra.mxu0 %v3033
    %3529 = vmatprep.subr.mxu0 0.0
    %3530 = vmatpush1.msra.mxu0 %v3034
    %3531 = vmatprep.subr.mxu0 0.0
    %3532 = vmatpush1.msra.mxu0 %v3035
    %3533 = vmatprep.subr.mxu0 0.0
    %3534 = vmatpush1.msra.mxu0 %v3036
    %3535 = vmatprep.subr.mxu0 0.0
    %3536 = vmatpush1.msra.mxu0 %v3037
    %3537 = vmatprep.subr.mxu0 0.0
    %3538 = vmatpush1.msra.mxu0 %v3038
    %3539 = vmatprep.subr.mxu0 0.0
    %3540 = vmatpush1.msra.mxu0 %v3039
    %3541 = vmatprep.subr.mxu0 0.0
    %3542 = vmatpush1.msra.mxu0 %v3040
    %3543 = vmatprep.subr.mxu0 0.0
    %3544 = vmatpush1.msra.mxu0 %v3041
    %3545 = vmatprep.subr.mxu0 0.0
    %3546 = vmatpush1.msra.mxu0 %v3042
    %3547 = vmatprep.subr.mxu0 0.0
    %3548 = vmatpush1.msra.mxu0 %v3043
    %3549 = vmatprep.subr.mxu0 0.0
    %3550 = vmatpush1.msra.mxu0 %v3044
    %3551 = vmatprep.subr.mxu0 0.0
    %3552 = vmatpush1.msra.mxu0 %v3045
    %3553 = vmatprep.subr.mxu0 0.0
    %3554 = vmatpush1.msra.mxu0 %v3046
    %3555 = vmatprep.subr.mxu0 0.0
    %3556 = vmatpush1.msra.mxu0 %v3047
    %3557 = vmatprep.subr.mxu0 0.0
    %3558 = vmatpush1.msra.mxu0 %v3048
    %3559 = vmatprep.subr.mxu0 0.0
    %3560 = vmatpush1.msra.mxu0 %v3049
    %3561 = vmatprep.subr.mxu0 0.0
    %3562 = vmatpush1.msra.mxu0 %v3050
    %3563 = vmatprep.subr.mxu0 0.0
    %3564 = vmatpush1.msra.mxu0 %v3051
    %3565 = vmatprep.subr.mxu0 0.0
    %3566 = vmatpush1.msra.mxu0 %v3052
    %3567 = vmatprep.subr.mxu0 0.0
    %3568 = vmatpush1.msra.mxu0 %v3053
    %3569 = vmatprep.subr.mxu0 0.0
    %3570 = vmatpush1.msra.mxu0 %v3054
    %3571 = vmatprep.subr.mxu0 0.0
    %3572 = vmatpush1.msra.mxu0 %v3055
    %3573 = vmatprep.subr.mxu0 0.0
    %3574 = vmatpush1.msra.mxu0 %v3056
    %3575 = vmatprep.subr.mxu0 0.0
    %3576 = vmatpush1.msra.mxu0 %v3057
    %3577 = vmatprep.subr.mxu0 0.0
    %3578 = vmatpush1.msra.mxu0 %v3058
    %3579 = vmatprep.subr.mxu0 0.0
    %3580 = vmatpush1.msra.mxu0 %v3059
    %3581 = vmatprep.subr.mxu0 0.0
    %3582 = vmatpush1.msra.mxu0 %v3060
    %3583 = vmatprep.subr.mxu0 0.0
    %3584 = vmatpush1.msra.mxu0 %v3061
    %3585 = vmatprep.subr.mxu0 0.0
    %3586 = vmatpush1.msra.mxu0 %v3062
    %3587 = vmatprep.subr.mxu0 0.0
    %3588 = vmatpush1.msra.mxu0 %v3063
    %3589 = vmatprep.subr.mxu0 0.0
    %3590 = vmatpush1.msra.mxu0 %v3064
    %3591 = vmatprep.mubr.f32.mxu0 %v3240
    %3592 = vmatmul.mubr.f32.gmra.mrb[0].mxu0 %v3239
    %v3593 = vpop.f32.mrb[0].mxu0
    %v3594 = vadd.f32 %v3524, %v3593
    %v3595 = vpop.f32.mrb[0].mxu0
    %3596 = vdwg.mxu0
    %3597 = vmatprep.subr.mxu0 0.0
    %3598 = vmatpush1.msra.mxu0 %v3065
    %3599 = vmatprep.subr.mxu0 0.0
    %3600 = vmatpush1.msra.mxu0 %v3066
    %3601 = vmatprep.subr.mxu0 0.0
    %3602 = vmatpush1.msra.mxu0 %v3067
    %3603 = vmatprep.subr.mxu0 0.0
    %3604 = vmatpush1.msra.mxu0 %v3068
    %3605 = vmatprep.subr.mxu0 0.0
    %3606 = vmatpush1.msra.mxu0 %v3069
    %3607 = vmatprep.subr.mxu0 0.0
    %3608 = vmatpush1.msra.mxu0 %v3070
    %3609 = vmatprep.subr.mxu0 0.0
    %3610 = vmatpush1.msra.mxu0 %v3071
    %3611 = vmatprep.subr.mxu0 0.0
    %3612 = vmatpush1.msra.mxu0 %v3072
    %3613 = vmatprep.subr.mxu0 0.0
    %3614 = vmatpush1.msra.mxu0 %v3073
    %3615 = vmatprep.subr.mxu0 0.0
    %3616 = vmatpush1.msra.mxu0 %v3074
    %3617 = vmatprep.subr.mxu0 0.0
    %3618 = vmatpush1.msra.mxu0 %v3075
    %3619 = vmatprep.subr.mxu0 0.0
    %3620 = vmatpush1.msra.mxu0 %v3076
    %3621 = vmatprep.subr.mxu0 0.0
    %3622 = vmatpush1.msra.mxu0 %v3077
    %3623 = vmatprep.subr.mxu0 0.0
    %3624 = vmatpush1.msra.mxu0 %v3078
    %3625 = vmatprep.subr.mxu0 0.0
    %3626 = vmatpush1.msra.mxu0 %v3079
    %3627 = vmatprep.subr.mxu0 0.0
    %3628 = vmatpush1.msra.mxu0 %v3080
    %3629 = vmatprep.subr.mxu0 0.0
    %3630 = vmatpush1.msra.mxu0 %v3081
    %3631 = vmatprep.subr.mxu0 0.0
    %3632 = vmatpush1.msra.mxu0 %v3082
    %3633 = vmatprep.subr.mxu0 0.0
    %3634 = vmatpush1.msra.mxu0 %v3083
    %3635 = vmatprep.subr.mxu0 0.0
    %3636 = vmatpush1.msra.mxu0 %v3084
    %3637 = vmatprep.subr.mxu0 0.0
    %3638 = vmatpush1.msra.mxu0 %v3085
    %3639 = vmatprep.subr.mxu0 0.0
    %3640 = vmatpush1.msra.mxu0 %v3086
    %3641 = vmatprep.subr.mxu0 0.0
    %3642 = vmatpush1.msra.mxu0 %v3087
    %3643 = vmatprep.subr.mxu0 0.0
    %3644 = vmatpush1.msra.mxu0 %v3088
    %3645 = vmatprep.subr.mxu0 0.0
    %3646 = vmatpush1.msra.mxu0 %v3089
    %3647 = vmatprep.subr.mxu0 0.0
    %3648 = vmatpush1.msra.mxu0 %v3090
    %3649 = vmatprep.subr.mxu0 0.0
    %3650 = vmatpush1.msra.mxu0 %v3091
    %3651 = vmatprep.subr.mxu0 0.0
    %3652 = vmatpush1.msra.mxu0 %v3092
    %3653 = vmatprep.subr.mxu0 0.0
    %3654 = vmatpush1.msra.mxu0 %v3093
    %3655 = vmatprep.subr.mxu0 0.0
    %3656 = vmatpush1.msra.mxu0 %v3094
    %3657 = vmatprep.subr.mxu0 0.0
    %3658 = vmatpush1.msra.mxu0 %v3095
    %3659 = vmatprep.subr.mxu0 0.0
    %3660 = vmatpush1.msra.mxu0 %v3096
    %3661 = vmatprep.mubr.f32.mxu0 %v3242
    %3662 = vmatmul.mubr.f32.gmra.mrb[0].mxu0 %v3241
    %v3663 = vpop.f32.mrb[0].mxu0
    %v3664 = vadd.f32 %v3594, %v3663
    %v3665 = vpop.f32.mrb[0].mxu0
    %3666 = vdwg.mxu0
    %3667 = vmatprep.subr.mxu0 0.0
    %3668 = vmatpush1.msra.mxu0 %v3097
    %3669 = vmatprep.subr.mxu0 0.0
    %3670 = vmatpush1.msra.mxu0 %v3098
    %3671 = vmatprep.subr.mxu0 0.0
    %3672 = vmatpush1.msra.mxu0 %v3099
    %3673 = vmatprep.subr.mxu0 0.0
    %3674 = vmatpush1.msra.mxu0 %v3100
    %3675 = vmatprep.subr.mxu0 0.0
    %3676 = vmatpush1.msra.mxu0 %v3101
    %3677 = vmatprep.subr.mxu0 0.0
    %3678 = vmatpush1.msra.mxu0 %v3102
    %3679 = vmatprep.subr.mxu0 0.0
    %3680 = vmatpush1.msra.mxu0 %v3103
    %3681 = vmatprep.subr.mxu0 0.0
    %3682 = vmatpush1.msra.mxu0 %v3104
    %3683 = vmatprep.subr.mxu0 0.0
    %3684 = vmatpush1.msra.mxu0 %v3105
    %3685 = vmatprep.subr.mxu0 0.0
    %3686 = vmatpush1.msra.mxu0 %v3106
    %3687 = vmatprep.subr.mxu0 0.0
    %3688 = vmatpush1.msra.mxu0 %v3107
    %3689 = vmatprep.subr.mxu0 0.0
    %3690 = vmatpush1.msra.mxu0 %v3108
    %3691 = vmatprep.subr.mxu0 0.0
    %3692 = vmatpush1.msra.mxu0 %v3109
    %3693 = vmatprep.subr.mxu0 0.0
    %3694 = vmatpush1.msra.mxu0 %v3110
    %3695 = vmatprep.subr.mxu0 0.0
    %3696 = vmatpush1.msra.mxu0 %v3111
    %3697 = vmatprep.subr.mxu0 0.0
    %3698 = vmatpush1.msra.mxu0 %v3112
    %3699 = vmatprep.subr.mxu0 0.0
    %3700 = vmatpush1.msra.mxu0 %v3113
    %3701 = vmatprep.subr.mxu0 0.0
    %3702 = vmatpush1.msra.mxu0 %v3114
    %3703 = vmatprep.subr.mxu0 0.0
    %3704 = vmatpush1.msra.mxu0 %v3115
    %3705 = vmatprep.subr.mxu0 0.0
    %3706 = vmatpush1.msra.mxu0 %v3116
    %3707 = vmatprep.subr.mxu0 0.0
    %3708 = vmatpush1.msra.mxu0 %v3117
    %3709 = vmatprep.subr.mxu0 0.0
    %3710 = vmatpush1.msra.mxu0 %v3118
    %3711 = vmatprep.subr.mxu0 0.0
    %3712 = vmatpush1.msra.mxu0 %v3119
    %3713 = vmatprep.subr.mxu0 0.0
    %3714 = vmatpush1.msra.mxu0 %v3120
    %3715 = vmatprep.subr.mxu0 0.0
    %3716 = vmatpush1.msra.mxu0 %v3121
    %3717 = vmatprep.subr.mxu0 0.0
    %3718 = vmatpush1.msra.mxu0 %v3122
    %3719 = vmatprep.subr.mxu0 0.0
    %3720 = vmatpush1.msra.mxu0 %v3123
    %3721 = vmatprep.subr.mxu0 0.0
    %3722 = vmatpush1.msra.mxu0 %v3124
    %3723 = vmatprep.subr.mxu0 0.0
    %3724 = vmatpush1.msra.mxu0 %v3125
    %3725 = vmatprep.subr.mxu0 0.0
    %3726 = vmatpush1.msra.mxu0 %v3126
    %3727 = vmatprep.subr.mxu0 0.0
    %3728 = vmatpush1.msra.mxu0 %v3127
    %3729 = vmatprep.subr.mxu0 0.0
    %3730 = vmatpush1.msra.mxu0 %v3128
    %3731 = vmatprep.mubr.f32.mxu0 %v3244
    %3732 = vmatmul.mubr.f32.gmra.mrb[0].mxu0 %v3243
    %v3733 = vpop.f32.mrb[0].mxu0
    %v3734 = vadd.f32 %v3664, %v3733
    %v3735 = vpop.f32.mrb[0].mxu0
    %3736 = vdwg.mxu0
    %3737 = vmatprep.subr.mxu0 0.0
    %3738 = vmatpush1.msra.mxu0 %v3129
    %3739 = vmatprep.subr.mxu0 0.0
    %3740 = vmatpush1.msra.mxu0 %v3130
    %3741 = vmatprep.subr.mxu0 0.0
    %3742 = vmatpush1.msra.mxu0 %v3131
    %3743 = vmatprep.subr.mxu0 0.0
    %3744 = vmatpush1.msra.mxu0 %v3132
    %3745 = vmatprep.subr.mxu0 0.0
    %3746 = vmatpush1.msra.mxu0 %v3133
    %3747 = vmatprep.subr.mxu0 0.0
    %3748 = vmatpush1.msra.mxu0 %v3134
    %3749 = vmatprep.subr.mxu0 0.0
    %3750 = vmatpush1.msra.mxu0 %v3135
    %3751 = vmatprep.subr.mxu0 0.0
    %3752 = vmatpush1.msra.mxu0 %v3136
    %3753 = vmatprep.subr.mxu0 0.0
    %3754 = vmatpush1.msra.mxu0 %v3137
    %3755 = vmatprep.subr.mxu0 0.0
    %3756 = vmatpush1.msra.mxu0 %v3138
    %3757 = vmatprep.subr.mxu0 0.0
    %3758 = vmatpush1.msra.mxu0 %v3139
    %3759 = vmatprep.subr.mxu0 0.0
    %3760 = vmatpush1.msra.mxu0 %v3140
    %3761 = vmatprep.subr.mxu0 0.0
    %3762 = vmatpush1.msra.mxu0 %v3141
    %3763 = vmatprep.subr.mxu0 0.0
    %3764 = vmatpush1.msra.mxu0 %v3142
    %3765 = vmatprep.subr.mxu0 0.0
    %3766 = vmatpush1.msra.mxu0 %v3143
    %3767 = vmatprep.subr.mxu0 0.0
    %3768 = vmatpush1.msra.mxu0 %v3144
    %3769 = vmatprep.subr.mxu0 0.0
    %3770 = vmatpush1.msra.mxu0 %v3145
    %3771 = vmatprep.subr.mxu0 0.0
    %3772 = vmatpush1.msra.mxu0 %v3146
    %3773 = vmatprep.subr.mxu0 0.0
    %3774 = vmatpush1.msra.mxu0 %v3147
    %3775 = vmatprep.subr.mxu0 0.0
    %3776 = vmatpush1.msra.mxu0 %v3148
    %3777 = vmatprep.subr.mxu0 0.0
    %3778 = vmatpush1.msra.mxu0 %v3149
    %3779 = vmatprep.subr.mxu0 0.0
    %3780 = vmatpush1.msra.mxu0 %v3150
    %3781 = vmatprep.subr.mxu0 0.0
    %3782 = vmatpush1.msra.mxu0 %v3151
    %3783 = vmatprep.subr.mxu0 0.0
    %3784 = vmatpush1.msra.mxu0 %v3152
    %3785 = vmatprep.subr.mxu0 0.0
    %3786 = vmatpush1.msra.mxu0 %v3153
    %3787 = vmatprep.subr.mxu0 0.0
    %3788 = vmatpush1.msra.mxu0 %v3154
    %3789 = vmatprep.subr.mxu0 0.0
    %3790 = vmatpush1.msra.mxu0 %v3155
    %3791 = vmatprep.subr.mxu0 0.0
    %3792 = vmatpush1.msra.mxu0 %v3156
    %3793 = vmatprep.subr.mxu0 0.0
    %3794 = vmatpush1.msra.mxu0 %v3157
    %3795 = vmatprep.subr.mxu0 0.0
    %3796 = vmatpush1.msra.mxu0 %v3158
    %3797 = vmatprep.subr.mxu0 0.0
    %3798 = vmatpush1.msra.mxu0 %v3159
    %3799 = vmatprep.subr.mxu0 0.0
    %3800 = vmatpush1.msra.mxu0 %v3160
    %3801 = vmatprep.mubr.f32.mxu0 %v3246
    %3802 = vmatmul.mubr.f32.gmra.mrb[0].mxu0 %v3245
    %v3803 = vpop.f32.mrb[0].mxu0
    %v3804 = vadd.f32 %v3734, %v3803
    %v3805 = vpop.f32.mrb[0].mxu0
    %3806 = vdwg.mxu0
    %v3807 = vld [vmem:[%s4] sm:$0xff]
    %v3808 = vld [vmem:[%s4 + $0x8] sm:$0xff]
    %v3809 = vld [vmem:[%s4 + $0x10] sm:$0xff]
    %v3810 = vld [vmem:[%s4 + $0x18] sm:$0xff]
    %v3811 = vld [vmem:[%s5] sm:$0x1]
    %v3813 = vlaneseq
    %v3814 = vshrl.u32 %v3813, 7
    %v3815 = vsub.s32 0, %v3814
    %v3816 = vrot.slane %v3811, %v3815
    %v3819 = vsel %vm937, %v3804, 0
    %3821 = vmatprep.subr.mxu0 0.0
    %3822 = vmatpush1.msra.mxu0 %v3807
    %3823 = vmatprep.subr.mxu0 0.0
    %3824 = vmatpush1.msra.mxu0 %v3808
    %3825 = vmatprep.subr.mxu0 0.0
    %3826 = vmatpush1.msra.mxu0 %v3809
    %3827 = vmatprep.subr.mxu0 0.0
    %3828 = vmatpush1.msra.mxu0 %v3810
    %3829 = vmatprep.subr.mxu0 0.0
    %3830 = vmatpush1.msra.mxu0 0.0
    %3831 = vmatprep.subr.mxu0 0.0
    %3832 = vmatpush1.msra.mxu0 0.0
    %3833 = vmatprep.subr.mxu0 0.0
    %3834 = vmatpush1.msra.mxu0 0.0
    %3835 = vmatprep.subr.mxu0 0.0
    %3836 = vmatpush1.msra.mxu0 0.0
    %3837 = vmatprep.subr.mxu0 0.0
    %3838 = vmatpush1.msra.mxu0 0.0
    %3839 = vmatprep.subr.mxu0 0.0
    %3840 = vmatpush1.msra.mxu0 0.0
    %3841 = vmatprep.subr.mxu0 0.0
    %3842 = vmatpush1.msra.mxu0 0.0
    %3843 = vmatprep.subr.mxu0 0.0
    %3844 = vmatpush1.msra.mxu0 0.0
    %3845 = vmatprep.subr.mxu0 0.0
    %3846 = vmatpush1.msra.mxu0 0.0
    %3847 = vmatprep.subr.mxu0 0.0
    %3848 = vmatpush1.msra.mxu0 0.0
    %3849 = vmatprep.subr.mxu0 0.0
    %3850 = vmatpush1.msra.mxu0 0.0
    %3851 = vmatprep.subr.mxu0 0.0
    %3852 = vmatpush1.msra.mxu0 0.0
    %3853 = vmatprep.subr.mxu0 0.0
    %3854 = vmatpush1.msra.mxu0 0.0
    %3855 = vmatprep.subr.mxu0 0.0
    %3856 = vmatpush1.msra.mxu0 0.0
    %3857 = vmatprep.subr.mxu0 0.0
    %3858 = vmatpush1.msra.mxu0 0.0
    %3859 = vmatprep.subr.mxu0 0.0
    %3860 = vmatpush1.msra.mxu0 0.0
    %3861 = vmatprep.subr.mxu0 0.0
    %3862 = vmatpush1.msra.mxu0 0.0
    %3863 = vmatprep.subr.mxu0 0.0
    %3864 = vmatpush1.msra.mxu0 0.0
    %3865 = vmatprep.subr.mxu0 0.0
    %3866 = vmatpush1.msra.mxu0 0.0
    %3867 = vmatprep.subr.mxu0 0.0
    %3868 = vmatpush1.msra.mxu0 0.0
    %3869 = vmatprep.subr.mxu0 0.0
    %3870 = vmatpush1.msra.mxu0 0.0
    %3871 = vmatprep.subr.mxu0 0.0
    %3872 = vmatpush1.msra.mxu0 0.0
    %3873 = vmatprep.subr.mxu0 0.0
    %3874 = vmatpush1.msra.mxu0 0.0
    %3875 = vmatprep.subr.mxu0 0.0
    %3876 = vmatpush1.msra.mxu0 0.0
    %3877 = vmatprep.subr.mxu0 0.0
    %3878 = vmatpush1.msra.mxu0 0.0
    %3879 = vmatprep.subr.mxu0 0.0
    %3880 = vmatpush1.msra.mxu0 0.0
    %3881 = vmatprep.subr.mxu0 0.0
    %3882 = vmatpush1.msra.mxu0 0.0
    %3883 = vmatprep.subr.mxu0 0.0
    %3884 = vmatpush1.msra.mxu0 0.0
    %3885 = vmatprep.mubr.f32.mxu0 0.0
    %3886 = vmatmul.mubr.f32.gmra.mrb[0].mxu0 %v3819
    %v3887 = vpop.f32.mrb[0].mxu0
    %v3888 = vadd.f32 %v3816, %v3887
    %v3889 = vpop.f32.mrb[0].mxu0
    %3890 = vdwg.mxu0
    %3891 = vst [vmem:[#allocation2] sm:$0x3] %v3888
    // Predicated region
    $region26: #{model_forward_pallas.1} parent=1 // pred_check
      _
    $region27: #{model_forward_pallas.1} parent=1 // pred_check_branch
      %3893 = sbr.rel (0) target = $region29
    $region28: #{model_forward_pallas.1} parent=1 // pred_region
      %s3895 = ssub.s32 32, 32
      %3896 = vsyncadd [#allocation3], %s3895
      %s3898 = sshll.u32 [#allocation2], 4
      %s3899 = int_to_ptr.vmem [resolvable:$true] %s3898
      %3901 = dma.vmem_to_hbm [thread:$0]  %s3899, 32, %s6, [#allocation3]
    $region29: #{model_forward_pallas.1} parent=1 // pred_fallthru
      _
    // Predicated region
    $region30: #{model_forward_pallas.1} parent=1 // pred_check
      _
    $region31: #{model_forward_pallas.1} parent=1 // pred_check_branch
      %3903 = sbr.rel (0) target = $region33
    $region32: #{model_forward_pallas.1} parent=1 // pred_region
      %3904 = dma.done [#allocation3], 32
    $region33: #{model_forward_pallas.1} parent=1 // pred_fallthru
      _
    %3905 = vsyncpa [#allocation3], 1

</llo_original>
